<compile_context>
chip_gen: v5e
topology: v5e:2x2
jax: 0.10.0
libtpu: 0.0.40
codegen_flags: <defaults>
</compile_context>

<pallas_src>
import functools

import jax
import jax.numpy as jnp
from jax.experimental import pallas as pl
from jax.experimental.pallas import tpu as pltpu


_VMEM_SPEC = pl.BlockSpec(memory_space=pltpu.MemorySpace.VMEM)
_HIDDEN_PAD = 128  # padded hidden size (real hidden = 100)


# ----------------------------- Pallas kernels -------------------------------

def _conv_bn_relu_kernel(w_ref, p_ref, g_ref, beta_ref, o_ref):
    """Fused conv (im2col GEMM, transposed layout) + BatchNorm(batch stats) + ReLU.

    w_ref:    [Cout, K]  bf16   (K = Cin*kh*kw, PyTorch flatten order)
    p_ref:    [K, R]     bf16   (R = B*Ho*Wo on the lane axis)
    g_ref, beta_ref: [Cout, 1]  f32
    o_ref:    [Cout, R]  bf16
    """
    y = jnp.dot(w_ref[...], p_ref[...], preferred_element_type=jnp.float32)
    # Train-mode BatchNorm2d: biased mean/var over (N, H, W) == the lane axis here.
    mean = jnp.mean(y, axis=1, keepdims=True)
    var = jnp.mean(jnp.square(y - mean), axis=1, keepdims=True)
    yn = (y - mean) * jax.lax.rsqrt(var + 1e-5)
    yn = yn * g_ref[...] + beta_ref[...]
    o_ref[...] = jnp.maximum(yn, 0.0).astype(o_ref.dtype)


def _lstm_heads_kernel(xh_ref, c_ref, wl_ref, bl_ref, wh_ref, bh_ref,
                       out_ref, hx_ref, cx_ref, *, num_actions):
    """Fused LSTMCell (single matmul) + softmax action head + value head.

    xh_ref: [B, 800+128] bf16  (features ++ zero-padded h)
    c_ref:  [B, 128]     f32   (zero-padded c)
    wl_ref: [928, 512]   bf16  (packed [w_ih; w_hh], gate order i,f,g,o, 128/gate)
    bl_ref: [1, 512]     f32   (b_ih + b_hh, zero in padded columns)
    wh_ref: [128, 128]   bf16  (cols 0..A-1 = action_w/T, col A = value_w, rest 0)
    bh_ref: [1, 128]     f32
    out_ref: [B, 128] f32  (cols 0..A-1 = softmax probs, col A = value)
    hx_ref, cx_ref: [B, 128] f32
    """
    gates = (jnp.dot(xh_ref[...], wl_ref[...], preferred_element_type=jnp.float32)
             + bl_ref[...])
    # 128-aligned gate slices -> free views, no cross-lane relayout.
    i = jax.nn.sigmoid(gates[:, 0:128])
    f = jax.nn.sigmoid(gates[:, 128:256])
    g = jnp.tanh(gates[:, 256:384])
    o = jax.nn.sigmoid(gates[:, 384:512])
    c_new = f * c_ref[...] + i * g          # padded cols stay exactly 0
    h_new = o * jnp.tanh(c_new)             # padded cols stay exactly 0

    heads = (jnp.dot(h_new.astype(wh_ref.dtype), wh_ref[...],
                     preferred_element_type=jnp.float32) + bh_ref[...])
    col = jax.lax.broadcasted_iota(jnp.int32, heads.shape, 1)
    amask = col < num_actions
    logits = jnp.where(amask, heads, -1e30)            # 1/T already folded in
    m = jnp.max(logits, axis=-1, keepdims=True)
    e = jnp.exp(logits - m)                             # masked cols -> 0
    inv = pl.reciprocal(jnp.sum(e, axis=-1, keepdims=True), approx=True)
    probs = e * inv
    out_ref[...] = jnp.where(amask, probs, heads)       # col A carries the value
    hx_ref[...] = h_new
    cx_ref[...] = c_new


# ------------------------------ JAX glue -------------------------------------

def _im2col_T(x_cbhw, kh, kw, stride, pad):
    """Patches in transposed layout [Cin*kh*kw, B*Ho*Wo] from [C, B, H, W]."""
    x = jnp.pad(x_cbhw, ((0, 0), (0, 0), (pad, pad), (pad, pad)))
    c, b, h, w = x.shape
    ho = (h - kh) // stride + 1
    wo = (w - kw) // stride + 1
    taps = []
    for i in range(kh):
        for j in range(kw):
            taps.append(x[:, :,
                          i:i + stride * (ho - 1) + 1:stride,
                          j:j + stride * (wo - 1) + 1:stride])
    p = jnp.stack(taps, axis=1)                 # [C, kh*kw, B, Ho, Wo]
    return p.reshape(c * kh * kw, b * ho * wo), ho, wo


def lstm_policy_forward(packed, x_nchw, hx, cx, *, num_actions):
    """Matches LSTMPolicy.forward: returns (action_probs, value, (hx, cx))."""
    bsz = x_nchw.shape[0]
    hidden = hx.shape[-1]
    hp = _HIDDEN_PAD

    # NCHW -> [C, B, H, W] (single small transpose), bf16 activations.
    x = jnp.transpose(x_nchw, (1, 0, 2, 3)).astype(jnp.bfloat16)
    for idx in range(1, 5):
        patches, ho, wo = _im2col_T(x, 4, 4, stride=2, pad=1)
        w = packed[f"conv{idx}_w"]
        cout = w.shape[0]
        y = pl.pallas_call(
            _conv_bn_relu_kernel,
            out_shape=jax.ShapeDtypeStruct((cout, patches.shape[1]), jnp.bfloat16),
            in_specs=[_VMEM_SPEC] * 4,
            out_specs=_VMEM_SPEC,
        )(w, patches, packed[f"bn{idx}_gamma"], packed[f"bn{idx}_beta"])
        x = y.reshape(cout, bsz, ho, wo)

    # x: [32, B, 5, 5] -> flatten in PyTorch NCHW order -> [B, 800] (bf16)
    feat = jnp.transpose(x, (1, 0, 2, 3)).reshape(bsz, -1)

    h_pad = jnp.pad(hx, ((0, 0), (0, hp - hidden))).astype(jnp.bfloat16)
    c_pad = jnp.pad(cx, ((0, 0), (0, hp - hidden))).astype(jnp.float32)
    xh = jnp.concatenate([feat, h_pad], axis=1)          # [B, 800+128] bf16

    kern = functools.partial(_lstm_heads_kernel, num_actions=num_actions)
    out, hx_new, cx_new = pl.pallas_call(
        kern,
        out_shape=(jax.ShapeDtypeStruct((bsz, hp), jnp.float32),
                   jax.ShapeDtypeStruct((bsz, hp), jnp.float32),
                   jax.ShapeDtypeStruct((bsz, hp), jnp.float32)),
        in_specs=[_VMEM_SPEC] * 6,
        out_specs=(_VMEM_SPEC,) * 3,
    )(xh, c_pad, packed["lstm_w"], packed["lstm_b"],
      packed["heads_w"], packed["heads_b"])

    action = out[:, :num_actions]
    value = out[:, num_actions:num_actions + 1]
    return action, value, (hx_new[:, :hidden], cx_new[:, :hidden])


# ----------------------------- offline packing --------------------------------

def pack_params(params, temperature=1.0):
    """One-time weight packing: GEMM layouts, bf16 casts, padding, bias folding."""
    hp = _HIDDEN_PAD
    packed = {}

    for idx in range(1, 5):
        w = params[f"conv{idx}_w"]                         # [Cout, Cin, 4, 4]
        cout = w.shape[0]
        packed[f"conv{idx}_w"] = w.reshape(cout, -1).astype(jnp.bfloat16)
        # conv bias dropped: exact no-op under train-mode BatchNorm.
        packed[f"bn{idx}_gamma"] = params[f"bn{idx}_gamma"].reshape(cout, 1).astype(jnp.float32)
        packed[f"bn{idx}_beta"] = params[f"bn{idx}_beta"].reshape(cout, 1).astype(jnp.float32)

    wih, whh = params["lstm_w_ih"], params["lstm_w_hh"]    # [4H, 800], [4H, H]
    hidden = whh.shape[1]
    assert hidden <= hp

    def pad_gate_rows(w):                                  # [4H, X] -> [4*hp, X]
        w4 = w.reshape(4, hidden, w.shape[1])
        return jnp.pad(w4, ((0, 0), (0, hp - hidden), (0, 0))).reshape(4 * hp, w.shape[1])

    wih_p = pad_gate_rows(wih)                             # [512, 800]
    whh_p = jnp.pad(pad_gate_rows(whh), ((0, 0), (0, hp - hidden)))  # [512, 128]
    packed["lstm_w"] = jnp.concatenate([wih_p, whh_p], axis=1).T.astype(jnp.bfloat16)
    b = (params["lstm_b_ih"] + params["lstm_b_hh"]).reshape(4, hidden)
    packed["lstm_b"] = jnp.pad(b, ((0, 0), (0, hp - hidden))).reshape(1, 4 * hp).astype(jnp.float32)

    aw, ab = params["action_w"], params["action_b"]        # [A, H], [A]
    vw, vb = params["value_w"], params["value_b"]          # [1, H], [1]
    num_actions = aw.shape[0]
    assert num_actions + 1 <= hp
    w_heads = jnp.zeros((hp, hp), jnp.float32)
    w_heads = w_heads.at[:hidden, :num_actions].set(aw.T / temperature)
    w_heads = w_heads.at[:hidden, num_actions].set(vw[0])
    b_heads = jnp.zeros((1, hp), jnp.float32)
    b_heads = b_heads.at[0, :num_actions].set(ab / temperature)
    b_heads = b_heads.at[0, num_actions].set(vb[0])
    packed["heads_w"] = w_heads.astype(jnp.bfloat16)
    packed["heads_b"] = b_heads
    return packed


# --------------------------- deterministic init ------------------------------

def init_params(key, in_channels, num_actions, hidden=100):
    ks = jax.random.split(key, 16)
    u = lambda k, shape, s: jax.random.uniform(k, shape, jnp.float32, -s, s)

    conv_shapes = [(16, in_channels), (32, 16), (32, 32), (32, 32)]
    params = {}
    ki = 0
    for idx, (cout, cin) in enumerate(conv_shapes, start=1):
        s = 1.0 / (cin * 16) ** 0.5
        params[f"conv{idx}_w"] = u(ks[ki], (cout, cin, 4, 4), s); ki += 1
        params[f"conv{idx}_b"] = u(ks[ki], (cout,), s); ki += 1  # unused (BN cancels it)
        params[f"bn{idx}_gamma"] = jnp.ones((cout,), jnp.float32)
        params[f"bn{idx}_beta"] = jnp.zeros((cout,), jnp.float32)

    feat_dim = 5 * 5 * 32
    s = 1.0 / hidden ** 0.5
    params["lstm_w_ih"] = u(ks[ki], (4 * hidden, feat_dim), s); ki += 1
    params["lstm_w_hh"] = u(ks[ki], (4 * hidden, hidden), s); ki += 1
    params["lstm_b_ih"] = u(ks[ki], (4 * hidden,), s); ki += 1
    params["lstm_b_hh"] = u(ks[ki], (4 * hidden,), s); ki += 1
    params["action_w"] = u(ks[ki], (num_actions, hidden), s); ki += 1
    params["action_b"] = u(ks[ki], (num_actions,), s); ki += 1
    params["value_w"] = u(ks[ki], (1, hidden), s); ki += 1
    params["value_b"] = u(ks[ki], (1,), s); ki += 1
    return params


# --------------------------------- main ---------------------------------------

if __name__ == "__main__":
    # Spatial size must be 80x80: four stride-2, k=4, p=1 convs -> 5x5, matching
    # the hard-coded 5*5*32 LSTM input of the module.
    batch, in_channels, num_actions, hidden = 2, 4, 6, 100

    key = jax.random.PRNGKey(0)
    kp, kx, kh, kc = jax.random.split(key, 4)
    params = init_params(kp, in_channels, num_actions, hidden)
    packed = pack_params(params, temperature=1.0)   # one-time offline packing

    x = jax.random.normal(kx, (batch, in_channels, 80, 80), jnp.float32)
    hx = 0.1 * jax.random.normal(kh, (batch, hidden), jnp.float32)
    cx = 0.1 * jax.random.normal(kc, (batch, hidden), jnp.float32)

    fwd = jax.jit(lstm_policy_forward, static_argnames=("num_actions",))
    action, value, (hx_new, cx_new) = fwd(packed, x, hx, cx, num_actions=num_actions)
    jax.block_until_ready((action, value, hx_new, cx_new))

    assert action.shape == (batch, num_actions)
    assert value.shape == (batch, 1)
    assert hx_new.shape == (batch, hidden) and cx_new.shape == (batch, hidden)
    # softmax rows sum to 1 (approx reciprocal -> relative err ~2^-12)
    assert jnp.allclose(jnp.sum(action, axis=-1), 1.0, atol=5e-3)
    assert bool(jnp.all(jnp.isfinite(value)))

    print("KERNEL_OK")
</pallas_src>

<mosaic_0001>
module attributes {stable_mosaic.version = 11 : i64} {
  func.func @_conv_bn_relu_kernel(%arg0: memref<16x64xbf16, #tpu.memory_space<vmem>>, %arg1: memref<64x3200xbf16, #tpu.memory_space<vmem>>, %arg2: memref<16x1xf32, #tpu.memory_space<vmem>>, %arg3: memref<16x1xf32, #tpu.memory_space<vmem>>, %arg4: memref<16x3200xbf16, #tpu.memory_space<vmem>>) attributes {dimension_semantics = [], scalar_prefetch = 0 : i64, scratch_operands = 0 : i64, tpu.core_type = #tpu.core_type<tc>} {
    %c0 = arith.constant 0 : index
    %c0_0 = arith.constant 0 : index
    %0 = vector.load %arg0[%c0, %c0_0] : memref<16x64xbf16, #tpu.memory_space<vmem>>, vector<16x64xbf16>
    %c0_1 = arith.constant 0 : index
    %c0_2 = arith.constant 0 : index
    %1 = vector.load %arg1[%c0_1, %c0_2] : memref<64x3200xbf16, #tpu.memory_space<vmem>>, vector<64x3200xbf16>
    %cst = arith.constant dense<0.000000e+00> : vector<16x3200xf32>
    %2 = tpu.matmul %0, %1, %cst {dimension_numbers = #tpu.dot_dimension_numbers<[1], [0], [0], [1], [0, 0, 1, 1], [], []>} : vector<16x64xbf16>, vector<64x3200xbf16>, vector<16x3200xf32> -> vector<16x3200xf32>
    %cst_3 = arith.constant dense<0.000000e+00> : vector<16xf32>
    %3 = vector.multi_reduction <add>, %2, %cst_3 [1] : vector<16x3200xf32> to vector<16xf32>
    %4 = vector.shape_cast %3 : vector<16xf32> to vector<16x1xf32>
    %cst_4 = arith.constant 3.200000e+03 : f32
    %5 = vector.broadcast %cst_4 : f32 to vector<16x1xf32>
    %6 = arith.divf %4, %5 : vector<16x1xf32>
    %7 = vector.broadcast %6 : vector<16x1xf32> to vector<16x3200xf32>
    %8 = arith.subf %2, %7 : vector<16x3200xf32>
    %9 = arith.mulf %8, %8 : vector<16x3200xf32>
    %cst_5 = arith.constant dense<0.000000e+00> : vector<16xf32>
    %10 = vector.multi_reduction <add>, %9, %cst_5 [1] : vector<16x3200xf32> to vector<16xf32>
    %11 = vector.shape_cast %10 : vector<16xf32> to vector<16x1xf32>
    %cst_6 = arith.constant 3.200000e+03 : f32
    %12 = vector.broadcast %cst_6 : f32 to vector<16x1xf32>
    %13 = arith.divf %11, %12 : vector<16x1xf32>
    %14 = vector.broadcast %6 : vector<16x1xf32> to vector<16x3200xf32>
    %15 = arith.subf %2, %14 : vector<16x3200xf32>
    %cst_7 = arith.constant 9.99999974E-6 : f32
    %16 = vector.broadcast %cst_7 : f32 to vector<16x1xf32>
    %17 = arith.addf %13, %16 : vector<16x1xf32>
    %18 = math.rsqrt %17 : vector<16x1xf32>
    %19 = vector.broadcast %18 : vector<16x1xf32> to vector<16x3200xf32>
    %20 = arith.mulf %15, %19 : vector<16x3200xf32>
    %c0_8 = arith.constant 0 : index
    %c0_9 = arith.constant 0 : index
    %21 = vector.load %arg2[%c0_8, %c0_9] : memref<16x1xf32, #tpu.memory_space<vmem>>, vector<16x1xf32>
    %22 = vector.broadcast %21 : vector<16x1xf32> to vector<16x3200xf32>
    %23 = arith.mulf %20, %22 : vector<16x3200xf32>
    %c0_10 = arith.constant 0 : index
    %c0_11 = arith.constant 0 : index
    %24 = vector.load %arg3[%c0_10, %c0_11] : memref<16x1xf32, #tpu.memory_space<vmem>>, vector<16x1xf32>
    %25 = vector.broadcast %24 : vector<16x1xf32> to vector<16x3200xf32>
    %26 = arith.addf %23, %25 : vector<16x3200xf32>
    %cst_12 = arith.constant 0.000000e+00 : f32
    %27 = vector.broadcast %cst_12 : f32 to vector<16x3200xf32>
    %28 = arith.maximumf %26, %27 : vector<16x3200xf32>
    %29 = arith.truncf %28 : vector<16x3200xf32> to vector<16x3200xbf16>
    %c0_13 = arith.constant 0 : index
    %c0_14 = arith.constant 0 : index
    %30 = vector.load %arg4[%c0_13, %c0_14] : memref<16x3200xbf16, #tpu.memory_space<vmem>>, vector<16x3200xbf16>
    tpu.vector_store %arg4[%c0_13, %c0_14], %29 {strides = array<i32>} : memref<16x3200xbf16, #tpu.memory_space<vmem>>, vector<16x3200xbf16>,
    return
  }
}

module attributes {stable_mosaic.version = 11 : i64} {
  func.func @_conv_bn_relu_kernel(%arg0: memref<32x256xbf16, #tpu.memory_space<vmem>>, %arg1: memref<256x800xbf16, #tpu.memory_space<vmem>>, %arg2: memref<32x1xf32, #tpu.memory_space<vmem>>, %arg3: memref<32x1xf32, #tpu.memory_space<vmem>>, %arg4: memref<32x800xbf16, #tpu.memory_space<vmem>>) attributes {dimension_semantics = [], scalar_prefetch = 0 : i64, scratch_operands = 0 : i64, tpu.core_type = #tpu.core_type<tc>} {
    %c0 = arith.constant 0 : index
    %c0_0 = arith.constant 0 : index
    %0 = vector.load %arg0[%c0, %c0_0] : memref<32x256xbf16, #tpu.memory_space<vmem>>, vector<32x256xbf16>
    %c0_1 = arith.constant 0 : index
    %c0_2 = arith.constant 0 : index
    %1 = vector.load %arg1[%c0_1, %c0_2] : memref<256x800xbf16, #tpu.memory_space<vmem>>, vector<256x800xbf16>
    %cst = arith.constant dense<0.000000e+00> : vector<32x800xf32>
    %2 = tpu.matmul %0, %1, %cst {dimension_numbers = #tpu.dot_dimension_numbers<[1], [0], [0], [1], [0, 0, 1, 1], [], []>} : vector<32x256xbf16>, vector<256x800xbf16>, vector<32x800xf32> -> vector<32x800xf32>
    %cst_3 = arith.constant dense<0.000000e+00> : vector<32xf32>
    %3 = vector.multi_reduction <add>, %2, %cst_3 [1] : vector<32x800xf32> to vector<32xf32>
    %4 = vector.shape_cast %3 : vector<32xf32> to vector<32x1xf32>
    %cst_4 = arith.constant 8.000000e+02 : f32
    %5 = vector.broadcast %cst_4 : f32 to vector<32x1xf32>
    %6 = arith.divf %4, %5 : vector<32x1xf32>
    %7 = vector.broadcast %6 : vector<32x1xf32> to vector<32x800xf32>
    %8 = arith.subf %2, %7 : vector<32x800xf32>
    %9 = arith.mulf %8, %8 : vector<32x800xf32>
    %cst_5 = arith.constant dense<0.000000e+00> : vector<32xf32>
    %10 = vector.multi_reduction <add>, %9, %cst_5 [1] : vector<32x800xf32> to vector<32xf32>
    %11 = vector.shape_cast %10 : vector<32xf32> to vector<32x1xf32>
    %cst_6 = arith.constant 8.000000e+02 : f32
    %12 = vector.broadcast %cst_6 : f32 to vector<32x1xf32>
    %13 = arith.divf %11, %12 : vector<32x1xf32>
    %14 = vector.broadcast %6 : vector<32x1xf32> to vector<32x800xf32>
    %15 = arith.subf %2, %14 : vector<32x800xf32>
    %cst_7 = arith.constant 9.99999974E-6 : f32
    %16 = vector.broadcast %cst_7 : f32 to vector<32x1xf32>
    %17 = arith.addf %13, %16 : vector<32x1xf32>
    %18 = math.rsqrt %17 : vector<32x1xf32>
    %19 = vector.broadcast %18 : vector<32x1xf32> to vector<32x800xf32>
    %20 = arith.mulf %15, %19 : vector<32x800xf32>
    %c0_8 = arith.constant 0 : index
    %c0_9 = arith.constant 0 : index
    %21 = vector.load %arg2[%c0_8, %c0_9] : memref<32x1xf32, #tpu.memory_space<vmem>>, vector<32x1xf32>
    %22 = vector.broadcast %21 : vector<32x1xf32> to vector<32x800xf32>
    %23 = arith.mulf %20, %22 : vector<32x800xf32>
    %c0_10 = arith.constant 0 : index
    %c0_11 = arith.constant 0 : index
    %24 = vector.load %arg3[%c0_10, %c0_11] : memref<32x1xf32, #tpu.memory_space<vmem>>, vector<32x1xf32>
    %25 = vector.broadcast %24 : vector<32x1xf32> to vector<32x800xf32>
    %26 = arith.addf %23, %25 : vector<32x800xf32>
    %cst_12 = arith.constant 0.000000e+00 : f32
    %27 = vector.broadcast %cst_12 : f32 to vector<32x800xf32>
    %28 = arith.maximumf %26, %27 : vector<32x800xf32>
    %29 = arith.truncf %28 : vector<32x800xf32> to vector<32x800xbf16>
    %c0_13 = arith.constant 0 : index
    %c0_14 = arith.constant 0 : index
    %30 = vector.load %arg4[%c0_13, %c0_14] : memref<32x800xbf16, #tpu.memory_space<vmem>>, vector<32x800xbf16>
    tpu.vector_store %arg4[%c0_13, %c0_14], %29 {strides = array<i32>} : memref<32x800xbf16, #tpu.memory_space<vmem>>, vector<32x800xbf16>,
    return
  }
}

module attributes {stable_mosaic.version = 11 : i64} {
  func.func @_conv_bn_relu_kernel(%arg0: memref<32x512xbf16, #tpu.memory_space<vmem>>, %arg1: memref<512x200xbf16, #tpu.memory_space<vmem>>, %arg2: memref<32x1xf32, #tpu.memory_space<vmem>>, %arg3: memref<32x1xf32, #tpu.memory_space<vmem>>, %arg4: memref<32x200xbf16, #tpu.memory_space<vmem>>) attributes {dimension_semantics = [], scalar_prefetch = 0 : i64, scratch_operands = 0 : i64, tpu.core_type = #tpu.core_type<tc>} {
    %c0 = arith.constant 0 : index
    %c0_0 = arith.constant 0 : index
    %0 = vector.load %arg0[%c0, %c0_0] : memref<32x512xbf16, #tpu.memory_space<vmem>>, vector<32x512xbf16>
    %c0_1 = arith.constant 0 : index
    %c0_2 = arith.constant 0 : index
    %1 = vector.load %arg1[%c0_1, %c0_2] : memref<512x200xbf16, #tpu.memory_space<vmem>>, vector<512x200xbf16>
    %cst = arith.constant dense<0.000000e+00> : vector<32x200xf32>
    %2 = tpu.matmul %0, %1, %cst {dimension_numbers = #tpu.dot_dimension_numbers<[1], [0], [0], [1], [0, 0, 1, 1], [], []>} : vector<32x512xbf16>, vector<512x200xbf16>, vector<32x200xf32> -> vector<32x200xf32>
    %cst_3 = arith.constant dense<0.000000e+00> : vector<32xf32>
    %3 = vector.multi_reduction <add>, %2, %cst_3 [1] : vector<32x200xf32> to vector<32xf32>
    %4 = vector.shape_cast %3 : vector<32xf32> to vector<32x1xf32>
    %cst_4 = arith.constant 2.000000e+02 : f32
    %5 = vector.broadcast %cst_4 : f32 to vector<32x1xf32>
    %6 = arith.divf %4, %5 : vector<32x1xf32>
    %7 = vector.broadcast %6 : vector<32x1xf32> to vector<32x200xf32>
    %8 = arith.subf %2, %7 : vector<32x200xf32>
    %9 = arith.mulf %8, %8 : vector<32x200xf32>
    %cst_5 = arith.constant dense<0.000000e+00> : vector<32xf32>
    %10 = vector.multi_reduction <add>, %9, %cst_5 [1] : vector<32x200xf32> to vector<32xf32>
    %11 = vector.shape_cast %10 : vector<32xf32> to vector<32x1xf32>
    %cst_6 = arith.constant 2.000000e+02 : f32
    %12 = vector.broadcast %cst_6 : f32 to vector<32x1xf32>
    %13 = arith.divf %11, %12 : vector<32x1xf32>
    %14 = vector.broadcast %6 : vector<32x1xf32> to vector<32x200xf32>
    %15 = arith.subf %2, %14 : vector<32x200xf32>
    %cst_7 = arith.constant 9.99999974E-6 : f32
    %16 = vector.broadcast %cst_7 : f32 to vector<32x1xf32>
    %17 = arith.addf %13, %16 : vector<32x1xf32>
    %18 = math.rsqrt %17 : vector<32x1xf32>
    %19 = vector.broadcast %18 : vector<32x1xf32> to vector<32x200xf32>
    %20 = arith.mulf %15, %19 : vector<32x200xf32>
    %c0_8 = arith.constant 0 : index
    %c0_9 = arith.constant 0 : index
    %21 = vector.load %arg2[%c0_8, %c0_9] : memref<32x1xf32, #tpu.memory_space<vmem>>, vector<32x1xf32>
    %22 = vector.broadcast %21 : vector<32x1xf32> to vector<32x200xf32>
    %23 = arith.mulf %20, %22 : vector<32x200xf32>
    %c0_10 = arith.constant 0 : index
    %c0_11 = arith.constant 0 : index
    %24 = vector.load %arg3[%c0_10, %c0_11] : memref<32x1xf32, #tpu.memory_space<vmem>>, vector<32x1xf32>
    %25 = vector.broadcast %24 : vector<32x1xf32> to vector<32x200xf32>
    %26 = arith.addf %23, %25 : vector<32x200xf32>
    %cst_12 = arith.constant 0.000000e+00 : f32
    %27 = vector.broadcast %cst_12 : f32 to vector<32x200xf32>
    %28 = arith.maximumf %26, %27 : vector<32x200xf32>
    %29 = arith.truncf %28 : vector<32x200xf32> to vector<32x200xbf16>
    %c0_13 = arith.constant 0 : index
    %c0_14 = arith.constant 0 : index
    %30 = vector.load %arg4[%c0_13, %c0_14] : memref<32x200xbf16, #tpu.memory_space<vmem>>, vector<32x200xbf16>
    tpu.vector_store %arg4[%c0_13, %c0_14], %29 {strides = array<i32>} : memref<32x200xbf16, #tpu.memory_space<vmem>>, vector<32x200xbf16>,
    return
  }
}

module attributes {stable_mosaic.version = 11 : i64} {
  func.func @_conv_bn_relu_kernel(%arg0: memref<32x512xbf16, #tpu.memory_space<vmem>>, %arg1: memref<512x50xbf16, #tpu.memory_space<vmem>>, %arg2: memref<32x1xf32, #tpu.memory_space<vmem>>, %arg3: memref<32x1xf32, #tpu.memory_space<vmem>>, %arg4: memref<32x50xbf16, #tpu.memory_space<vmem>>) attributes {dimension_semantics = [], scalar_prefetch = 0 : i64, scratch_operands = 0 : i64, tpu.core_type = #tpu.core_type<tc>} {
    %c0 = arith.constant 0 : index
    %c0_0 = arith.constant 0 : index
    %0 = vector.load %arg0[%c0, %c0_0] : memref<32x512xbf16, #tpu.memory_space<vmem>>, vector<32x512xbf16>
    %c0_1 = arith.constant 0 : index
    %c0_2 = arith.constant 0 : index
    %1 = vector.load %arg1[%c0_1, %c0_2] : memref<512x50xbf16, #tpu.memory_space<vmem>>, vector<512x50xbf16>
    %cst = arith.constant dense<0.000000e+00> : vector<32x50xf32>
    %2 = tpu.matmul %0, %1, %cst {dimension_numbers = #tpu.dot_dimension_numbers<[1], [0], [0], [1], [0, 0, 1, 1], [], []>} : vector<32x512xbf16>, vector<512x50xbf16>, vector<32x50xf32> -> vector<32x50xf32>
    %cst_3 = arith.constant dense<0.000000e+00> : vector<32xf32>
    %3 = vector.multi_reduction <add>, %2, %cst_3 [1] : vector<32x50xf32> to vector<32xf32>
    %4 = vector.shape_cast %3 : vector<32xf32> to vector<32x1xf32>
    %cst_4 = arith.constant 5.000000e+01 : f32
    %5 = vector.broadcast %cst_4 : f32 to vector<32x1xf32>
    %6 = arith.divf %4, %5 : vector<32x1xf32>
    %7 = vector.broadcast %6 : vector<32x1xf32> to vector<32x50xf32>
    %8 = arith.subf %2, %7 : vector<32x50xf32>
    %9 = arith.mulf %8, %8 : vector<32x50xf32>
    %cst_5 = arith.constant dense<0.000000e+00> : vector<32xf32>
    %10 = vector.multi_reduction <add>, %9, %cst_5 [1] : vector<32x50xf32> to vector<32xf32>
    %11 = vector.shape_cast %10 : vector<32xf32> to vector<32x1xf32>
    %cst_6 = arith.constant 5.000000e+01 : f32
    %12 = vector.broadcast %cst_6 : f32 to vector<32x1xf32>
    %13 = arith.divf %11, %12 : vector<32x1xf32>
    %14 = vector.broadcast %6 : vector<32x1xf32> to vector<32x50xf32>
    %15 = arith.subf %2, %14 : vector<32x50xf32>
    %cst_7 = arith.constant 9.99999974E-6 : f32
    %16 = vector.broadcast %cst_7 : f32 to vector<32x1xf32>
    %17 = arith.addf %13, %16 : vector<32x1xf32>
    %18 = math.rsqrt %17 : vector<32x1xf32>
    %19 = vector.broadcast %18 : vector<32x1xf32> to vector<32x50xf32>
    %20 = arith.mulf %15, %19 : vector<32x50xf32>
    %c0_8 = arith.constant 0 : index
    %c0_9 = arith.constant 0 : index
    %21 = vector.load %arg2[%c0_8, %c0_9] : memref<32x1xf32, #tpu.memory_space<vmem>>, vector<32x1xf32>
    %22 = vector.broadcast %21 : vector<32x1xf32> to vector<32x50xf32>
    %23 = arith.mulf %20, %22 : vector<32x50xf32>
    %c0_10 = arith.constant 0 : index
    %c0_11 = arith.constant 0 : index
    %24 = vector.load %arg3[%c0_10, %c0_11] : memref<32x1xf32, #tpu.memory_space<vmem>>, vector<32x1xf32>
    %25 = vector.broadcast %24 : vector<32x1xf32> to vector<32x50xf32>
    %26 = arith.addf %23, %25 : vector<32x50xf32>
    %cst_12 = arith.constant 0.000000e+00 : f32
    %27 = vector.broadcast %cst_12 : f32 to vector<32x50xf32>
    %28 = arith.maximumf %26, %27 : vector<32x50xf32>
    %29 = arith.truncf %28 : vector<32x50xf32> to vector<32x50xbf16>
    %c0_13 = arith.constant 0 : index
    %c0_14 = arith.constant 0 : index
    %30 = vector.load %arg4[%c0_13, %c0_14] : memref<32x50xbf16, #tpu.memory_space<vmem>>, vector<32x50xbf16>
    tpu.vector_store %arg4[%c0_13, %c0_14], %29 {strides = array<i32>} : memref<32x50xbf16, #tpu.memory_space<vmem>>, vector<32x50xbf16>,
    return
  }
}

module attributes {stable_mosaic.version = 11 : i64} {
  func.func @_lstm_heads_kernel(%arg0: memref<2x928xbf16, #tpu.memory_space<vmem>>, %arg1: memref<2x128xf32, #tpu.memory_space<vmem>>, %arg2: memref<928x512xbf16, #tpu.memory_space<vmem>>, %arg3: memref<1x512xf32, #tpu.memory_space<vmem>>, %arg4: memref<128x128xbf16, #tpu.memory_space<vmem>>, %arg5: memref<1x128xf32, #tpu.memory_space<vmem>>, %arg6: memref<2x128xf32, #tpu.memory_space<vmem>>, %arg7: memref<2x128xf32, #tpu.memory_space<vmem>>, %arg8: memref<2x128xf32, #tpu.memory_space<vmem>>) attributes {dimension_semantics = [], scalar_prefetch = 0 : i64, scratch_operands = 0 : i64, tpu.core_type = #tpu.core_type<tc>} {
    %c0 = arith.constant 0 : index
    %c0_0 = arith.constant 0 : index
    %0 = vector.load %arg0[%c0, %c0_0] : memref<2x928xbf16, #tpu.memory_space<vmem>>, vector<2x928xbf16>
    %c0_1 = arith.constant 0 : index
    %c0_2 = arith.constant 0 : index
    %1 = vector.load %arg2[%c0_1, %c0_2] : memref<928x512xbf16, #tpu.memory_space<vmem>>, vector<928x512xbf16>
    %cst = arith.constant dense<0.000000e+00> : vector<2x512xf32>
    %2 = tpu.matmul %0, %1, %cst {dimension_numbers = #tpu.dot_dimension_numbers<[1], [0], [0], [1], [0, 0, 1, 1], [], []>} : vector<2x928xbf16>, vector<928x512xbf16>, vector<2x512xf32> -> vector<2x512xf32>
    %c0_3 = arith.constant 0 : index
    %c0_4 = arith.constant 0 : index
    %3 = vector.load %arg3[%c0_3, %c0_4] : memref<1x512xf32, #tpu.memory_space<vmem>>, vector<1x512xf32>
    %4 = vector.broadcast %3 : vector<1x512xf32> to vector<2x512xf32>
    %5 = arith.addf %2, %4 : vector<2x512xf32>
    %6 = vector.extract_strided_slice %5 {offsets = [0, 0], sizes = [2, 128], strides = [1, 1]} : vector<2x512xf32> to vector<2x128xf32>
    %7 = arith.negf %6 : vector<2x128xf32>
    %8 = math.exp %7 : vector<2x128xf32>
    %cst_5 = arith.constant 1.000000e+00 : f32
    %9 = vector.broadcast %cst_5 : f32 to vector<2x128xf32>
    %10 = arith.addf %9, %8 : vector<2x128xf32>
    %11 = arith.divf %9, %10 : vector<2x128xf32>
    %12 = vector.extract_strided_slice %5 {offsets = [0, 128], sizes = [2, 128], strides = [1, 1]} : vector<2x512xf32> to vector<2x128xf32>
    %13 = arith.negf %12 : vector<2x128xf32>
    %14 = math.exp %13 : vector<2x128xf32>
    %cst_6 = arith.constant 1.000000e+00 : f32
    %15 = vector.broadcast %cst_6 : f32 to vector<2x128xf32>
    %16 = arith.addf %15, %14 : vector<2x128xf32>
    %17 = arith.divf %15, %16 : vector<2x128xf32>
    %18 = vector.extract_strided_slice %5 {offsets = [0, 256], sizes = [2, 128], strides = [1, 1]} : vector<2x512xf32> to vector<2x128xf32>
    %19 = math.tanh %18 : vector<2x128xf32>
    %20 = vector.extract_strided_slice %5 {offsets = [0, 384], sizes = [2, 128], strides = [1, 1]} : vector<2x512xf32> to vector<2x128xf32>
    %21 = arith.negf %20 : vector<2x128xf32>
    %22 = math.exp %21 : vector<2x128xf32>
    %cst_7 = arith.constant 1.000000e+00 : f32
    %23 = vector.broadcast %cst_7 : f32 to vector<2x128xf32>
    %24 = arith.addf %23, %22 : vector<2x128xf32>
    %25 = arith.divf %23, %24 : vector<2x128xf32>
    %c0_8 = arith.constant 0 : index
    %c0_9 = arith.constant 0 : index
    %26 = vector.load %arg1[%c0_8, %c0_9] : memref<2x128xf32, #tpu.memory_space<vmem>>, vector<2x128xf32>
    %27 = arith.mulf %17, %26 : vector<2x128xf32>
    %28 = arith.mulf %11, %19 : vector<2x128xf32>
    %29 = arith.addf %27, %28 : vector<2x128xf32>
    %30 = math.tanh %29 : vector<2x128xf32>
    %31 = arith.mulf %25, %30 : vector<2x128xf32>
    %32 = arith.truncf %31 : vector<2x128xf32> to vector<2x128xbf16>
    %c0_10 = arith.constant 0 : index
    %c0_11 = arith.constant 0 : index
    %33 = vector.load %arg4[%c0_10, %c0_11] : memref<128x128xbf16, #tpu.memory_space<vmem>>, vector<128x128xbf16>
    %cst_12 = arith.constant dense<0.000000e+00> : vector<2x128xf32>
    %34 = tpu.matmul %32, %33, %cst_12 {dimension_numbers = #tpu.dot_dimension_numbers<[1], [0], [0], [1], [0, 0, 1, 1], [], []>} : vector<2x128xbf16>, vector<128x128xbf16>, vector<2x128xf32> -> vector<2x128xf32>
    %c0_13 = arith.constant 0 : index
    %c0_14 = arith.constant 0 : index
    %35 = vector.load %arg5[%c0_13, %c0_14] : memref<1x128xf32, #tpu.memory_space<vmem>>, vector<1x128xf32>
    %36 = vector.broadcast %35 : vector<1x128xf32> to vector<2x128xf32>
    %37 = arith.addf %34, %36 : vector<2x128xf32>
    %38 = tpu.iota {dimensions = array<i32: 1>} : vector<2x128xi32>
    %c6_i32 = arith.constant 6 : i32
    %39 = vector.broadcast %c6_i32 : i32 to vector<2x128xi32>
    %40 = arith.cmpi slt, %38, %39 : vector<2x128xi32>
    %cst_15 = arith.constant -1.000000e+30 : f32
    %41 = vector.broadcast %cst_15 : f32 to vector<2x128xf32>
    %42 = arith.select %40, %37, %41 : vector<2x128xi1>, vector<2x128xf32>
    %cst_16 = arith.constant dense<0xFF800000> : vector<2xf32>
    %43 = vector.multi_reduction <maximumf>, %42, %cst_16 [1] : vector<2x128xf32> to vector<2xf32>
    %44 = vector.shape_cast %43 : vector<2xf32> to vector<2x1xf32>
    %45 = vector.broadcast %44 : vector<2x1xf32> to vector<2x128xf32>
    %46 = arith.subf %42, %45 : vector<2x128xf32>
    %47 = math.exp %46 : vector<2x128xf32>
    %cst_17 = arith.constant dense<0.000000e+00> : vector<2xf32>
    %48 = vector.multi_reduction <add>, %47, %cst_17 [1] : vector<2x128xf32> to vector<2xf32>
    %49 = vector.shape_cast %48 : vector<2xf32> to vector<2x1xf32>
    %50 = tpu.reciprocal %49 {approx = true} : vector<2x1xf32> -> vector<2x1xf32>
    %51 = vector.broadcast %50 : vector<2x1xf32> to vector<2x128xf32>
    %52 = arith.mulf %47, %51 : vector<2x128xf32>
    %53 = arith.select %40, %52, %37 : vector<2x128xi1>, vector<2x128xf32>
    %c0_18 = arith.constant 0 : index
    %c0_19 = arith.constant 0 : index
    %54 = vector.load %arg6[%c0_18, %c0_19] : memref<2x128xf32, #tpu.memory_space<vmem>>, vector<2x128xf32>
    tpu.vector_store %arg6[%c0_18, %c0_19], %53 {strides = array<i32>} : memref<2x128xf32, #tpu.memory_space<vmem>>, vector<2x128xf32>,
    %c0_20 = arith.constant 0 : index
    %c0_21 = arith.constant 0 : index
    %55 = vector.load %arg7[%c0_20, %c0_21] : memref<2x128xf32, #tpu.memory_space<vmem>>, vector<2x128xf32>
    tpu.vector_store %arg7[%c0_20, %c0_21], %31 {strides = array<i32>} : memref<2x128xf32, #tpu.memory_space<vmem>>, vector<2x128xf32>,
    %c0_22 = arith.constant 0 : index
    %c0_23 = arith.constant 0 : index
    %56 = vector.load %arg8[%c0_22, %c0_23] : memref<2x128xf32, #tpu.memory_space<vmem>>, vector<2x128xf32>
    tpu.vector_store %arg8[%c0_22, %c0_23], %29 {strides = array<i32>} : memref<2x128xf32, #tpu.memory_space<vmem>>, vector<2x128xf32>,
    return
  }
}

</mosaic_0001>

<llo_original>
// kernel: lstm_policy_forward.5
$region0: #{lstm_policy_forward.5}
  #allocation0 [shape = 'u32[]', space=smem, size = 0x4, offset = 0x4, fixed_abs, tag = 'smem constant byte address 0x4 - core index']
  #allocation1 [shape = 'u32[72,128]{1,0:T(1,128)}', space=vmem, size = 0x9000, scoped, tag = 'internal scratch']
  %s0 = inlined_call_operand.vmem [shape: bf16[16,64], index: 0, kind: input, shape index: {}]
  %s1 = inlined_call_operand.vmem [shape: bf16[64,3200], index: 1, kind: input, shape index: {}]
  %s2 = inlined_call_operand.vmem [shape: f32[16,1], index: 2, kind: input, shape index: {}]
  %s3 = inlined_call_operand.vmem [shape: f32[16,1], index: 3, kind: input, shape index: {}]
  %s4 = inlined_call_operand.vmem [shape: bf16[16,3200], index: 4, kind: output, shape index: {}]
  %s5 = sld [smem:[#allocation0]]
  $region26: #{lstm_policy_forward.5} parent=0
    _
  %s7 = ssub.s32 1, %s5
  %s8 = scalar_select 0, %s7, %s5
  // Predicated region
  $region2: #{lstm_policy_forward.5} parent=0 // pred_check
    _
  $region3: #{lstm_policy_forward.5} parent=0 // pred_check_branch
    %10 = sbr.rel (0) target = $region5
  $region4: #{lstm_policy_forward.5} parent=0 // pred_region
    _
  $region5: #{lstm_policy_forward.5} parent=0 // pred_fallthru
    _
  // Predicated region
  $region6: #{lstm_policy_forward.5} parent=0 // pred_check
    _
  $region7: #{lstm_policy_forward.5} parent=0 // pred_check_branch
    %12 = sbr.rel (0) target = $region9
  $region8: #{lstm_policy_forward.5} parent=0 // pred_region
    _
  $region9: #{lstm_policy_forward.5} parent=0 // pred_fallthru
    _
  // Predicated region
  $region10: #{lstm_policy_forward.5} parent=0 // pred_check
    _
  $region11: #{lstm_policy_forward.5} parent=0 // pred_check_branch
    %14 = sbr.rel (0) target = $region13
  $region12: #{lstm_policy_forward.5} parent=0 // pred_region
    _
  $region13: #{lstm_policy_forward.5} parent=0 // pred_fallthru
    _
  // Predicated region
  $region14: #{lstm_policy_forward.5} parent=0 // pred_check
    _
  $region15: #{lstm_policy_forward.5} parent=0 // pred_check_branch
    %16 = sbr.rel (0) target = $region17
  $region16: #{lstm_policy_forward.5} parent=0 // pred_region
    _
  $region17: #{lstm_policy_forward.5} parent=0 // pred_fallthru
    _
  %v18 = vld [vmem:[%s0] sm:$0xf]
  %v19 = vld [vmem:[%s0 + $0x4] sm:$0xf]
  %v20 = vld [vmem:[%s1] sm:$0xff]
  %v21 = vld [vmem:[%s1 + $0x8] sm:$0xff]
  %v22 = vld [vmem:[%s1 + $0x10] sm:$0xff]
  %v23 = vld [vmem:[%s1 + $0x18] sm:$0xff]
  %v24 = vld [vmem:[%s1 + $0x20] sm:$0xff]
  %v25 = vld [vmem:[%s1 + $0x28] sm:$0xff]
  %v26 = vld [vmem:[%s1 + $0x30] sm:$0xff]
  %v27 = vld [vmem:[%s1 + $0x38] sm:$0xff]
  %v28 = vld [vmem:[%s1 + $0x40] sm:$0xff]
  %v29 = vld [vmem:[%s1 + $0x48] sm:$0xff]
  %v30 = vld [vmem:[%s1 + $0x50] sm:$0xff]
  %v31 = vld [vmem:[%s1 + $0x58] sm:$0xff]
  %v32 = vld [vmem:[%s1 + $0x60] sm:$0xf]
  %v33 = vld [vmem:[%s1 + $0x64] sm:$0xff]
  %v34 = vld [vmem:[%s1 + $0x6c] sm:$0xff]
  %v35 = vld [vmem:[%s1 + $0x74] sm:$0xff]
  %v36 = vld [vmem:[%s1 + $0x7c] sm:$0xff]
  %v37 = vld [vmem:[%s1 + $0x84] sm:$0xff]
  %v38 = vld [vmem:[%s1 + $0x8c] sm:$0xff]
  %v39 = vld [vmem:[%s1 + $0x94] sm:$0xff]
  %v40 = vld [vmem:[%s1 + $0x9c] sm:$0xff]
  %v41 = vld [vmem:[%s1 + $0xa4] sm:$0xff]
  %v42 = vld [vmem:[%s1 + $0xac] sm:$0xff]
  %v43 = vld [vmem:[%s1 + $0xb4] sm:$0xff]
  %v44 = vld [vmem:[%s1 + $0xbc] sm:$0xff]
  %v45 = vld [vmem:[%s1 + $0xc4] sm:$0xf]
  %v46 = vld [vmem:[%s1 + $0xc8] sm:$0xff]
  %v47 = vld [vmem:[%s1 + $0xd0] sm:$0xff]
  %v48 = vld [vmem:[%s1 + $0xd8] sm:$0xff]
  %v49 = vld [vmem:[%s1 + $0xe0] sm:$0xff]
  %v50 = vld [vmem:[%s1 + $0xe8] sm:$0xff]
  %v51 = vld [vmem:[%s1 + $0xf0] sm:$0xff]
  %v52 = vld [vmem:[%s1 + $0xf8] sm:$0xff]
  %v53 = vld [vmem:[%s1 + $0x100] sm:$0xff]
  %v54 = vld [vmem:[%s1 + $0x108] sm:$0xff]
  %v55 = vld [vmem:[%s1 + $0x110] sm:$0xff]
  %v56 = vld [vmem:[%s1 + $0x118] sm:$0xff]
  %v57 = vld [vmem:[%s1 + $0x120] sm:$0xff]
  %v58 = vld [vmem:[%s1 + $0x128] sm:$0xf]
  %v59 = vld [vmem:[%s1 + $0x12c] sm:$0xff]
  %v60 = vld [vmem:[%s1 + $0x134] sm:$0xff]
  %v61 = vld [vmem:[%s1 + $0x13c] sm:$0xff]
  %v62 = vld [vmem:[%s1 + $0x144] sm:$0xff]
  %v63 = vld [vmem:[%s1 + $0x14c] sm:$0xff]
  %v64 = vld [vmem:[%s1 + $0x154] sm:$0xff]
  %v65 = vld [vmem:[%s1 + $0x15c] sm:$0xff]
  %v66 = vld [vmem:[%s1 + $0x164] sm:$0xff]
  %v67 = vld [vmem:[%s1 + $0x16c] sm:$0xff]
  %v68 = vld [vmem:[%s1 + $0x174] sm:$0xff]
  %v69 = vld [vmem:[%s1 + $0x17c] sm:$0xff]
  %v70 = vld [vmem:[%s1 + $0x184] sm:$0xff]
  %v71 = vld [vmem:[%s1 + $0x18c] sm:$0xf]
  %v72 = vld [vmem:[%s1 + $0x190] sm:$0xff]
  %v73 = vld [vmem:[%s1 + $0x198] sm:$0xff]
  %v74 = vld [vmem:[%s1 + $0x1a0] sm:$0xff]
  %v75 = vld [vmem:[%s1 + $0x1a8] sm:$0xff]
  %v76 = vld [vmem:[%s1 + $0x1b0] sm:$0xff]
  %v77 = vld [vmem:[%s1 + $0x1b8] sm:$0xff]
  %v78 = vld [vmem:[%s1 + $0x1c0] sm:$0xff]
  %v79 = vld [vmem:[%s1 + $0x1c8] sm:$0xff]
  %v80 = vld [vmem:[%s1 + $0x1d0] sm:$0xff]
  %v81 = vld [vmem:[%s1 + $0x1d8] sm:$0xff]
  %v82 = vld [vmem:[%s1 + $0x1e0] sm:$0xff]
  %v83 = vld [vmem:[%s1 + $0x1e8] sm:$0xff]
  %v84 = vld [vmem:[%s1 + $0x1f0] sm:$0xf]
  %v85 = vld [vmem:[%s1 + $0x1f4] sm:$0xff]
  %v86 = vld [vmem:[%s1 + $0x1fc] sm:$0xff]
  %v87 = vld [vmem:[%s1 + $0x204] sm:$0xff]
  %v88 = vld [vmem:[%s1 + $0x20c] sm:$0xff]
  %v89 = vld [vmem:[%s1 + $0x214] sm:$0xff]
  %v90 = vld [vmem:[%s1 + $0x21c] sm:$0xff]
  %v91 = vld [vmem:[%s1 + $0x224] sm:$0xff]
  %v92 = vld [vmem:[%s1 + $0x22c] sm:$0xff]
  %v93 = vld [vmem:[%s1 + $0x234] sm:$0xff]
  %v94 = vld [vmem:[%s1 + $0x23c] sm:$0xff]
  %v95 = vld [vmem:[%s1 + $0x244] sm:$0xff]
  %v96 = vld [vmem:[%s1 + $0x24c] sm:$0xff]
  %v97 = vld [vmem:[%s1 + $0x254] sm:$0xf]
  %v98 = vld [vmem:[%s1 + $0x258] sm:$0xff]
  %v99 = vld [vmem:[%s1 + $0x260] sm:$0xff]
  %v100 = vld [vmem:[%s1 + $0x268] sm:$0xff]
  %v101 = vld [vmem:[%s1 + $0x270] sm:$0xff]
  %v102 = vld [vmem:[%s1 + $0x278] sm:$0xff]
  %v103 = vld [vmem:[%s1 + $0x280] sm:$0xff]
  %v104 = vld [vmem:[%s1 + $0x288] sm:$0xff]
  %v105 = vld [vmem:[%s1 + $0x290] sm:$0xff]
  %v106 = vld [vmem:[%s1 + $0x298] sm:$0xff]
  %v107 = vld [vmem:[%s1 + $0x2a0] sm:$0xff]
  %v108 = vld [vmem:[%s1 + $0x2a8] sm:$0xff]
  %v109 = vld [vmem:[%s1 + $0x2b0] sm:$0xff]
  %v110 = vld [vmem:[%s1 + $0x2b8] sm:$0xf]
  %v111 = vld [vmem:[%s1 + $0x2bc] sm:$0xff]
  %v112 = vld [vmem:[%s1 + $0x2c4] sm:$0xff]
  %v113 = vld [vmem:[%s1 + $0x2cc] sm:$0xff]
  %v114 = vld [vmem:[%s1 + $0x2d4] sm:$0xff]
  %v115 = vld [vmem:[%s1 + $0x2dc] sm:$0xff]
  %v116 = vld [vmem:[%s1 + $0x2e4] sm:$0xff]
  %v117 = vld [vmem:[%s1 + $0x2ec] sm:$0xff]
  %v118 = vld [vmem:[%s1 + $0x2f4] sm:$0xff]
  %v119 = vld [vmem:[%s1 + $0x2fc] sm:$0xff]
  %v120 = vld [vmem:[%s1 + $0x304] sm:$0xff]
  %v121 = vld [vmem:[%s1 + $0x30c] sm:$0xff]
  %v122 = vld [vmem:[%s1 + $0x314] sm:$0xff]
  %v123 = vld [vmem:[%s1 + $0x31c] sm:$0xf]
  %v126 = vunpack.c.l.b16 %v18
  %v127 = vunpack.c.l.b16 %v19
  %v128 = vpack.c.b16 %v127, %v126
  %v233 = vunpack.c.l.b16 %v20
  %v234 = vunpack.c.h.b16 %v20
  %v235 = vunpack.c.l.b16 %v21
  %v236 = vunpack.c.h.b16 %v21
  %v237 = vunpack.c.l.b16 %v22
  %v238 = vunpack.c.h.b16 %v22
  %v239 = vunpack.c.l.b16 %v23
  %v240 = vunpack.c.h.b16 %v23
  %v241 = vunpack.c.l.b16 %v24
  %v242 = vunpack.c.h.b16 %v24
  %v243 = vunpack.c.l.b16 %v25
  %v244 = vunpack.c.h.b16 %v25
  %v245 = vunpack.c.l.b16 %v26
  %v246 = vunpack.c.h.b16 %v26
  %v247 = vunpack.c.l.b16 %v27
  %v248 = vunpack.c.h.b16 %v27
  %v249 = vunpack.c.l.b16 %v28
  %v250 = vunpack.c.h.b16 %v28
  %v251 = vunpack.c.l.b16 %v29
  %v252 = vunpack.c.h.b16 %v29
  %v253 = vunpack.c.l.b16 %v30
  %v254 = vunpack.c.h.b16 %v30
  %v255 = vunpack.c.l.b16 %v31
  %v256 = vunpack.c.h.b16 %v31
  %v257 = vunpack.c.l.b16 %v32
  %v258 = vunpack.c.l.b16 %v33
  %v259 = vunpack.c.h.b16 %v33
  %v260 = vunpack.c.l.b16 %v34
  %v261 = vunpack.c.h.b16 %v34
  %v262 = vunpack.c.l.b16 %v35
  %v263 = vunpack.c.h.b16 %v35
  %v264 = vunpack.c.l.b16 %v36
  %v265 = vunpack.c.h.b16 %v36
  %v266 = vunpack.c.l.b16 %v37
  %v267 = vunpack.c.h.b16 %v37
  %v268 = vunpack.c.l.b16 %v38
  %v269 = vunpack.c.h.b16 %v38
  %v270 = vunpack.c.l.b16 %v39
  %v271 = vunpack.c.h.b16 %v39
  %v272 = vunpack.c.l.b16 %v40
  %v273 = vunpack.c.h.b16 %v40
  %v274 = vunpack.c.l.b16 %v41
  %v275 = vunpack.c.h.b16 %v41
  %v276 = vunpack.c.l.b16 %v42
  %v277 = vunpack.c.h.b16 %v42
  %v278 = vunpack.c.l.b16 %v43
  %v279 = vunpack.c.h.b16 %v43
  %v280 = vunpack.c.l.b16 %v44
  %v281 = vunpack.c.h.b16 %v44
  %v282 = vunpack.c.l.b16 %v45
  %v283 = vunpack.c.l.b16 %v46
  %v284 = vunpack.c.h.b16 %v46
  %v285 = vunpack.c.l.b16 %v47
  %v286 = vunpack.c.h.b16 %v47
  %v287 = vunpack.c.l.b16 %v48
  %v288 = vunpack.c.h.b16 %v48
  %v289 = vunpack.c.l.b16 %v49
  %v290 = vunpack.c.h.b16 %v49
  %v291 = vunpack.c.l.b16 %v50
  %v292 = vunpack.c.h.b16 %v50
  %v293 = vunpack.c.l.b16 %v51
  %v294 = vunpack.c.h.b16 %v51
  %v295 = vunpack.c.l.b16 %v52
  %v296 = vunpack.c.h.b16 %v52
  %v297 = vunpack.c.l.b16 %v53
  %v298 = vunpack.c.h.b16 %v53
  %v299 = vunpack.c.l.b16 %v54
  %v300 = vunpack.c.h.b16 %v54
  %v301 = vunpack.c.l.b16 %v55
  %v302 = vunpack.c.h.b16 %v55
  %v303 = vunpack.c.l.b16 %v56
  %v304 = vunpack.c.h.b16 %v56
  %v305 = vunpack.c.l.b16 %v57
  %v306 = vunpack.c.h.b16 %v57
  %v307 = vunpack.c.l.b16 %v58
  %v308 = vunpack.c.l.b16 %v59
  %v309 = vunpack.c.h.b16 %v59
  %v310 = vunpack.c.l.b16 %v60
  %v311 = vunpack.c.h.b16 %v60
  %v312 = vunpack.c.l.b16 %v61
  %v313 = vunpack.c.h.b16 %v61
  %v314 = vunpack.c.l.b16 %v62
  %v315 = vunpack.c.h.b16 %v62
  %v316 = vunpack.c.l.b16 %v63
  %v317 = vunpack.c.h.b16 %v63
  %v318 = vunpack.c.l.b16 %v64
  %v319 = vunpack.c.h.b16 %v64
  %v320 = vunpack.c.l.b16 %v65
  %v321 = vunpack.c.h.b16 %v65
  %v322 = vunpack.c.l.b16 %v66
  %v323 = vunpack.c.h.b16 %v66
  %v324 = vunpack.c.l.b16 %v67
  %v325 = vunpack.c.h.b16 %v67
  %v326 = vunpack.c.l.b16 %v68
  %v327 = vunpack.c.h.b16 %v68
  %v328 = vunpack.c.l.b16 %v69
  %v329 = vunpack.c.h.b16 %v69
  %v330 = vunpack.c.l.b16 %v70
  %v331 = vunpack.c.h.b16 %v70
  %v332 = vunpack.c.l.b16 %v71
  %v333 = vunpack.c.l.b16 %v72
  %v334 = vunpack.c.h.b16 %v72
  %v335 = vunpack.c.l.b16 %v73
  %v336 = vunpack.c.h.b16 %v73
  %v337 = vunpack.c.l.b16 %v74
  %v338 = vunpack.c.h.b16 %v74
  %v339 = vunpack.c.l.b16 %v75
  %v340 = vunpack.c.h.b16 %v75
  %v341 = vunpack.c.l.b16 %v76
  %v342 = vunpack.c.h.b16 %v76
  %v343 = vunpack.c.l.b16 %v77
  %v344 = vunpack.c.h.b16 %v77
  %v345 = vunpack.c.l.b16 %v78
  %v346 = vunpack.c.h.b16 %v78
  %v347 = vunpack.c.l.b16 %v79
  %v348 = vunpack.c.h.b16 %v79
  %v349 = vunpack.c.l.b16 %v80
  %v350 = vunpack.c.h.b16 %v80
  %v351 = vunpack.c.l.b16 %v81
  %v352 = vunpack.c.h.b16 %v81
  %v353 = vunpack.c.l.b16 %v82
  %v354 = vunpack.c.h.b16 %v82
  %v355 = vunpack.c.l.b16 %v83
  %v356 = vunpack.c.h.b16 %v83
  %v357 = vunpack.c.l.b16 %v84
  %v358 = vunpack.c.l.b16 %v85
  %v359 = vunpack.c.h.b16 %v85
  %v360 = vunpack.c.l.b16 %v86
  %v361 = vunpack.c.h.b16 %v86
  %v362 = vunpack.c.l.b16 %v87
  %v363 = vunpack.c.h.b16 %v87
  %v364 = vunpack.c.l.b16 %v88
  %v365 = vunpack.c.h.b16 %v88
  %v366 = vunpack.c.l.b16 %v89
  %v367 = vunpack.c.h.b16 %v89
  %v368 = vunpack.c.l.b16 %v90
  %v369 = vunpack.c.h.b16 %v90
  %v370 = vunpack.c.l.b16 %v91
  %v371 = vunpack.c.h.b16 %v91
  %v372 = vunpack.c.l.b16 %v92
  %v373 = vunpack.c.h.b16 %v92
  %v374 = vunpack.c.l.b16 %v93
  %v375 = vunpack.c.h.b16 %v93
  %v376 = vunpack.c.l.b16 %v94
  %v377 = vunpack.c.h.b16 %v94
  %v378 = vunpack.c.l.b16 %v95
  %v379 = vunpack.c.h.b16 %v95
  %v380 = vunpack.c.l.b16 %v96
  %v381 = vunpack.c.h.b16 %v96
  %v382 = vunpack.c.l.b16 %v97
  %v383 = vunpack.c.l.b16 %v98
  %v384 = vunpack.c.h.b16 %v98
  %v385 = vunpack.c.l.b16 %v99
  %v386 = vunpack.c.h.b16 %v99
  %v387 = vunpack.c.l.b16 %v100
  %v388 = vunpack.c.h.b16 %v100
  %v389 = vunpack.c.l.b16 %v101
  %v390 = vunpack.c.h.b16 %v101
  %v391 = vunpack.c.l.b16 %v102
  %v392 = vunpack.c.h.b16 %v102
  %v393 = vunpack.c.l.b16 %v103
  %v394 = vunpack.c.h.b16 %v103
  %v395 = vunpack.c.l.b16 %v104
  %v396 = vunpack.c.h.b16 %v104
  %v397 = vunpack.c.l.b16 %v105
  %v398 = vunpack.c.h.b16 %v105
  %v399 = vunpack.c.l.b16 %v106
  %v400 = vunpack.c.h.b16 %v106
  %v401 = vunpack.c.l.b16 %v107
  %v402 = vunpack.c.h.b16 %v107
  %v403 = vunpack.c.l.b16 %v108
  %v404 = vunpack.c.h.b16 %v108
  %v405 = vunpack.c.l.b16 %v109
  %v406 = vunpack.c.h.b16 %v109
  %v407 = vunpack.c.l.b16 %v110
  %v408 = vunpack.c.l.b16 %v111
  %v409 = vunpack.c.h.b16 %v111
  %v410 = vunpack.c.l.b16 %v112
  %v411 = vunpack.c.h.b16 %v112
  %v412 = vunpack.c.l.b16 %v113
  %v413 = vunpack.c.h.b16 %v113
  %v414 = vunpack.c.l.b16 %v114
  %v415 = vunpack.c.h.b16 %v114
  %v416 = vunpack.c.l.b16 %v115
  %v417 = vunpack.c.h.b16 %v115
  %v418 = vunpack.c.l.b16 %v116
  %v419 = vunpack.c.h.b16 %v116
  %v420 = vunpack.c.l.b16 %v117
  %v421 = vunpack.c.h.b16 %v117
  %v422 = vunpack.c.l.b16 %v118
  %v423 = vunpack.c.h.b16 %v118
  %v424 = vunpack.c.l.b16 %v119
  %v425 = vunpack.c.h.b16 %v119
  %v426 = vunpack.c.l.b16 %v120
  %v427 = vunpack.c.h.b16 %v120
  %v428 = vunpack.c.l.b16 %v121
  %v429 = vunpack.c.h.b16 %v121
  %v430 = vunpack.c.l.b16 %v122
  %v431 = vunpack.c.h.b16 %v122
  %v432 = vunpack.c.l.b16 %v123
  %v433 = vpack.c.b16 %v258, %v233
  %v434 = vpack.c.b16 %v259, %v234
  %v435 = vpack.c.b16 %v260, %v235
  %v436 = vpack.c.b16 %v261, %v236
  %v437 = vpack.c.b16 %v262, %v237
  %v438 = vpack.c.b16 %v263, %v238
  %v439 = vpack.c.b16 %v264, %v239
  %v440 = vpack.c.b16 %v265, %v240
  %v441 = vpack.c.b16 %v266, %v241
  %v442 = vpack.c.b16 %v267, %v242
  %v443 = vpack.c.b16 %v268, %v243
  %v444 = vpack.c.b16 %v269, %v244
  %v445 = vpack.c.b16 %v270, %v245
  %v446 = vpack.c.b16 %v271, %v246
  %v447 = vpack.c.b16 %v272, %v247
  %v448 = vpack.c.b16 %v273, %v248
  %v449 = vpack.c.b16 %v274, %v249
  %v450 = vpack.c.b16 %v275, %v250
  %v451 = vpack.c.b16 %v276, %v251
  %v452 = vpack.c.b16 %v277, %v252
  %v453 = vpack.c.b16 %v278, %v253
  %v454 = vpack.c.b16 %v279, %v254
  %v455 = vpack.c.b16 %v280, %v255
  %v456 = vpack.c.b16 %v281, %v256
  %v457 = vpack.c.b16 %v282, %v257
  %v458 = vpack.c.b16 %v308, %v283
  %v459 = vpack.c.b16 %v309, %v284
  %v460 = vpack.c.b16 %v310, %v285
  %v461 = vpack.c.b16 %v311, %v286
  %v462 = vpack.c.b16 %v312, %v287
  %v463 = vpack.c.b16 %v313, %v288
  %v464 = vpack.c.b16 %v314, %v289
  %v465 = vpack.c.b16 %v315, %v290
  %v466 = vpack.c.b16 %v316, %v291
  %v467 = vpack.c.b16 %v317, %v292
  %v468 = vpack.c.b16 %v318, %v293
  %v469 = vpack.c.b16 %v319, %v294
  %v470 = vpack.c.b16 %v320, %v295
  %v471 = vpack.c.b16 %v321, %v296
  %v472 = vpack.c.b16 %v322, %v297
  %v473 = vpack.c.b16 %v323, %v298
  %v474 = vpack.c.b16 %v324, %v299
  %v475 = vpack.c.b16 %v325, %v300
  %v476 = vpack.c.b16 %v326, %v301
  %v477 = vpack.c.b16 %v327, %v302
  %v478 = vpack.c.b16 %v328, %v303
  %v479 = vpack.c.b16 %v329, %v304
  %v480 = vpack.c.b16 %v330, %v305
  %v481 = vpack.c.b16 %v331, %v306
  %v482 = vpack.c.b16 %v332, %v307
  %v483 = vpack.c.b16 %v358, %v333
  %v484 = vpack.c.b16 %v359, %v334
  %v485 = vpack.c.b16 %v360, %v335
  %v486 = vpack.c.b16 %v361, %v336
  %v487 = vpack.c.b16 %v362, %v337
  %v488 = vpack.c.b16 %v363, %v338
  %v489 = vpack.c.b16 %v364, %v339
  %v490 = vpack.c.b16 %v365, %v340
  %v491 = vpack.c.b16 %v366, %v341
  %v492 = vpack.c.b16 %v367, %v342
  %v493 = vpack.c.b16 %v368, %v343
  %v494 = vpack.c.b16 %v369, %v344
  %v495 = vpack.c.b16 %v370, %v345
  %v496 = vpack.c.b16 %v371, %v346
  %v497 = vpack.c.b16 %v372, %v347
  %v498 = vpack.c.b16 %v373, %v348
  %v499 = vpack.c.b16 %v374, %v349
  %v500 = vpack.c.b16 %v375, %v350
  %v501 = vpack.c.b16 %v376, %v351
  %v502 = vpack.c.b16 %v377, %v352
  %v503 = vpack.c.b16 %v378, %v353
  %v504 = vpack.c.b16 %v379, %v354
  %v505 = vpack.c.b16 %v380, %v355
  %v506 = vpack.c.b16 %v381, %v356
  %v507 = vpack.c.b16 %v382, %v357
  %v508 = vpack.c.b16 %v408, %v383
  %v509 = vpack.c.b16 %v409, %v384
  %v510 = vpack.c.b16 %v410, %v385
  %v511 = vpack.c.b16 %v411, %v386
  %v512 = vpack.c.b16 %v412, %v387
  %v513 = vpack.c.b16 %v413, %v388
  %v514 = vpack.c.b16 %v414, %v389
  %v515 = vpack.c.b16 %v415, %v390
  %v516 = vpack.c.b16 %v416, %v391
  %v517 = vpack.c.b16 %v417, %v392
  %v518 = vpack.c.b16 %v418, %v393
  %v519 = vpack.c.b16 %v419, %v394
  %v520 = vpack.c.b16 %v420, %v395
  %v521 = vpack.c.b16 %v421, %v396
  %v522 = vpack.c.b16 %v422, %v397
  %v523 = vpack.c.b16 %v423, %v398
  %v524 = vpack.c.b16 %v424, %v399
  %v525 = vpack.c.b16 %v425, %v400
  %v526 = vpack.c.b16 %v426, %v401
  %v527 = vpack.c.b16 %v427, %v402
  %v528 = vpack.c.b16 %v428, %v403
  %v529 = vpack.c.b16 %v429, %v404
  %v530 = vpack.c.b16 %v430, %v405
  %v531 = vpack.c.b16 %v431, %v406
  %v532 = vpack.c.b16 %v432, %v407
  %vm633 = vcmask 523264
  %v635 = vsel %vm633, %v128, 0
  %637 = vmatpush.bf16.msra.mxu0 0
  %638 = vmatpush.bf16.msra.mxu0 0
  %639 = vmatpush.bf16.msra.mxu0 0
  %640 = vmatpush.bf16.msra.mxu0 0
  %641 = vmatpush.bf16.msra.mxu0 %v508
  %642 = vmatpush.bf16.msra.mxu0 %v483
  %643 = vmatpush.bf16.msra.mxu0 %v458
  %644 = vmatpush.bf16.msra.mxu0 %v433
  %645 = vmatmul.bf16.gmra.mxu0 %v635
  %v646 = vpop.f32.mrf.mxu0
  %v647 = vadd.f32 0.0, %v646
  %v648 = vpop.f32.mrf.mxu0
  %v649 = vadd.f32 0.0, %v648
  %650 = vdwg.mxu0
  %651 = vmatpush.bf16.msra.mxu0 0
  %652 = vmatpush.bf16.msra.mxu0 0
  %653 = vmatpush.bf16.msra.mxu0 0
  %654 = vmatpush.bf16.msra.mxu0 0
  %655 = vmatpush.bf16.msra.mxu0 %v509
  %656 = vmatpush.bf16.msra.mxu0 %v484
  %657 = vmatpush.bf16.msra.mxu0 %v459
  %658 = vmatpush.bf16.msra.mxu0 %v434
  %659 = vmatmul.bf16.gmra.mxu0 %v635
  %v660 = vpop.f32.mrf.mxu0
  %v661 = vadd.f32 0.0, %v660
  %v662 = vpop.f32.mrf.mxu0
  %v663 = vadd.f32 0.0, %v662
  %664 = vdwg.mxu0
  %665 = vmatpush.bf16.msra.mxu0 0
  %666 = vmatpush.bf16.msra.mxu0 0
  %667 = vmatpush.bf16.msra.mxu0 0
  %668 = vmatpush.bf16.msra.mxu0 0
  %669 = vmatpush.bf16.msra.mxu0 %v510
  %670 = vmatpush.bf16.msra.mxu0 %v485
  %671 = vmatpush.bf16.msra.mxu0 %v460
  %672 = vmatpush.bf16.msra.mxu0 %v435
  %673 = vmatmul.bf16.gmra.mxu0 %v635
  %v674 = vpop.f32.mrf.mxu0
  %v675 = vadd.f32 0.0, %v674
  %v676 = vpop.f32.mrf.mxu0
  %v677 = vadd.f32 0.0, %v676
  %678 = vdwg.mxu0
  %679 = vmatpush.bf16.msra.mxu0 0
  %680 = vmatpush.bf16.msra.mxu0 0
  %681 = vmatpush.bf16.msra.mxu0 0
  %682 = vmatpush.bf16.msra.mxu0 0
  %683 = vmatpush.bf16.msra.mxu0 %v511
  %684 = vmatpush.bf16.msra.mxu0 %v486
  %685 = vmatpush.bf16.msra.mxu0 %v461
  %686 = vmatpush.bf16.msra.mxu0 %v436
  %687 = vmatmul.bf16.gmra.mxu0 %v635
  %v688 = vpop.f32.mrf.mxu0
  %v689 = vadd.f32 0.0, %v688
  %v690 = vpop.f32.mrf.mxu0
  %v691 = vadd.f32 0.0, %v690
  %692 = vdwg.mxu0
  %693 = vmatpush.bf16.msra.mxu0 0
  %694 = vmatpush.bf16.msra.mxu0 0
  %695 = vmatpush.bf16.msra.mxu0 0
  %696 = vmatpush.bf16.msra.mxu0 0
  %697 = vmatpush.bf16.msra.mxu0 %v512
  %698 = vmatpush.bf16.msra.mxu0 %v487
  %699 = vmatpush.bf16.msra.mxu0 %v462
  %700 = vmatpush.bf16.msra.mxu0 %v437
  %701 = vmatmul.bf16.gmra.mxu0 %v635
  %v702 = vpop.f32.mrf.mxu0
  %v703 = vadd.f32 0.0, %v702
  %v704 = vpop.f32.mrf.mxu0
  %v705 = vadd.f32 0.0, %v704
  %706 = vdwg.mxu0
  %707 = vmatpush.bf16.msra.mxu0 0
  %708 = vmatpush.bf16.msra.mxu0 0
  %709 = vmatpush.bf16.msra.mxu0 0
  %710 = vmatpush.bf16.msra.mxu0 0
  %711 = vmatpush.bf16.msra.mxu0 %v513
  %712 = vmatpush.bf16.msra.mxu0 %v488
  %713 = vmatpush.bf16.msra.mxu0 %v463
  %714 = vmatpush.bf16.msra.mxu0 %v438
  %715 = vmatmul.bf16.gmra.mxu0 %v635
  %v716 = vpop.f32.mrf.mxu0
  %v717 = vadd.f32 0.0, %v716
  %v718 = vpop.f32.mrf.mxu0
  %v719 = vadd.f32 0.0, %v718
  %720 = vdwg.mxu0
  %721 = vmatpush.bf16.msra.mxu0 0
  %722 = vmatpush.bf16.msra.mxu0 0
  %723 = vmatpush.bf16.msra.mxu0 0
  %724 = vmatpush.bf16.msra.mxu0 0
  %725 = vmatpush.bf16.msra.mxu0 %v514
  %726 = vmatpush.bf16.msra.mxu0 %v489
  %727 = vmatpush.bf16.msra.mxu0 %v464
  %728 = vmatpush.bf16.msra.mxu0 %v439
  %729 = vmatmul.bf16.gmra.mxu0 %v635
  %v730 = vpop.f32.mrf.mxu0
  %v731 = vadd.f32 0.0, %v730
  %v732 = vpop.f32.mrf.mxu0
  %v733 = vadd.f32 0.0, %v732
  %734 = vdwg.mxu0
  %735 = vmatpush.bf16.msra.mxu0 0
  %736 = vmatpush.bf16.msra.mxu0 0
  %737 = vmatpush.bf16.msra.mxu0 0
  %738 = vmatpush.bf16.msra.mxu0 0
  %739 = vmatpush.bf16.msra.mxu0 %v515
  %740 = vmatpush.bf16.msra.mxu0 %v490
  %741 = vmatpush.bf16.msra.mxu0 %v465
  %742 = vmatpush.bf16.msra.mxu0 %v440
  %743 = vmatmul.bf16.gmra.mxu0 %v635
  %v744 = vpop.f32.mrf.mxu0
  %v745 = vadd.f32 0.0, %v744
  %v746 = vpop.f32.mrf.mxu0
  %v747 = vadd.f32 0.0, %v746
  %748 = vdwg.mxu0
  %749 = vmatpush.bf16.msra.mxu0 0
  %750 = vmatpush.bf16.msra.mxu0 0
  %751 = vmatpush.bf16.msra.mxu0 0
  %752 = vmatpush.bf16.msra.mxu0 0
  %753 = vmatpush.bf16.msra.mxu0 %v516
  %754 = vmatpush.bf16.msra.mxu0 %v491
  %755 = vmatpush.bf16.msra.mxu0 %v466
  %756 = vmatpush.bf16.msra.mxu0 %v441
  %757 = vmatmul.bf16.gmra.mxu0 %v635
  %v758 = vpop.f32.mrf.mxu0
  %v759 = vadd.f32 0.0, %v758
  %v760 = vpop.f32.mrf.mxu0
  %v761 = vadd.f32 0.0, %v760
  %762 = vdwg.mxu0
  %763 = vmatpush.bf16.msra.mxu0 0
  %764 = vmatpush.bf16.msra.mxu0 0
  %765 = vmatpush.bf16.msra.mxu0 0
  %766 = vmatpush.bf16.msra.mxu0 0
  %767 = vmatpush.bf16.msra.mxu0 %v517
  %768 = vmatpush.bf16.msra.mxu0 %v492
  %769 = vmatpush.bf16.msra.mxu0 %v467
  %770 = vmatpush.bf16.msra.mxu0 %v442
  %771 = vmatmul.bf16.gmra.mxu0 %v635
  %v772 = vpop.f32.mrf.mxu0
  %v773 = vadd.f32 0.0, %v772
  %v774 = vpop.f32.mrf.mxu0
  %v775 = vadd.f32 0.0, %v774
  %776 = vdwg.mxu0
  %777 = vmatpush.bf16.msra.mxu0 0
  %778 = vmatpush.bf16.msra.mxu0 0
  %779 = vmatpush.bf16.msra.mxu0 0
  %780 = vmatpush.bf16.msra.mxu0 0
  %781 = vmatpush.bf16.msra.mxu0 %v518
  %782 = vmatpush.bf16.msra.mxu0 %v493
  %783 = vmatpush.bf16.msra.mxu0 %v468
  %784 = vmatpush.bf16.msra.mxu0 %v443
  %785 = vmatmul.bf16.gmra.mxu0 %v635
  %v786 = vpop.f32.mrf.mxu0
  %v787 = vadd.f32 0.0, %v786
  %v788 = vpop.f32.mrf.mxu0
  %v789 = vadd.f32 0.0, %v788
  %790 = vdwg.mxu0
  %791 = vmatpush.bf16.msra.mxu0 0
  %792 = vmatpush.bf16.msra.mxu0 0
  %793 = vmatpush.bf16.msra.mxu0 0
  %794 = vmatpush.bf16.msra.mxu0 0
  %795 = vmatpush.bf16.msra.mxu0 %v519
  %796 = vmatpush.bf16.msra.mxu0 %v494
  %797 = vmatpush.bf16.msra.mxu0 %v469
  %798 = vmatpush.bf16.msra.mxu0 %v444
  %799 = vmatmul.bf16.gmra.mxu0 %v635
  %v800 = vpop.f32.mrf.mxu0
  %v801 = vadd.f32 0.0, %v800
  %v802 = vpop.f32.mrf.mxu0
  %v803 = vadd.f32 0.0, %v802
  %804 = vdwg.mxu0
  %805 = vmatpush.bf16.msra.mxu0 0
  %806 = vmatpush.bf16.msra.mxu0 0
  %807 = vmatpush.bf16.msra.mxu0 0
  %808 = vmatpush.bf16.msra.mxu0 0
  %809 = vmatpush.bf16.msra.mxu0 %v520
  %810 = vmatpush.bf16.msra.mxu0 %v495
  %811 = vmatpush.bf16.msra.mxu0 %v470
  %812 = vmatpush.bf16.msra.mxu0 %v445
  %813 = vmatmul.bf16.gmra.mxu0 %v635
  %v814 = vpop.f32.mrf.mxu0
  %v815 = vadd.f32 0.0, %v814
  %v816 = vpop.f32.mrf.mxu0
  %v817 = vadd.f32 0.0, %v816
  %818 = vdwg.mxu0
  %819 = vmatpush.bf16.msra.mxu0 0
  %820 = vmatpush.bf16.msra.mxu0 0
  %821 = vmatpush.bf16.msra.mxu0 0
  %822 = vmatpush.bf16.msra.mxu0 0
  %823 = vmatpush.bf16.msra.mxu0 %v521
  %824 = vmatpush.bf16.msra.mxu0 %v496
  %825 = vmatpush.bf16.msra.mxu0 %v471
  %826 = vmatpush.bf16.msra.mxu0 %v446
  %827 = vmatmul.bf16.gmra.mxu0 %v635
  %v828 = vpop.f32.mrf.mxu0
  %v829 = vadd.f32 0.0, %v828
  %v830 = vpop.f32.mrf.mxu0
  %v831 = vadd.f32 0.0, %v830
  %832 = vdwg.mxu0
  %833 = vmatpush.bf16.msra.mxu0 0
  %834 = vmatpush.bf16.msra.mxu0 0
  %835 = vmatpush.bf16.msra.mxu0 0
  %836 = vmatpush.bf16.msra.mxu0 0
  %837 = vmatpush.bf16.msra.mxu0 %v522
  %838 = vmatpush.bf16.msra.mxu0 %v497
  %839 = vmatpush.bf16.msra.mxu0 %v472
  %840 = vmatpush.bf16.msra.mxu0 %v447
  %841 = vmatmul.bf16.gmra.mxu0 %v635
  %v842 = vpop.f32.mrf.mxu0
  %v843 = vadd.f32 0.0, %v842
  %v844 = vpop.f32.mrf.mxu0
  %v845 = vadd.f32 0.0, %v844
  %846 = vdwg.mxu0
  %847 = vmatpush.bf16.msra.mxu0 0
  %848 = vmatpush.bf16.msra.mxu0 0
  %849 = vmatpush.bf16.msra.mxu0 0
  %850 = vmatpush.bf16.msra.mxu0 0
  %851 = vmatpush.bf16.msra.mxu0 %v523
  %852 = vmatpush.bf16.msra.mxu0 %v498
  %853 = vmatpush.bf16.msra.mxu0 %v473
  %854 = vmatpush.bf16.msra.mxu0 %v448
  %855 = vmatmul.bf16.gmra.mxu0 %v635
  %v856 = vpop.f32.mrf.mxu0
  %v857 = vadd.f32 0.0, %v856
  %v858 = vpop.f32.mrf.mxu0
  %v859 = vadd.f32 0.0, %v858
  %860 = vdwg.mxu0
  %861 = vmatpush.bf16.msra.mxu0 0
  %862 = vmatpush.bf16.msra.mxu0 0
  %863 = vmatpush.bf16.msra.mxu0 0
  %864 = vmatpush.bf16.msra.mxu0 0
  %865 = vmatpush.bf16.msra.mxu0 %v524
  %866 = vmatpush.bf16.msra.mxu0 %v499
  %867 = vmatpush.bf16.msra.mxu0 %v474
  %868 = vmatpush.bf16.msra.mxu0 %v449
  %869 = vmatmul.bf16.gmra.mxu0 %v635
  %v870 = vpop.f32.mrf.mxu0
  %v871 = vadd.f32 0.0, %v870
  %v872 = vpop.f32.mrf.mxu0
  %v873 = vadd.f32 0.0, %v872
  %874 = vdwg.mxu0
  %875 = vmatpush.bf16.msra.mxu0 0
  %876 = vmatpush.bf16.msra.mxu0 0
  %877 = vmatpush.bf16.msra.mxu0 0
  %878 = vmatpush.bf16.msra.mxu0 0
  %879 = vmatpush.bf16.msra.mxu0 %v525
  %880 = vmatpush.bf16.msra.mxu0 %v500
  %881 = vmatpush.bf16.msra.mxu0 %v475
  %882 = vmatpush.bf16.msra.mxu0 %v450
  %883 = vmatmul.bf16.gmra.mxu0 %v635
  %v884 = vpop.f32.mrf.mxu0
  %v885 = vadd.f32 0.0, %v884
  %v886 = vpop.f32.mrf.mxu0
  %v887 = vadd.f32 0.0, %v886
  %888 = vdwg.mxu0
  %889 = vmatpush.bf16.msra.mxu0 0
  %890 = vmatpush.bf16.msra.mxu0 0
  %891 = vmatpush.bf16.msra.mxu0 0
  %892 = vmatpush.bf16.msra.mxu0 0
  %893 = vmatpush.bf16.msra.mxu0 %v526
  %894 = vmatpush.bf16.msra.mxu0 %v501
  %895 = vmatpush.bf16.msra.mxu0 %v476
  %896 = vmatpush.bf16.msra.mxu0 %v451
  %897 = vmatmul.bf16.gmra.mxu0 %v635
  %v898 = vpop.f32.mrf.mxu0
  %v899 = vadd.f32 0.0, %v898
  %v900 = vpop.f32.mrf.mxu0
  %v901 = vadd.f32 0.0, %v900
  %902 = vdwg.mxu0
  %903 = vmatpush.bf16.msra.mxu0 0
  %904 = vmatpush.bf16.msra.mxu0 0
  %905 = vmatpush.bf16.msra.mxu0 0
  %906 = vmatpush.bf16.msra.mxu0 0
  %907 = vmatpush.bf16.msra.mxu0 %v527
  %908 = vmatpush.bf16.msra.mxu0 %v502
  %909 = vmatpush.bf16.msra.mxu0 %v477
  %910 = vmatpush.bf16.msra.mxu0 %v452
  %911 = vmatmul.bf16.gmra.mxu0 %v635
  %v912 = vpop.f32.mrf.mxu0
  %v913 = vadd.f32 0.0, %v912
  %v914 = vpop.f32.mrf.mxu0
  %v915 = vadd.f32 0.0, %v914
  %916 = vdwg.mxu0
  %917 = vmatpush.bf16.msra.mxu0 0
  %918 = vmatpush.bf16.msra.mxu0 0
  %919 = vmatpush.bf16.msra.mxu0 0
  %920 = vmatpush.bf16.msra.mxu0 0
  %921 = vmatpush.bf16.msra.mxu0 %v528
  %922 = vmatpush.bf16.msra.mxu0 %v503
  %923 = vmatpush.bf16.msra.mxu0 %v478
  %924 = vmatpush.bf16.msra.mxu0 %v453
  %925 = vmatmul.bf16.gmra.mxu0 %v635
  %v926 = vpop.f32.mrf.mxu0
  %v927 = vadd.f32 0.0, %v926
  %v928 = vpop.f32.mrf.mxu0
  %v929 = vadd.f32 0.0, %v928
  %930 = vdwg.mxu0
  %931 = vmatpush.bf16.msra.mxu0 0
  %932 = vmatpush.bf16.msra.mxu0 0
  %933 = vmatpush.bf16.msra.mxu0 0
  %934 = vmatpush.bf16.msra.mxu0 0
  %935 = vmatpush.bf16.msra.mxu0 %v529
  %936 = vmatpush.bf16.msra.mxu0 %v504
  %937 = vmatpush.bf16.msra.mxu0 %v479
  %938 = vmatpush.bf16.msra.mxu0 %v454
  %939 = vmatmul.bf16.gmra.mxu0 %v635
  %v940 = vpop.f32.mrf.mxu0
  %v941 = vadd.f32 0.0, %v940
  %v942 = vpop.f32.mrf.mxu0
  %v943 = vadd.f32 0.0, %v942
  %944 = vdwg.mxu0
  %945 = vmatpush.bf16.msra.mxu0 0
  %946 = vmatpush.bf16.msra.mxu0 0
  %947 = vmatpush.bf16.msra.mxu0 0
  %948 = vmatpush.bf16.msra.mxu0 0
  %949 = vmatpush.bf16.msra.mxu0 %v530
  %950 = vmatpush.bf16.msra.mxu0 %v505
  %951 = vmatpush.bf16.msra.mxu0 %v480
  %952 = vmatpush.bf16.msra.mxu0 %v455
  %953 = vmatmul.bf16.gmra.mxu0 %v635
  %v954 = vpop.f32.mrf.mxu0
  %v955 = vadd.f32 0.0, %v954
  %v956 = vpop.f32.mrf.mxu0
  %v957 = vadd.f32 0.0, %v956
  %958 = vdwg.mxu0
  %959 = vmatpush.bf16.msra.mxu0 0
  %960 = vmatpush.bf16.msra.mxu0 0
  %961 = vmatpush.bf16.msra.mxu0 0
  %962 = vmatpush.bf16.msra.mxu0 0
  %963 = vmatpush.bf16.msra.mxu0 %v531
  %964 = vmatpush.bf16.msra.mxu0 %v506
  %965 = vmatpush.bf16.msra.mxu0 %v481
  %966 = vmatpush.bf16.msra.mxu0 %v456
  %967 = vmatmul.bf16.gmra.mxu0 %v635
  %v968 = vpop.f32.mrf.mxu0
  %v969 = vadd.f32 0.0, %v968
  %v970 = vpop.f32.mrf.mxu0
  %v971 = vadd.f32 0.0, %v970
  %972 = vdwg.mxu0
  %973 = vmatpush.bf16.msra.mxu0 0
  %974 = vmatpush.bf16.msra.mxu0 0
  %975 = vmatpush.bf16.msra.mxu0 0
  %976 = vmatpush.bf16.msra.mxu0 0
  %977 = vmatpush.bf16.msra.mxu0 %v532
  %978 = vmatpush.bf16.msra.mxu0 %v507
  %979 = vmatpush.bf16.msra.mxu0 %v482
  %980 = vmatpush.bf16.msra.mxu0 %v457
  %981 = vmatmul.bf16.gmra.mxu0 %v635
  %v982 = vpop.f32.mrf.mxu0
  %v983 = vadd.f32 0.0, %v982
  %v984 = vpop.f32.mrf.mxu0
  %v985 = vadd.f32 0.0, %v984
  %986 = vdwg.mxu0
  %v987 = vadd.f32 %v647, %v661
  %v988 = vadd.f32 %v987, %v675
  %v989 = vadd.f32 %v988, %v689
  %v990 = vadd.f32 %v989, %v703
  %v991 = vadd.f32 %v990, %v717
  %v992 = vadd.f32 %v991, %v731
  %v993 = vadd.f32 %v992, %v745
  %v994 = vadd.f32 %v993, %v759
  %v995 = vadd.f32 %v994, %v773
  %v996 = vadd.f32 %v995, %v787
  %v997 = vadd.f32 %v996, %v801
  %v998 = vadd.f32 %v997, %v815
  %v999 = vadd.f32 %v998, %v829
  %v1000 = vadd.f32 %v999, %v843
  %v1001 = vadd.f32 %v1000, %v857
  %v1002 = vadd.f32 %v1001, %v871
  %v1003 = vadd.f32 %v1002, %v885
  %v1004 = vadd.f32 %v1003, %v899
  %v1005 = vadd.f32 %v1004, %v913
  %v1006 = vadd.f32 %v1005, %v927
  %v1007 = vadd.f32 %v1006, %v941
  %v1008 = vadd.f32 %v1007, %v955
  %v1009 = vadd.f32 %v1008, %v969
  %v1010 = vadd.f32 %v1009, %v983
  %1011 = vadd.xlane.f32.xlu0 %v1010
  %v1012 = vpop.xlane.xlu0 %1011
  %v1013 = vadd.f32 %v649, %v663
  %v1014 = vadd.f32 %v1013, %v677
  %v1015 = vadd.f32 %v1014, %v691
  %v1016 = vadd.f32 %v1015, %v705
  %v1017 = vadd.f32 %v1016, %v719
  %v1018 = vadd.f32 %v1017, %v733
  %v1019 = vadd.f32 %v1018, %v747
  %v1020 = vadd.f32 %v1019, %v761
  %v1021 = vadd.f32 %v1020, %v775
  %v1022 = vadd.f32 %v1021, %v789
  %v1023 = vadd.f32 %v1022, %v803
  %v1024 = vadd.f32 %v1023, %v817
  %v1025 = vadd.f32 %v1024, %v831
  %v1026 = vadd.f32 %v1025, %v845
  %v1027 = vadd.f32 %v1026, %v859
  %v1028 = vadd.f32 %v1027, %v873
  %v1029 = vadd.f32 %v1028, %v887
  %v1030 = vadd.f32 %v1029, %v901
  %v1031 = vadd.f32 %v1030, %v915
  %v1032 = vadd.f32 %v1031, %v929
  %v1033 = vadd.f32 %v1032, %v943
  %v1034 = vadd.f32 %v1033, %v957
  %v1035 = vadd.f32 %v1034, %v971
  %v1036 = vadd.f32 %v1035, %v985
  %1037 = vadd.xlane.f32.xlu0 %v1036
  %v1038 = vpop.xlane.xlu0 %1037
  %v1039 = vrcp.pop 3200.0
  %v1040 = vmul.f32 3200.0, %v1039
  %v1041 = vsub.f32 1.0, %v1040
  %v1042 = vmul.f32 %v1039, %v1041
  %v1043 = vadd.f32 %v1039, %v1042
  %vm1044 = vweird.f32 %v1039
  %v1045 = vsel %vm1044, %v1039, %v1043
  %v1046 = vmul.f32 %v1012, %v1045
  %v1047 = vmul.f32 %v1038, %v1045
  %v1048 = vsub.f32 %v647, %v1046
  %v1049 = vsub.f32 %v661, %v1046
  %v1050 = vsub.f32 %v675, %v1046
  %v1051 = vsub.f32 %v689, %v1046
  %v1052 = vsub.f32 %v703, %v1046
  %v1053 = vsub.f32 %v717, %v1046
  %v1054 = vsub.f32 %v731, %v1046
  %v1055 = vsub.f32 %v745, %v1046
  %v1056 = vsub.f32 %v759, %v1046
  %v1057 = vsub.f32 %v773, %v1046
  %v1058 = vsub.f32 %v787, %v1046
  %v1059 = vsub.f32 %v801, %v1046
  %v1060 = vsub.f32 %v815, %v1046
  %v1061 = vsub.f32 %v829, %v1046
  %v1062 = vsub.f32 %v843, %v1046
  %v1063 = vsub.f32 %v857, %v1046
  %v1064 = vsub.f32 %v871, %v1046
  %v1065 = vsub.f32 %v885, %v1046
  %v1066 = vsub.f32 %v899, %v1046
  %v1067 = vsub.f32 %v913, %v1046
  %v1068 = vsub.f32 %v927, %v1046
  %v1069 = vsub.f32 %v941, %v1046
  %v1070 = vsub.f32 %v955, %v1046
  %v1071 = vsub.f32 %v969, %v1046
  %v1072 = vsub.f32 %v983, %v1046
  %v1073 = vsub.f32 %v649, %v1047
  %v1074 = vsub.f32 %v663, %v1047
  %v1075 = vsub.f32 %v677, %v1047
  %v1076 = vsub.f32 %v691, %v1047
  %v1077 = vsub.f32 %v705, %v1047
  %v1078 = vsub.f32 %v719, %v1047
  %v1079 = vsub.f32 %v733, %v1047
  %v1080 = vsub.f32 %v747, %v1047
  %v1081 = vsub.f32 %v761, %v1047
  %v1082 = vsub.f32 %v775, %v1047
  %v1083 = vsub.f32 %v789, %v1047
  %v1084 = vsub.f32 %v803, %v1047
  %v1085 = vsub.f32 %v817, %v1047
  %v1086 = vsub.f32 %v831, %v1047
  %v1087 = vsub.f32 %v845, %v1047
  %v1088 = vsub.f32 %v859, %v1047
  %v1089 = vsub.f32 %v873, %v1047
  %v1090 = vsub.f32 %v887, %v1047
  %v1091 = vsub.f32 %v901, %v1047
  %v1092 = vsub.f32 %v915, %v1047
  %v1093 = vsub.f32 %v929, %v1047
  %v1094 = vsub.f32 %v943, %v1047
  %v1095 = vsub.f32 %v957, %v1047
  %v1096 = vsub.f32 %v971, %v1047
  %v1097 = vsub.f32 %v985, %v1047
  %v1098 = vmul.f32 %v1048, %v1048
  %v1099 = vmul.f32 %v1049, %v1049
  %v1100 = vmul.f32 %v1050, %v1050
  %v1101 = vmul.f32 %v1051, %v1051
  %v1102 = vmul.f32 %v1052, %v1052
  %v1103 = vmul.f32 %v1053, %v1053
  %v1104 = vmul.f32 %v1054, %v1054
  %v1105 = vmul.f32 %v1055, %v1055
  %v1106 = vmul.f32 %v1056, %v1056
  %v1107 = vmul.f32 %v1057, %v1057
  %v1108 = vmul.f32 %v1058, %v1058
  %v1109 = vmul.f32 %v1059, %v1059
  %v1110 = vmul.f32 %v1060, %v1060
  %v1111 = vmul.f32 %v1061, %v1061
  %v1112 = vmul.f32 %v1062, %v1062
  %v1113 = vmul.f32 %v1063, %v1063
  %v1114 = vmul.f32 %v1064, %v1064
  %v1115 = vmul.f32 %v1065, %v1065
  %v1116 = vmul.f32 %v1066, %v1066
  %v1117 = vmul.f32 %v1067, %v1067
  %v1118 = vmul.f32 %v1068, %v1068
  %v1119 = vmul.f32 %v1069, %v1069
  %v1120 = vmul.f32 %v1070, %v1070
  %v1121 = vmul.f32 %v1071, %v1071
  %v1122 = vmul.f32 %v1072, %v1072
  %v1123 = vmul.f32 %v1073, %v1073
  %v1124 = vmul.f32 %v1074, %v1074
  %v1125 = vmul.f32 %v1075, %v1075
  %v1126 = vmul.f32 %v1076, %v1076
  %v1127 = vmul.f32 %v1077, %v1077
  %v1128 = vmul.f32 %v1078, %v1078
  %v1129 = vmul.f32 %v1079, %v1079
  %v1130 = vmul.f32 %v1080, %v1080
  %v1131 = vmul.f32 %v1081, %v1081
  %v1132 = vmul.f32 %v1082, %v1082
  %v1133 = vmul.f32 %v1083, %v1083
  %v1134 = vmul.f32 %v1084, %v1084
  %v1135 = vmul.f32 %v1085, %v1085
  %v1136 = vmul.f32 %v1086, %v1086
  %v1137 = vmul.f32 %v1087, %v1087
  %v1138 = vmul.f32 %v1088, %v1088
  %v1139 = vmul.f32 %v1089, %v1089
  %v1140 = vmul.f32 %v1090, %v1090
  %v1141 = vmul.f32 %v1091, %v1091
  %v1142 = vmul.f32 %v1092, %v1092
  %v1143 = vmul.f32 %v1093, %v1093
  %v1144 = vmul.f32 %v1094, %v1094
  %v1145 = vmul.f32 %v1095, %v1095
  %v1146 = vmul.f32 %v1096, %v1096
  %v1147 = vmul.f32 %v1097, %v1097
  %v1148 = vadd.f32 %v1098, %v1099
  %v1149 = vadd.f32 %v1148, %v1100
  %v1150 = vadd.f32 %v1149, %v1101
  %v1151 = vadd.f32 %v1150, %v1102
  %v1152 = vadd.f32 %v1151, %v1103
  %v1153 = vadd.f32 %v1152, %v1104
  %v1154 = vadd.f32 %v1153, %v1105
  %v1155 = vadd.f32 %v1154, %v1106
  %v1156 = vadd.f32 %v1155, %v1107
  %v1157 = vadd.f32 %v1156, %v1108
  %v1158 = vadd.f32 %v1157, %v1109
  %v1159 = vadd.f32 %v1158, %v1110
  %v1160 = vadd.f32 %v1159, %v1111
  %v1161 = vadd.f32 %v1160, %v1112
  %v1162 = vadd.f32 %v1161, %v1113
  %v1163 = vadd.f32 %v1162, %v1114
  %v1164 = vadd.f32 %v1163, %v1115
  %v1165 = vadd.f32 %v1164, %v1116
  %v1166 = vadd.f32 %v1165, %v1117
  %v1167 = vadd.f32 %v1166, %v1118
  %v1168 = vadd.f32 %v1167, %v1119
  %v1169 = vadd.f32 %v1168, %v1120
  %v1170 = vadd.f32 %v1169, %v1121
  %v1171 = vadd.f32 %v1170, %v1122
  %1172 = vadd.xlane.f32.xlu0 %v1171
  %v1173 = vpop.xlane.xlu0 %1172
  %v1174 = vadd.f32 %v1123, %v1124
  %v1175 = vadd.f32 %v1174, %v1125
  %v1176 = vadd.f32 %v1175, %v1126
  %v1177 = vadd.f32 %v1176, %v1127
  %v1178 = vadd.f32 %v1177, %v1128
  %v1179 = vadd.f32 %v1178, %v1129
  %v1180 = vadd.f32 %v1179, %v1130
  %v1181 = vadd.f32 %v1180, %v1131
  %v1182 = vadd.f32 %v1181, %v1132
  %v1183 = vadd.f32 %v1182, %v1133
  %v1184 = vadd.f32 %v1183, %v1134
  %v1185 = vadd.f32 %v1184, %v1135
  %v1186 = vadd.f32 %v1185, %v1136
  %v1187 = vadd.f32 %v1186, %v1137
  %v1188 = vadd.f32 %v1187, %v1138
  %v1189 = vadd.f32 %v1188, %v1139
  %v1190 = vadd.f32 %v1189, %v1140
  %v1191 = vadd.f32 %v1190, %v1141
  %v1192 = vadd.f32 %v1191, %v1142
  %v1193 = vadd.f32 %v1192, %v1143
  %v1194 = vadd.f32 %v1193, %v1144
  %v1195 = vadd.f32 %v1194, %v1145
  %v1196 = vadd.f32 %v1195, %v1146
  %v1197 = vadd.f32 %v1196, %v1147
  %1198 = vadd.xlane.f32.xlu0 %v1197
  %v1199 = vpop.xlane.xlu0 %1198
  %v1200 = vmul.f32 %v1173, %v1045
  %v1201 = vmul.f32 %v1199, %v1045
  %v1202 = vadd.f32 %v1200, 1e-05
  %v1203 = vadd.f32 %v1201, 1e-05
  %v1204 = vrsqrt.pop %v1202
  %v1205 = vmul.f32 %v1204, %v1202
  %v1206 = vmul.f32 %v1205, %v1204
  %v1207 = vmul.f32 0.5, %v1206
  %v1208 = vsub.f32 1.5, %v1207
  %v1209 = vmul.f32 %v1204, %v1208
  %vm1210 = vweird.f32 %v1202
  %vm1211 = vweird.f32 %v1204
  %vm1212 = vmor %vm1210, %vm1211
  %v1213 = vsel %vm1212, %v1204, %v1209
  %v1214 = vrsqrt.pop %v1203
  %v1215 = vmul.f32 %v1214, %v1203
  %v1216 = vmul.f32 %v1215, %v1214
  %v1217 = vmul.f32 0.5, %v1216
  %v1218 = vsub.f32 1.5, %v1217
  %v1219 = vmul.f32 %v1214, %v1218
  %vm1220 = vweird.f32 %v1203
  %vm1221 = vweird.f32 %v1214
  %vm1222 = vmor %vm1220, %vm1221
  %v1223 = vsel %vm1222, %v1214, %v1219
  %v1224 = vmul.f32 %v1048, %v1213
  %v1225 = vmul.f32 %v1049, %v1213
  %v1226 = vmul.f32 %v1050, %v1213
  %v1227 = vmul.f32 %v1051, %v1213
  %v1228 = vmul.f32 %v1052, %v1213
  %v1229 = vmul.f32 %v1053, %v1213
  %v1230 = vmul.f32 %v1054, %v1213
  %v1231 = vmul.f32 %v1055, %v1213
  %v1232 = vmul.f32 %v1056, %v1213
  %v1233 = vmul.f32 %v1057, %v1213
  %v1234 = vmul.f32 %v1058, %v1213
  %v1235 = vmul.f32 %v1059, %v1213
  %v1236 = vmul.f32 %v1060, %v1213
  %v1237 = vmul.f32 %v1061, %v1213
  %v1238 = vmul.f32 %v1062, %v1213
  %v1239 = vmul.f32 %v1063, %v1213
  %v1240 = vmul.f32 %v1064, %v1213
  %v1241 = vmul.f32 %v1065, %v1213
  %v1242 = vmul.f32 %v1066, %v1213
  %v1243 = vmul.f32 %v1067, %v1213
  %v1244 = vmul.f32 %v1068, %v1213
  %v1245 = vmul.f32 %v1069, %v1213
  %v1246 = vmul.f32 %v1070, %v1213
  %v1247 = vmul.f32 %v1071, %v1213
  %v1248 = vmul.f32 %v1072, %v1213
  %v1249 = vmul.f32 %v1073, %v1223
  %v1250 = vmul.f32 %v1074, %v1223
  %v1251 = vmul.f32 %v1075, %v1223
  %v1252 = vmul.f32 %v1076, %v1223
  %v1253 = vmul.f32 %v1077, %v1223
  %v1254 = vmul.f32 %v1078, %v1223
  %v1255 = vmul.f32 %v1079, %v1223
  %v1256 = vmul.f32 %v1080, %v1223
  %v1257 = vmul.f32 %v1081, %v1223
  %v1258 = vmul.f32 %v1082, %v1223
  %v1259 = vmul.f32 %v1083, %v1223
  %v1260 = vmul.f32 %v1084, %v1223
  %v1261 = vmul.f32 %v1085, %v1223
  %v1262 = vmul.f32 %v1086, %v1223
  %v1263 = vmul.f32 %v1087, %v1223
  %v1264 = vmul.f32 %v1088, %v1223
  %v1265 = vmul.f32 %v1089, %v1223
  %v1266 = vmul.f32 %v1090, %v1223
  %v1267 = vmul.f32 %v1091, %v1223
  %v1268 = vmul.f32 %v1092, %v1223
  %v1269 = vmul.f32 %v1093, %v1223
  %v1270 = vmul.f32 %v1094, %v1223
  %v1271 = vmul.f32 %v1095, %v1223
  %v1272 = vmul.f32 %v1096, %v1223
  %v1273 = vmul.f32 %v1097, %v1223
  %v1274 = vld [vmem:[%s2] sm:$0xff]
  %v1275 = vld [vmem:[%s2 + $0x8] sm:$0xff]
  %1277 = vset.pattern.permute.xlu0 0
  %1278 = vperm.xlu0 %1277, %v1274
  %v1279 = vpop.permute.xlu0 %1278
  %1282 = vset.pattern.permute.xlu0 0
  %1283 = vperm.xlu0 %1282, %v1275
  %v1284 = vpop.permute.xlu0 %1283
  %v1286 = vmul.f32 %v1224, %v1279
  %v1287 = vmul.f32 %v1225, %v1279
  %v1288 = vmul.f32 %v1226, %v1279
  %v1289 = vmul.f32 %v1227, %v1279
  %v1290 = vmul.f32 %v1228, %v1279
  %v1291 = vmul.f32 %v1229, %v1279
  %v1292 = vmul.f32 %v1230, %v1279
  %v1293 = vmul.f32 %v1231, %v1279
  %v1294 = vmul.f32 %v1232, %v1279
  %v1295 = vmul.f32 %v1233, %v1279
  %v1296 = vmul.f32 %v1234, %v1279
  %v1297 = vmul.f32 %v1235, %v1279
  %v1298 = vmul.f32 %v1236, %v1279
  %v1299 = vmul.f32 %v1237, %v1279
  %v1300 = vmul.f32 %v1238, %v1279
  %v1301 = vmul.f32 %v1239, %v1279
  %v1302 = vmul.f32 %v1240, %v1279
  %v1303 = vmul.f32 %v1241, %v1279
  %v1304 = vmul.f32 %v1242, %v1279
  %v1305 = vmul.f32 %v1243, %v1279
  %v1306 = vmul.f32 %v1244, %v1279
  %v1307 = vmul.f32 %v1245, %v1279
  %v1308 = vmul.f32 %v1246, %v1279
  %v1309 = vmul.f32 %v1247, %v1279
  %v1310 = vmul.f32 %v1248, %v1279
  %v1311 = vmul.f32 %v1249, %v1284
  %v1312 = vmul.f32 %v1250, %v1284
  %v1313 = vmul.f32 %v1251, %v1284
  %v1314 = vmul.f32 %v1252, %v1284
  %v1315 = vmul.f32 %v1253, %v1284
  %v1316 = vmul.f32 %v1254, %v1284
  %v1317 = vmul.f32 %v1255, %v1284
  %v1318 = vmul.f32 %v1256, %v1284
  %v1319 = vmul.f32 %v1257, %v1284
  %v1320 = vmul.f32 %v1258, %v1284
  %v1321 = vmul.f32 %v1259, %v1284
  %v1322 = vmul.f32 %v1260, %v1284
  %v1323 = vmul.f32 %v1261, %v1284
  %v1324 = vmul.f32 %v1262, %v1284
  %v1325 = vmul.f32 %v1263, %v1284
  %v1326 = vmul.f32 %v1264, %v1284
  %v1327 = vmul.f32 %v1265, %v1284
  %v1328 = vmul.f32 %v1266, %v1284
  %v1329 = vmul.f32 %v1267, %v1284
  %v1330 = vmul.f32 %v1268, %v1284
  %v1331 = vmul.f32 %v1269, %v1284
  %v1332 = vmul.f32 %v1270, %v1284
  %v1333 = vmul.f32 %v1271, %v1284
  %v1334 = vmul.f32 %v1272, %v1284
  %v1335 = vmul.f32 %v1273, %v1284
  %v1336 = vld [vmem:[%s3] sm:$0xff]
  %v1337 = vld [vmem:[%s3 + $0x8] sm:$0xff]
  %1339 = vset.pattern.permute.xlu0 0
  %1340 = vperm.xlu0 %1339, %v1336
  %v1341 = vpop.permute.xlu0 %1340
  %1344 = vset.pattern.permute.xlu0 0
  %1345 = vperm.xlu0 %1344, %v1337
  %v1346 = vpop.permute.xlu0 %1345
  %v1348 = vadd.f32 %v1286, %v1341
  %v1349 = vadd.f32 %v1287, %v1341
  %v1350 = vadd.f32 %v1288, %v1341
  %v1351 = vadd.f32 %v1289, %v1341
  %v1352 = vadd.f32 %v1290, %v1341
  %v1353 = vadd.f32 %v1291, %v1341
  %v1354 = vadd.f32 %v1292, %v1341
  %v1355 = vadd.f32 %v1293, %v1341
  %v1356 = vadd.f32 %v1294, %v1341
  %v1357 = vadd.f32 %v1295, %v1341
  %v1358 = vadd.f32 %v1296, %v1341
  %v1359 = vadd.f32 %v1297, %v1341
  %v1360 = vadd.f32 %v1298, %v1341
  %v1361 = vadd.f32 %v1299, %v1341
  %v1362 = vadd.f32 %v1300, %v1341
  %v1363 = vadd.f32 %v1301, %v1341
  %v1364 = vadd.f32 %v1302, %v1341
  %v1365 = vadd.f32 %v1303, %v1341
  %v1366 = vadd.f32 %v1304, %v1341
  %v1367 = vadd.f32 %v1305, %v1341
  %v1368 = vadd.f32 %v1306, %v1341
  %v1369 = vadd.f32 %v1307, %v1341
  %v1370 = vadd.f32 %v1308, %v1341
  %v1371 = vadd.f32 %v1309, %v1341
  %v1372 = vadd.f32 %v1310, %v1341
  %v1373 = vadd.f32 %v1311, %v1346
  %v1374 = vadd.f32 %v1312, %v1346
  %v1375 = vadd.f32 %v1313, %v1346
  %v1376 = vadd.f32 %v1314, %v1346
  %v1377 = vadd.f32 %v1315, %v1346
  %v1378 = vadd.f32 %v1316, %v1346
  %v1379 = vadd.f32 %v1317, %v1346
  %v1380 = vadd.f32 %v1318, %v1346
  %v1381 = vadd.f32 %v1319, %v1346
  %v1382 = vadd.f32 %v1320, %v1346
  %v1383 = vadd.f32 %v1321, %v1346
  %v1384 = vadd.f32 %v1322, %v1346
  %v1385 = vadd.f32 %v1323, %v1346
  %v1386 = vadd.f32 %v1324, %v1346
  %v1387 = vadd.f32 %v1325, %v1346
  %v1388 = vadd.f32 %v1326, %v1346
  %v1389 = vadd.f32 %v1327, %v1346
  %v1390 = vadd.f32 %v1328, %v1346
  %v1391 = vadd.f32 %v1329, %v1346
  %v1392 = vadd.f32 %v1330, %v1346
  %v1393 = vadd.f32 %v1331, %v1346
  %v1394 = vadd.f32 %v1332, %v1346
  %v1395 = vadd.f32 %v1333, %v1346
  %v1396 = vadd.f32 %v1334, %v1346
  %v1397 = vadd.f32 %v1335, %v1346
  %v1398 = vmax.f32 %v1348, 0.0
  %v1399 = vmax.f32 %v1349, 0.0
  %v1400 = vmax.f32 %v1350, 0.0
  %v1401 = vmax.f32 %v1351, 0.0
  %v1402 = vmax.f32 %v1352, 0.0
  %v1403 = vmax.f32 %v1353, 0.0
  %v1404 = vmax.f32 %v1354, 0.0
  %v1405 = vmax.f32 %v1355, 0.0
  %v1406 = vmax.f32 %v1356, 0.0
  %v1407 = vmax.f32 %v1357, 0.0
  %v1408 = vmax.f32 %v1358, 0.0
  %v1409 = vmax.f32 %v1359, 0.0
  %v1410 = vmax.f32 %v1360, 0.0
  %v1411 = vmax.f32 %v1361, 0.0
  %v1412 = vmax.f32 %v1362, 0.0
  %v1413 = vmax.f32 %v1363, 0.0
  %v1414 = vmax.f32 %v1364, 0.0
  %v1415 = vmax.f32 %v1365, 0.0
  %v1416 = vmax.f32 %v1366, 0.0
  %v1417 = vmax.f32 %v1367, 0.0
  %v1418 = vmax.f32 %v1368, 0.0
  %v1419 = vmax.f32 %v1369, 0.0
  %v1420 = vmax.f32 %v1370, 0.0
  %v1421 = vmax.f32 %v1371, 0.0
  %v1422 = vmax.f32 %v1372, 0.0
  %v1423 = vmax.f32 %v1373, 0.0
  %v1424 = vmax.f32 %v1374, 0.0
  %v1425 = vmax.f32 %v1375, 0.0
  %v1426 = vmax.f32 %v1376, 0.0
  %v1427 = vmax.f32 %v1377, 0.0
  %v1428 = vmax.f32 %v1378, 0.0
  %v1429 = vmax.f32 %v1379, 0.0
  %v1430 = vmax.f32 %v1380, 0.0
  %v1431 = vmax.f32 %v1381, 0.0
  %v1432 = vmax.f32 %v1382, 0.0
  %v1433 = vmax.f32 %v1383, 0.0
  %v1434 = vmax.f32 %v1384, 0.0
  %v1435 = vmax.f32 %v1385, 0.0
  %v1436 = vmax.f32 %v1386, 0.0
  %v1437 = vmax.f32 %v1387, 0.0
  %v1438 = vmax.f32 %v1388, 0.0
  %v1439 = vmax.f32 %v1389, 0.0
  %v1440 = vmax.f32 %v1390, 0.0
  %v1441 = vmax.f32 %v1391, 0.0
  %v1442 = vmax.f32 %v1392, 0.0
  %v1443 = vmax.f32 %v1393, 0.0
  %v1444 = vmax.f32 %v1394, 0.0
  %v1445 = vmax.f32 %v1395, 0.0
  %v1446 = vmax.f32 %v1396, 0.0
  %v1447 = vmax.f32 %v1397, 0.0
  %v1448 = vpack.c.bf16 %v1399, %v1398
  %v1449 = vpack.c.bf16 %v1401, %v1400
  %v1450 = vpack.c.bf16 %v1403, %v1402
  %v1451 = vpack.c.bf16 %v1405, %v1404
  %v1452 = vpack.c.bf16 %v1407, %v1406
  %v1453 = vpack.c.bf16 %v1409, %v1408
  %v1454 = vpack.c.bf16 %v1411, %v1410
  %v1455 = vpack.c.bf16 %v1413, %v1412
  %v1456 = vpack.c.bf16 %v1415, %v1414
  %v1457 = vpack.c.bf16 %v1417, %v1416
  %v1458 = vpack.c.bf16 %v1419, %v1418
  %v1459 = vpack.c.bf16 %v1421, %v1420
  %v1460 = vpack.c.bf16 %v1422, %v1422
  %v1461 = vpack.c.bf16 %v1424, %v1423
  %v1462 = vpack.c.bf16 %v1426, %v1425
  %v1463 = vpack.c.bf16 %v1428, %v1427
  %v1464 = vpack.c.bf16 %v1430, %v1429
  %v1465 = vpack.c.bf16 %v1432, %v1431
  %v1466 = vpack.c.bf16 %v1434, %v1433
  %v1467 = vpack.c.bf16 %v1436, %v1435
  %v1468 = vpack.c.bf16 %v1438, %v1437
  %v1469 = vpack.c.bf16 %v1440, %v1439
  %v1470 = vpack.c.bf16 %v1442, %v1441
  %v1471 = vpack.c.bf16 %v1444, %v1443
  %v1472 = vpack.c.bf16 %v1446, %v1445
  %v1473 = vpack.c.bf16 %v1447, %v1447
  %1474 = vst [vmem:[%s4] sm:$0xff] %v1448
  %1475 = vst [vmem:[%s4 + $0x8] sm:$0xff] %v1449
  %1476 = vst [vmem:[%s4 + $0x10] sm:$0xff] %v1450
  %1477 = vst [vmem:[%s4 + $0x18] sm:$0xff] %v1451
  %1478 = vst [vmem:[%s4 + $0x20] sm:$0xff] %v1452
  %1479 = vst [vmem:[%s4 + $0x28] sm:$0xff] %v1453
  %1480 = vst [vmem:[%s4 + $0x30] sm:$0xff] %v1454
  %1481 = vst [vmem:[%s4 + $0x38] sm:$0xff] %v1455
  %1482 = vst [vmem:[%s4 + $0x40] sm:$0xff] %v1456
  %1483 = vst [vmem:[%s4 + $0x48] sm:$0xff] %v1457
  %1484 = vst [vmem:[%s4 + $0x50] sm:$0xff] %v1458
  %1485 = vst [vmem:[%s4 + $0x58] sm:$0xff] %v1459
  %1486 = vst [vmem:[%s4 + $0x60] sm:$0xf] %v1460
  %1487 = vst [vmem:[%s4 + $0x64] sm:$0xff] %v1461
  %1488 = vst [vmem:[%s4 + $0x6c] sm:$0xff] %v1462
  %1489 = vst [vmem:[%s4 + $0x74] sm:$0xff] %v1463
  %1490 = vst [vmem:[%s4 + $0x7c] sm:$0xff] %v1464
  %1491 = vst [vmem:[%s4 + $0x84] sm:$0xff] %v1465
  %1492 = vst [vmem:[%s4 + $0x8c] sm:$0xff] %v1466
  %1493 = vst [vmem:[%s4 + $0x94] sm:$0xff] %v1467
  %1494 = vst [vmem:[%s4 + $0x9c] sm:$0xff] %v1468
  %1495 = vst [vmem:[%s4 + $0xa4] sm:$0xff] %v1469
  %1496 = vst [vmem:[%s4 + $0xac] sm:$0xff] %v1470
  %1497 = vst [vmem:[%s4 + $0xb4] sm:$0xff] %v1471
  %1498 = vst [vmem:[%s4 + $0xbc] sm:$0xff] %v1472
  %1499 = vst [vmem:[%s4 + $0xc4] sm:$0xf] %v1473
  // Predicated region
  $region18: #{lstm_policy_forward.5} parent=0 // pred_check
    _
  $region19: #{lstm_policy_forward.5} parent=0 // pred_check_branch
    %1501 = sbr.rel (0) target = $region21
  $region20: #{lstm_policy_forward.5} parent=0 // pred_region
    _
  $region21: #{lstm_policy_forward.5} parent=0 // pred_fallthru
    _
  // Predicated region
  $region22: #{lstm_policy_forward.5} parent=0 // pred_check
    _
  $region23: #{lstm_policy_forward.5} parent=0 // pred_check_branch
    %1503 = sbr.rel (0) target = $region25
  $region24: #{lstm_policy_forward.5} parent=0 // pred_region
    _
  $region25: #{lstm_policy_forward.5} parent=0 // pred_fallthru
    _

// kernel: lstm_policy_forward.6
$region0: #{lstm_policy_forward.6}
  #allocation0 [shape = 'u32[]', space=smem, size = 0x4, offset = 0x4, fixed_abs, tag = 'smem constant byte address 0x4 - core index']
  #allocation1 [shape = 'u32[72,128]{1,0:T(1,128)}', space=vmem, size = 0x9000, scoped, tag = 'internal scratch']
  %s0 = inlined_call_operand.vmem [shape: bf16[32,256], index: 0, kind: input, shape index: {}]
  %s1 = inlined_call_operand.vmem [shape: bf16[256,800], index: 1, kind: input, shape index: {}]
  %s2 = inlined_call_operand.vmem [shape: f32[32,1], index: 2, kind: input, shape index: {}]
  %s3 = inlined_call_operand.vmem [shape: f32[32,1], index: 3, kind: input, shape index: {}]
  %s4 = inlined_call_operand.vmem [shape: bf16[32,800], index: 4, kind: output, shape index: {}]
  %s5 = sld [smem:[#allocation0]]
  $region26: #{lstm_policy_forward.6} parent=0
    _
  %s7 = ssub.s32 1, %s5
  %s8 = scalar_select 0, %s7, %s5
  // Predicated region
  $region2: #{lstm_policy_forward.6} parent=0 // pred_check
    _
  $region3: #{lstm_policy_forward.6} parent=0 // pred_check_branch
    %10 = sbr.rel (0) target = $region5
  $region4: #{lstm_policy_forward.6} parent=0 // pred_region
    _
  $region5: #{lstm_policy_forward.6} parent=0 // pred_fallthru
    _
  // Predicated region
  $region6: #{lstm_policy_forward.6} parent=0 // pred_check
    _
  $region7: #{lstm_policy_forward.6} parent=0 // pred_check_branch
    %12 = sbr.rel (0) target = $region9
  $region8: #{lstm_policy_forward.6} parent=0 // pred_region
    _
  $region9: #{lstm_policy_forward.6} parent=0 // pred_fallthru
    _
  // Predicated region
  $region10: #{lstm_policy_forward.6} parent=0 // pred_check
    _
  $region11: #{lstm_policy_forward.6} parent=0 // pred_check_branch
    %14 = sbr.rel (0) target = $region13
  $region12: #{lstm_policy_forward.6} parent=0 // pred_region
    _
  $region13: #{lstm_policy_forward.6} parent=0 // pred_fallthru
    _
  // Predicated region
  $region14: #{lstm_policy_forward.6} parent=0 // pred_check
    _
  $region15: #{lstm_policy_forward.6} parent=0 // pred_check_branch
    %16 = sbr.rel (0) target = $region17
  $region16: #{lstm_policy_forward.6} parent=0 // pred_region
    _
  $region17: #{lstm_policy_forward.6} parent=0 // pred_fallthru
    _
  %v17 = vld [vmem:[%s0] sm:$0xff]
  %v18 = vld [vmem:[%s0 + $0x8] sm:$0xff]
  %v19 = vld [vmem:[%s0 + $0x10] sm:$0xff]
  %v20 = vld [vmem:[%s0 + $0x18] sm:$0xff]
  %v21 = vld [vmem:[%s1] sm:$0xff]
  %v22 = vld [vmem:[%s1 + $0x8] sm:$0xff]
  %v23 = vld [vmem:[%s1 + $0x10] sm:$0xff]
  %v24 = vld [vmem:[%s1 + $0x18] sm:$0xf]
  %v25 = vld [vmem:[%s1 + $0x1c] sm:$0xff]
  %v26 = vld [vmem:[%s1 + $0x24] sm:$0xff]
  %v27 = vld [vmem:[%s1 + $0x2c] sm:$0xff]
  %v28 = vld [vmem:[%s1 + $0x34] sm:$0xf]
  %v29 = vld [vmem:[%s1 + $0x38] sm:$0xff]
  %v30 = vld [vmem:[%s1 + $0x40] sm:$0xff]
  %v31 = vld [vmem:[%s1 + $0x48] sm:$0xff]
  %v32 = vld [vmem:[%s1 + $0x50] sm:$0xf]
  %v33 = vld [vmem:[%s1 + $0x54] sm:$0xff]
  %v34 = vld [vmem:[%s1 + $0x5c] sm:$0xff]
  %v35 = vld [vmem:[%s1 + $0x64] sm:$0xff]
  %v36 = vld [vmem:[%s1 + $0x6c] sm:$0xf]
  %v37 = vld [vmem:[%s1 + $0x70] sm:$0xff]
  %v38 = vld [vmem:[%s1 + $0x78] sm:$0xff]
  %v39 = vld [vmem:[%s1 + $0x80] sm:$0xff]
  %v40 = vld [vmem:[%s1 + $0x88] sm:$0xf]
  %v41 = vld [vmem:[%s1 + $0x8c] sm:$0xff]
  %v42 = vld [vmem:[%s1 + $0x94] sm:$0xff]
  %v43 = vld [vmem:[%s1 + $0x9c] sm:$0xff]
  %v44 = vld [vmem:[%s1 + $0xa4] sm:$0xf]
  %v45 = vld [vmem:[%s1 + $0xa8] sm:$0xff]
  %v46 = vld [vmem:[%s1 + $0xb0] sm:$0xff]
  %v47 = vld [vmem:[%s1 + $0xb8] sm:$0xff]
  %v48 = vld [vmem:[%s1 + $0xc0] sm:$0xf]
  %v49 = vld [vmem:[%s1 + $0xc4] sm:$0xff]
  %v50 = vld [vmem:[%s1 + $0xcc] sm:$0xff]
  %v51 = vld [vmem:[%s1 + $0xd4] sm:$0xff]
  %v52 = vld [vmem:[%s1 + $0xdc] sm:$0xf]
  %v53 = vld [vmem:[%s1 + $0xe0] sm:$0xff]
  %v54 = vld [vmem:[%s1 + $0xe8] sm:$0xff]
  %v55 = vld [vmem:[%s1 + $0xf0] sm:$0xff]
  %v56 = vld [vmem:[%s1 + $0xf8] sm:$0xf]
  %v57 = vld [vmem:[%s1 + $0xfc] sm:$0xff]
  %v58 = vld [vmem:[%s1 + $0x104] sm:$0xff]
  %v59 = vld [vmem:[%s1 + $0x10c] sm:$0xff]
  %v60 = vld [vmem:[%s1 + $0x114] sm:$0xf]
  %v61 = vld [vmem:[%s1 + $0x118] sm:$0xff]
  %v62 = vld [vmem:[%s1 + $0x120] sm:$0xff]
  %v63 = vld [vmem:[%s1 + $0x128] sm:$0xff]
  %v64 = vld [vmem:[%s1 + $0x130] sm:$0xf]
  %v65 = vld [vmem:[%s1 + $0x134] sm:$0xff]
  %v66 = vld [vmem:[%s1 + $0x13c] sm:$0xff]
  %v67 = vld [vmem:[%s1 + $0x144] sm:$0xff]
  %v68 = vld [vmem:[%s1 + $0x14c] sm:$0xf]
  %v69 = vld [vmem:[%s1 + $0x150] sm:$0xff]
  %v70 = vld [vmem:[%s1 + $0x158] sm:$0xff]
  %v71 = vld [vmem:[%s1 + $0x160] sm:$0xff]
  %v72 = vld [vmem:[%s1 + $0x168] sm:$0xf]
  %v73 = vld [vmem:[%s1 + $0x16c] sm:$0xff]
  %v74 = vld [vmem:[%s1 + $0x174] sm:$0xff]
  %v75 = vld [vmem:[%s1 + $0x17c] sm:$0xff]
  %v76 = vld [vmem:[%s1 + $0x184] sm:$0xf]
  %v77 = vld [vmem:[%s1 + $0x188] sm:$0xff]
  %v78 = vld [vmem:[%s1 + $0x190] sm:$0xff]
  %v79 = vld [vmem:[%s1 + $0x198] sm:$0xff]
  %v80 = vld [vmem:[%s1 + $0x1a0] sm:$0xf]
  %v81 = vld [vmem:[%s1 + $0x1a4] sm:$0xff]
  %v82 = vld [vmem:[%s1 + $0x1ac] sm:$0xff]
  %v83 = vld [vmem:[%s1 + $0x1b4] sm:$0xff]
  %v84 = vld [vmem:[%s1 + $0x1bc] sm:$0xf]
  %v85 = vld [vmem:[%s1 + $0x1c0] sm:$0xff]
  %v86 = vld [vmem:[%s1 + $0x1c8] sm:$0xff]
  %v87 = vld [vmem:[%s1 + $0x1d0] sm:$0xff]
  %v88 = vld [vmem:[%s1 + $0x1d8] sm:$0xf]
  %v89 = vld [vmem:[%s1 + $0x1dc] sm:$0xff]
  %v90 = vld [vmem:[%s1 + $0x1e4] sm:$0xff]
  %v91 = vld [vmem:[%s1 + $0x1ec] sm:$0xff]
  %v92 = vld [vmem:[%s1 + $0x1f4] sm:$0xf]
  %v93 = vld [vmem:[%s1 + $0x1f8] sm:$0xff]
  %v94 = vld [vmem:[%s1 + $0x200] sm:$0xff]
  %v95 = vld [vmem:[%s1 + $0x208] sm:$0xff]
  %v96 = vld [vmem:[%s1 + $0x210] sm:$0xf]
  %v97 = vld [vmem:[%s1 + $0x214] sm:$0xff]
  %v98 = vld [vmem:[%s1 + $0x21c] sm:$0xff]
  %v99 = vld [vmem:[%s1 + $0x224] sm:$0xff]
  %v100 = vld [vmem:[%s1 + $0x22c] sm:$0xf]
  %v101 = vld [vmem:[%s1 + $0x230] sm:$0xff]
  %v102 = vld [vmem:[%s1 + $0x238] sm:$0xff]
  %v103 = vld [vmem:[%s1 + $0x240] sm:$0xff]
  %v104 = vld [vmem:[%s1 + $0x248] sm:$0xf]
  %v105 = vld [vmem:[%s1 + $0x24c] sm:$0xff]
  %v106 = vld [vmem:[%s1 + $0x254] sm:$0xff]
  %v107 = vld [vmem:[%s1 + $0x25c] sm:$0xff]
  %v108 = vld [vmem:[%s1 + $0x264] sm:$0xf]
  %v109 = vld [vmem:[%s1 + $0x268] sm:$0xff]
  %v110 = vld [vmem:[%s1 + $0x270] sm:$0xff]
  %v111 = vld [vmem:[%s1 + $0x278] sm:$0xff]
  %v112 = vld [vmem:[%s1 + $0x280] sm:$0xf]
  %v113 = vld [vmem:[%s1 + $0x284] sm:$0xff]
  %v114 = vld [vmem:[%s1 + $0x28c] sm:$0xff]
  %v115 = vld [vmem:[%s1 + $0x294] sm:$0xff]
  %v116 = vld [vmem:[%s1 + $0x29c] sm:$0xf]
  %v117 = vld [vmem:[%s1 + $0x2a0] sm:$0xff]
  %v118 = vld [vmem:[%s1 + $0x2a8] sm:$0xff]
  %v119 = vld [vmem:[%s1 + $0x2b0] sm:$0xff]
  %v120 = vld [vmem:[%s1 + $0x2b8] sm:$0xf]
  %v121 = vld [vmem:[%s1 + $0x2bc] sm:$0xff]
  %v122 = vld [vmem:[%s1 + $0x2c4] sm:$0xff]
  %v123 = vld [vmem:[%s1 + $0x2cc] sm:$0xff]
  %v124 = vld [vmem:[%s1 + $0x2d4] sm:$0xf]
  %v125 = vld [vmem:[%s1 + $0x2d8] sm:$0xff]
  %v126 = vld [vmem:[%s1 + $0x2e0] sm:$0xff]
  %v127 = vld [vmem:[%s1 + $0x2e8] sm:$0xff]
  %v128 = vld [vmem:[%s1 + $0x2f0] sm:$0xf]
  %v129 = vld [vmem:[%s1 + $0x2f4] sm:$0xff]
  %v130 = vld [vmem:[%s1 + $0x2fc] sm:$0xff]
  %v131 = vld [vmem:[%s1 + $0x304] sm:$0xff]
  %v132 = vld [vmem:[%s1 + $0x30c] sm:$0xf]
  %v133 = vld [vmem:[%s1 + $0x310] sm:$0xff]
  %v134 = vld [vmem:[%s1 + $0x318] sm:$0xff]
  %v135 = vld [vmem:[%s1 + $0x320] sm:$0xff]
  %v136 = vld [vmem:[%s1 + $0x328] sm:$0xf]
  %v137 = vld [vmem:[%s1 + $0x32c] sm:$0xff]
  %v138 = vld [vmem:[%s1 + $0x334] sm:$0xff]
  %v139 = vld [vmem:[%s1 + $0x33c] sm:$0xff]
  %v140 = vld [vmem:[%s1 + $0x344] sm:$0xf]
  %v141 = vld [vmem:[%s1 + $0x348] sm:$0xff]
  %v142 = vld [vmem:[%s1 + $0x350] sm:$0xff]
  %v143 = vld [vmem:[%s1 + $0x358] sm:$0xff]
  %v144 = vld [vmem:[%s1 + $0x360] sm:$0xf]
  %v145 = vld [vmem:[%s1 + $0x364] sm:$0xff]
  %v146 = vld [vmem:[%s1 + $0x36c] sm:$0xff]
  %v147 = vld [vmem:[%s1 + $0x374] sm:$0xff]
  %v148 = vld [vmem:[%s1 + $0x37c] sm:$0xf]
  %v153 = vunpack.c.l.b16 %v17
  %v154 = vunpack.c.h.b16 %v17
  %v155 = vunpack.c.l.b16 %v18
  %v156 = vunpack.c.h.b16 %v18
  %v157 = vunpack.c.l.b16 %v19
  %v158 = vunpack.c.h.b16 %v19
  %v159 = vunpack.c.l.b16 %v20
  %v160 = vunpack.c.h.b16 %v20
  %v161 = vpack.c.b16 %v155, %v153
  %v162 = vpack.c.b16 %v156, %v154
  %v163 = vpack.c.b16 %v159, %v157
  %v164 = vpack.c.b16 %v160, %v158
  %v297 = vunpack.c.l.b16 %v21
  %v298 = vunpack.c.h.b16 %v21
  %v299 = vunpack.c.l.b16 %v22
  %v300 = vunpack.c.h.b16 %v22
  %v301 = vunpack.c.l.b16 %v23
  %v302 = vunpack.c.h.b16 %v23
  %v303 = vunpack.c.l.b16 %v24
  %v304 = vunpack.c.l.b16 %v25
  %v305 = vunpack.c.h.b16 %v25
  %v306 = vunpack.c.l.b16 %v26
  %v307 = vunpack.c.h.b16 %v26
  %v308 = vunpack.c.l.b16 %v27
  %v309 = vunpack.c.h.b16 %v27
  %v310 = vunpack.c.l.b16 %v28
  %v311 = vunpack.c.l.b16 %v29
  %v312 = vunpack.c.h.b16 %v29
  %v313 = vunpack.c.l.b16 %v30
  %v314 = vunpack.c.h.b16 %v30
  %v315 = vunpack.c.l.b16 %v31
  %v316 = vunpack.c.h.b16 %v31
  %v317 = vunpack.c.l.b16 %v32
  %v318 = vunpack.c.l.b16 %v33
  %v319 = vunpack.c.h.b16 %v33
  %v320 = vunpack.c.l.b16 %v34
  %v321 = vunpack.c.h.b16 %v34
  %v322 = vunpack.c.l.b16 %v35
  %v323 = vunpack.c.h.b16 %v35
  %v324 = vunpack.c.l.b16 %v36
  %v325 = vunpack.c.l.b16 %v37
  %v326 = vunpack.c.h.b16 %v37
  %v327 = vunpack.c.l.b16 %v38
  %v328 = vunpack.c.h.b16 %v38
  %v329 = vunpack.c.l.b16 %v39
  %v330 = vunpack.c.h.b16 %v39
  %v331 = vunpack.c.l.b16 %v40
  %v332 = vunpack.c.l.b16 %v41
  %v333 = vunpack.c.h.b16 %v41
  %v334 = vunpack.c.l.b16 %v42
  %v335 = vunpack.c.h.b16 %v42
  %v336 = vunpack.c.l.b16 %v43
  %v337 = vunpack.c.h.b16 %v43
  %v338 = vunpack.c.l.b16 %v44
  %v339 = vunpack.c.l.b16 %v45
  %v340 = vunpack.c.h.b16 %v45
  %v341 = vunpack.c.l.b16 %v46
  %v342 = vunpack.c.h.b16 %v46
  %v343 = vunpack.c.l.b16 %v47
  %v344 = vunpack.c.h.b16 %v47
  %v345 = vunpack.c.l.b16 %v48
  %v346 = vunpack.c.l.b16 %v49
  %v347 = vunpack.c.h.b16 %v49
  %v348 = vunpack.c.l.b16 %v50
  %v349 = vunpack.c.h.b16 %v50
  %v350 = vunpack.c.l.b16 %v51
  %v351 = vunpack.c.h.b16 %v51
  %v352 = vunpack.c.l.b16 %v52
  %v353 = vunpack.c.l.b16 %v53
  %v354 = vunpack.c.h.b16 %v53
  %v355 = vunpack.c.l.b16 %v54
  %v356 = vunpack.c.h.b16 %v54
  %v357 = vunpack.c.l.b16 %v55
  %v358 = vunpack.c.h.b16 %v55
  %v359 = vunpack.c.l.b16 %v56
  %v360 = vunpack.c.l.b16 %v57
  %v361 = vunpack.c.h.b16 %v57
  %v362 = vunpack.c.l.b16 %v58
  %v363 = vunpack.c.h.b16 %v58
  %v364 = vunpack.c.l.b16 %v59
  %v365 = vunpack.c.h.b16 %v59
  %v366 = vunpack.c.l.b16 %v60
  %v367 = vunpack.c.l.b16 %v61
  %v368 = vunpack.c.h.b16 %v61
  %v369 = vunpack.c.l.b16 %v62
  %v370 = vunpack.c.h.b16 %v62
  %v371 = vunpack.c.l.b16 %v63
  %v372 = vunpack.c.h.b16 %v63
  %v373 = vunpack.c.l.b16 %v64
  %v374 = vunpack.c.l.b16 %v65
  %v375 = vunpack.c.h.b16 %v65
  %v376 = vunpack.c.l.b16 %v66
  %v377 = vunpack.c.h.b16 %v66
  %v378 = vunpack.c.l.b16 %v67
  %v379 = vunpack.c.h.b16 %v67
  %v380 = vunpack.c.l.b16 %v68
  %v381 = vunpack.c.l.b16 %v69
  %v382 = vunpack.c.h.b16 %v69
  %v383 = vunpack.c.l.b16 %v70
  %v384 = vunpack.c.h.b16 %v70
  %v385 = vunpack.c.l.b16 %v71
  %v386 = vunpack.c.h.b16 %v71
  %v387 = vunpack.c.l.b16 %v72
  %v388 = vunpack.c.l.b16 %v73
  %v389 = vunpack.c.h.b16 %v73
  %v390 = vunpack.c.l.b16 %v74
  %v391 = vunpack.c.h.b16 %v74
  %v392 = vunpack.c.l.b16 %v75
  %v393 = vunpack.c.h.b16 %v75
  %v394 = vunpack.c.l.b16 %v76
  %v395 = vunpack.c.l.b16 %v77
  %v396 = vunpack.c.h.b16 %v77
  %v397 = vunpack.c.l.b16 %v78
  %v398 = vunpack.c.h.b16 %v78
  %v399 = vunpack.c.l.b16 %v79
  %v400 = vunpack.c.h.b16 %v79
  %v401 = vunpack.c.l.b16 %v80
  %v402 = vunpack.c.l.b16 %v81
  %v403 = vunpack.c.h.b16 %v81
  %v404 = vunpack.c.l.b16 %v82
  %v405 = vunpack.c.h.b16 %v82
  %v406 = vunpack.c.l.b16 %v83
  %v407 = vunpack.c.h.b16 %v83
  %v408 = vunpack.c.l.b16 %v84
  %v409 = vunpack.c.l.b16 %v85
  %v410 = vunpack.c.h.b16 %v85
  %v411 = vunpack.c.l.b16 %v86
  %v412 = vunpack.c.h.b16 %v86
  %v413 = vunpack.c.l.b16 %v87
  %v414 = vunpack.c.h.b16 %v87
  %v415 = vunpack.c.l.b16 %v88
  %v416 = vunpack.c.l.b16 %v89
  %v417 = vunpack.c.h.b16 %v89
  %v418 = vunpack.c.l.b16 %v90
  %v419 = vunpack.c.h.b16 %v90
  %v420 = vunpack.c.l.b16 %v91
  %v421 = vunpack.c.h.b16 %v91
  %v422 = vunpack.c.l.b16 %v92
  %v423 = vunpack.c.l.b16 %v93
  %v424 = vunpack.c.h.b16 %v93
  %v425 = vunpack.c.l.b16 %v94
  %v426 = vunpack.c.h.b16 %v94
  %v427 = vunpack.c.l.b16 %v95
  %v428 = vunpack.c.h.b16 %v95
  %v429 = vunpack.c.l.b16 %v96
  %v430 = vunpack.c.l.b16 %v97
  %v431 = vunpack.c.h.b16 %v97
  %v432 = vunpack.c.l.b16 %v98
  %v433 = vunpack.c.h.b16 %v98
  %v434 = vunpack.c.l.b16 %v99
  %v435 = vunpack.c.h.b16 %v99
  %v436 = vunpack.c.l.b16 %v100
  %v437 = vunpack.c.l.b16 %v101
  %v438 = vunpack.c.h.b16 %v101
  %v439 = vunpack.c.l.b16 %v102
  %v440 = vunpack.c.h.b16 %v102
  %v441 = vunpack.c.l.b16 %v103
  %v442 = vunpack.c.h.b16 %v103
  %v443 = vunpack.c.l.b16 %v104
  %v444 = vunpack.c.l.b16 %v105
  %v445 = vunpack.c.h.b16 %v105
  %v446 = vunpack.c.l.b16 %v106
  %v447 = vunpack.c.h.b16 %v106
  %v448 = vunpack.c.l.b16 %v107
  %v449 = vunpack.c.h.b16 %v107
  %v450 = vunpack.c.l.b16 %v108
  %v451 = vunpack.c.l.b16 %v109
  %v452 = vunpack.c.h.b16 %v109
  %v453 = vunpack.c.l.b16 %v110
  %v454 = vunpack.c.h.b16 %v110
  %v455 = vunpack.c.l.b16 %v111
  %v456 = vunpack.c.h.b16 %v111
  %v457 = vunpack.c.l.b16 %v112
  %v458 = vunpack.c.l.b16 %v113
  %v459 = vunpack.c.h.b16 %v113
  %v460 = vunpack.c.l.b16 %v114
  %v461 = vunpack.c.h.b16 %v114
  %v462 = vunpack.c.l.b16 %v115
  %v463 = vunpack.c.h.b16 %v115
  %v464 = vunpack.c.l.b16 %v116
  %v465 = vunpack.c.l.b16 %v117
  %v466 = vunpack.c.h.b16 %v117
  %v467 = vunpack.c.l.b16 %v118
  %v468 = vunpack.c.h.b16 %v118
  %v469 = vunpack.c.l.b16 %v119
  %v470 = vunpack.c.h.b16 %v119
  %v471 = vunpack.c.l.b16 %v120
  %v472 = vunpack.c.l.b16 %v121
  %v473 = vunpack.c.h.b16 %v121
  %v474 = vunpack.c.l.b16 %v122
  %v475 = vunpack.c.h.b16 %v122
  %v476 = vunpack.c.l.b16 %v123
  %v477 = vunpack.c.h.b16 %v123
  %v478 = vunpack.c.l.b16 %v124
  %v479 = vunpack.c.l.b16 %v125
  %v480 = vunpack.c.h.b16 %v125
  %v481 = vunpack.c.l.b16 %v126
  %v482 = vunpack.c.h.b16 %v126
  %v483 = vunpack.c.l.b16 %v127
  %v484 = vunpack.c.h.b16 %v127
  %v485 = vunpack.c.l.b16 %v128
  %v486 = vunpack.c.l.b16 %v129
  %v487 = vunpack.c.h.b16 %v129
  %v488 = vunpack.c.l.b16 %v130
  %v489 = vunpack.c.h.b16 %v130
  %v490 = vunpack.c.l.b16 %v131
  %v491 = vunpack.c.h.b16 %v131
  %v492 = vunpack.c.l.b16 %v132
  %v493 = vunpack.c.l.b16 %v133
  %v494 = vunpack.c.h.b16 %v133
  %v495 = vunpack.c.l.b16 %v134
  %v496 = vunpack.c.h.b16 %v134
  %v497 = vunpack.c.l.b16 %v135
  %v498 = vunpack.c.h.b16 %v135
  %v499 = vunpack.c.l.b16 %v136
  %v500 = vunpack.c.l.b16 %v137
  %v501 = vunpack.c.h.b16 %v137
  %v502 = vunpack.c.l.b16 %v138
  %v503 = vunpack.c.h.b16 %v138
  %v504 = vunpack.c.l.b16 %v139
  %v505 = vunpack.c.h.b16 %v139
  %v506 = vunpack.c.l.b16 %v140
  %v507 = vunpack.c.l.b16 %v141
  %v508 = vunpack.c.h.b16 %v141
  %v509 = vunpack.c.l.b16 %v142
  %v510 = vunpack.c.h.b16 %v142
  %v511 = vunpack.c.l.b16 %v143
  %v512 = vunpack.c.h.b16 %v143
  %v513 = vunpack.c.l.b16 %v144
  %v514 = vunpack.c.l.b16 %v145
  %v515 = vunpack.c.h.b16 %v145
  %v516 = vunpack.c.l.b16 %v146
  %v517 = vunpack.c.h.b16 %v146
  %v518 = vunpack.c.l.b16 %v147
  %v519 = vunpack.c.h.b16 %v147
  %v520 = vunpack.c.l.b16 %v148
  %v521 = vpack.c.b16 %v304, %v297
  %v522 = vpack.c.b16 %v305, %v298
  %v523 = vpack.c.b16 %v306, %v299
  %v524 = vpack.c.b16 %v307, %v300
  %v525 = vpack.c.b16 %v308, %v301
  %v526 = vpack.c.b16 %v309, %v302
  %v527 = vpack.c.b16 %v310, %v303
  %v528 = vpack.c.b16 %v318, %v311
  %v529 = vpack.c.b16 %v319, %v312
  %v530 = vpack.c.b16 %v320, %v313
  %v531 = vpack.c.b16 %v321, %v314
  %v532 = vpack.c.b16 %v322, %v315
  %v533 = vpack.c.b16 %v323, %v316
  %v534 = vpack.c.b16 %v324, %v317
  %v535 = vpack.c.b16 %v332, %v325
  %v536 = vpack.c.b16 %v333, %v326
  %v537 = vpack.c.b16 %v334, %v327
  %v538 = vpack.c.b16 %v335, %v328
  %v539 = vpack.c.b16 %v336, %v329
  %v540 = vpack.c.b16 %v337, %v330
  %v541 = vpack.c.b16 %v338, %v331
  %v542 = vpack.c.b16 %v346, %v339
  %v543 = vpack.c.b16 %v347, %v340
  %v544 = vpack.c.b16 %v348, %v341
  %v545 = vpack.c.b16 %v349, %v342
  %v546 = vpack.c.b16 %v350, %v343
  %v547 = vpack.c.b16 %v351, %v344
  %v548 = vpack.c.b16 %v352, %v345
  %v549 = vpack.c.b16 %v360, %v353
  %v550 = vpack.c.b16 %v361, %v354
  %v551 = vpack.c.b16 %v362, %v355
  %v552 = vpack.c.b16 %v363, %v356
  %v553 = vpack.c.b16 %v364, %v357
  %v554 = vpack.c.b16 %v365, %v358
  %v555 = vpack.c.b16 %v366, %v359
  %v556 = vpack.c.b16 %v374, %v367
  %v557 = vpack.c.b16 %v375, %v368
  %v558 = vpack.c.b16 %v376, %v369
  %v559 = vpack.c.b16 %v377, %v370
  %v560 = vpack.c.b16 %v378, %v371
  %v561 = vpack.c.b16 %v379, %v372
  %v562 = vpack.c.b16 %v380, %v373
  %v563 = vpack.c.b16 %v388, %v381
  %v564 = vpack.c.b16 %v389, %v382
  %v565 = vpack.c.b16 %v390, %v383
  %v566 = vpack.c.b16 %v391, %v384
  %v567 = vpack.c.b16 %v392, %v385
  %v568 = vpack.c.b16 %v393, %v386
  %v569 = vpack.c.b16 %v394, %v387
  %v570 = vpack.c.b16 %v402, %v395
  %v571 = vpack.c.b16 %v403, %v396
  %v572 = vpack.c.b16 %v404, %v397
  %v573 = vpack.c.b16 %v405, %v398
  %v574 = vpack.c.b16 %v406, %v399
  %v575 = vpack.c.b16 %v407, %v400
  %v576 = vpack.c.b16 %v408, %v401
  %v577 = vpack.c.b16 %v416, %v409
  %v578 = vpack.c.b16 %v417, %v410
  %v579 = vpack.c.b16 %v418, %v411
  %v580 = vpack.c.b16 %v419, %v412
  %v581 = vpack.c.b16 %v420, %v413
  %v582 = vpack.c.b16 %v421, %v414
  %v583 = vpack.c.b16 %v422, %v415
  %v584 = vpack.c.b16 %v430, %v423
  %v585 = vpack.c.b16 %v431, %v424
  %v586 = vpack.c.b16 %v432, %v425
  %v587 = vpack.c.b16 %v433, %v426
  %v588 = vpack.c.b16 %v434, %v427
  %v589 = vpack.c.b16 %v435, %v428
  %v590 = vpack.c.b16 %v436, %v429
  %v591 = vpack.c.b16 %v444, %v437
  %v592 = vpack.c.b16 %v445, %v438
  %v593 = vpack.c.b16 %v446, %v439
  %v594 = vpack.c.b16 %v447, %v440
  %v595 = vpack.c.b16 %v448, %v441
  %v596 = vpack.c.b16 %v449, %v442
  %v597 = vpack.c.b16 %v450, %v443
  %v598 = vpack.c.b16 %v458, %v451
  %v599 = vpack.c.b16 %v459, %v452
  %v600 = vpack.c.b16 %v460, %v453
  %v601 = vpack.c.b16 %v461, %v454
  %v602 = vpack.c.b16 %v462, %v455
  %v603 = vpack.c.b16 %v463, %v456
  %v604 = vpack.c.b16 %v464, %v457
  %v605 = vpack.c.b16 %v472, %v465
  %v606 = vpack.c.b16 %v473, %v466
  %v607 = vpack.c.b16 %v474, %v467
  %v608 = vpack.c.b16 %v475, %v468
  %v609 = vpack.c.b16 %v476, %v469
  %v610 = vpack.c.b16 %v477, %v470
  %v611 = vpack.c.b16 %v478, %v471
  %v612 = vpack.c.b16 %v486, %v479
  %v613 = vpack.c.b16 %v487, %v480
  %v614 = vpack.c.b16 %v488, %v481
  %v615 = vpack.c.b16 %v489, %v482
  %v616 = vpack.c.b16 %v490, %v483
  %v617 = vpack.c.b16 %v491, %v484
  %v618 = vpack.c.b16 %v492, %v485
  %v619 = vpack.c.b16 %v500, %v493
  %v620 = vpack.c.b16 %v501, %v494
  %v621 = vpack.c.b16 %v502, %v495
  %v622 = vpack.c.b16 %v503, %v496
  %v623 = vpack.c.b16 %v504, %v497
  %v624 = vpack.c.b16 %v505, %v498
  %v625 = vpack.c.b16 %v506, %v499
  %v626 = vpack.c.b16 %v514, %v507
  %v627 = vpack.c.b16 %v515, %v508
  %v628 = vpack.c.b16 %v516, %v509
  %v629 = vpack.c.b16 %v517, %v510
  %v630 = vpack.c.b16 %v518, %v511
  %v631 = vpack.c.b16 %v519, %v512
  %v632 = vpack.c.b16 %v520, %v513
  %745 = vmatpush.bf16.msra.mxu0 %v570
  %746 = vmatpush.bf16.msra.mxu0 %v563
  %747 = vmatpush.bf16.msra.mxu0 %v556
  %748 = vmatpush.bf16.msra.mxu0 %v549
  %749 = vmatpush.bf16.msra.mxu0 %v542
  %750 = vmatpush.bf16.msra.mxu0 %v535
  %751 = vmatpush.bf16.msra.mxu0 %v528
  %752 = vmatpush.bf16.msra.mxu0 %v521
  %753 = vmatmul.bf16.gmra.mxu0 %v161
  %v754 = vpop.f32.mrf.mxu0
  %v755 = vadd.f32 0.0, %v754
  %v756 = vpop.f32.mrf.mxu0
  %v757 = vadd.f32 0.0, %v756
  %758 = vmatmul.bf16.gmra.mxu0 %v163
  %v759 = vpop.f32.mrf.mxu0
  %v760 = vadd.f32 0.0, %v759
  %v761 = vpop.f32.mrf.mxu0
  %v762 = vadd.f32 0.0, %v761
  %763 = vdwg.mxu0
  %764 = vmatpush.bf16.msra.mxu0 %v626
  %765 = vmatpush.bf16.msra.mxu0 %v619
  %766 = vmatpush.bf16.msra.mxu0 %v612
  %767 = vmatpush.bf16.msra.mxu0 %v605
  %768 = vmatpush.bf16.msra.mxu0 %v598
  %769 = vmatpush.bf16.msra.mxu0 %v591
  %770 = vmatpush.bf16.msra.mxu0 %v584
  %771 = vmatpush.bf16.msra.mxu0 %v577
  %772 = vmatmul.bf16.gmra.mxu0 %v162
  %v773 = vpop.f32.mrf.mxu0
  %v774 = vadd.f32 %v755, %v773
  %v775 = vpop.f32.mrf.mxu0
  %v776 = vadd.f32 %v757, %v775
  %777 = vmatmul.bf16.gmra.mxu0 %v164
  %v778 = vpop.f32.mrf.mxu0
  %v779 = vadd.f32 %v760, %v778
  %v780 = vpop.f32.mrf.mxu0
  %v781 = vadd.f32 %v762, %v780
  %782 = vdwg.mxu0
  %783 = vmatpush.bf16.msra.mxu0 %v571
  %784 = vmatpush.bf16.msra.mxu0 %v564
  %785 = vmatpush.bf16.msra.mxu0 %v557
  %786 = vmatpush.bf16.msra.mxu0 %v550
  %787 = vmatpush.bf16.msra.mxu0 %v543
  %788 = vmatpush.bf16.msra.mxu0 %v536
  %789 = vmatpush.bf16.msra.mxu0 %v529
  %790 = vmatpush.bf16.msra.mxu0 %v522
  %791 = vmatmul.bf16.gmra.mxu0 %v161
  %v792 = vpop.f32.mrf.mxu0
  %v793 = vadd.f32 0.0, %v792
  %v794 = vpop.f32.mrf.mxu0
  %v795 = vadd.f32 0.0, %v794
  %796 = vmatmul.bf16.gmra.mxu0 %v163
  %v797 = vpop.f32.mrf.mxu0
  %v798 = vadd.f32 0.0, %v797
  %v799 = vpop.f32.mrf.mxu0
  %v800 = vadd.f32 0.0, %v799
  %801 = vdwg.mxu0
  %802 = vmatpush.bf16.msra.mxu0 %v627
  %803 = vmatpush.bf16.msra.mxu0 %v620
  %804 = vmatpush.bf16.msra.mxu0 %v613
  %805 = vmatpush.bf16.msra.mxu0 %v606
  %806 = vmatpush.bf16.msra.mxu0 %v599
  %807 = vmatpush.bf16.msra.mxu0 %v592
  %808 = vmatpush.bf16.msra.mxu0 %v585
  %809 = vmatpush.bf16.msra.mxu0 %v578
  %810 = vmatmul.bf16.gmra.mxu0 %v162
  %v811 = vpop.f32.mrf.mxu0
  %v812 = vadd.f32 %v793, %v811
  %v813 = vpop.f32.mrf.mxu0
  %v814 = vadd.f32 %v795, %v813
  %815 = vmatmul.bf16.gmra.mxu0 %v164
  %v816 = vpop.f32.mrf.mxu0
  %v817 = vadd.f32 %v798, %v816
  %v818 = vpop.f32.mrf.mxu0
  %v819 = vadd.f32 %v800, %v818
  %820 = vdwg.mxu0
  %821 = vmatpush.bf16.msra.mxu0 %v572
  %822 = vmatpush.bf16.msra.mxu0 %v565
  %823 = vmatpush.bf16.msra.mxu0 %v558
  %824 = vmatpush.bf16.msra.mxu0 %v551
  %825 = vmatpush.bf16.msra.mxu0 %v544
  %826 = vmatpush.bf16.msra.mxu0 %v537
  %827 = vmatpush.bf16.msra.mxu0 %v530
  %828 = vmatpush.bf16.msra.mxu0 %v523
  %829 = vmatmul.bf16.gmra.mxu0 %v161
  %v830 = vpop.f32.mrf.mxu0
  %v831 = vadd.f32 0.0, %v830
  %v832 = vpop.f32.mrf.mxu0
  %v833 = vadd.f32 0.0, %v832
  %834 = vmatmul.bf16.gmra.mxu0 %v163
  %v835 = vpop.f32.mrf.mxu0
  %v836 = vadd.f32 0.0, %v835
  %v837 = vpop.f32.mrf.mxu0
  %v838 = vadd.f32 0.0, %v837
  %839 = vdwg.mxu0
  %840 = vmatpush.bf16.msra.mxu0 %v628
  %841 = vmatpush.bf16.msra.mxu0 %v621
  %842 = vmatpush.bf16.msra.mxu0 %v614
  %843 = vmatpush.bf16.msra.mxu0 %v607
  %844 = vmatpush.bf16.msra.mxu0 %v600
  %845 = vmatpush.bf16.msra.mxu0 %v593
  %846 = vmatpush.bf16.msra.mxu0 %v586
  %847 = vmatpush.bf16.msra.mxu0 %v579
  %848 = vmatmul.bf16.gmra.mxu0 %v162
  %v849 = vpop.f32.mrf.mxu0
  %v850 = vadd.f32 %v831, %v849
  %v851 = vpop.f32.mrf.mxu0
  %v852 = vadd.f32 %v833, %v851
  %853 = vmatmul.bf16.gmra.mxu0 %v164
  %v854 = vpop.f32.mrf.mxu0
  %v855 = vadd.f32 %v836, %v854
  %v856 = vpop.f32.mrf.mxu0
  %v857 = vadd.f32 %v838, %v856
  %858 = vdwg.mxu0
  %859 = vmatpush.bf16.msra.mxu0 %v573
  %860 = vmatpush.bf16.msra.mxu0 %v566
  %861 = vmatpush.bf16.msra.mxu0 %v559
  %862 = vmatpush.bf16.msra.mxu0 %v552
  %863 = vmatpush.bf16.msra.mxu0 %v545
  %864 = vmatpush.bf16.msra.mxu0 %v538
  %865 = vmatpush.bf16.msra.mxu0 %v531
  %866 = vmatpush.bf16.msra.mxu0 %v524
  %867 = vmatmul.bf16.gmra.mxu0 %v161
  %v868 = vpop.f32.mrf.mxu0
  %v869 = vadd.f32 0.0, %v868
  %v870 = vpop.f32.mrf.mxu0
  %v871 = vadd.f32 0.0, %v870
  %872 = vmatmul.bf16.gmra.mxu0 %v163
  %v873 = vpop.f32.mrf.mxu0
  %v874 = vadd.f32 0.0, %v873
  %v875 = vpop.f32.mrf.mxu0
  %v876 = vadd.f32 0.0, %v875
  %877 = vdwg.mxu0
  %878 = vmatpush.bf16.msra.mxu0 %v629
  %879 = vmatpush.bf16.msra.mxu0 %v622
  %880 = vmatpush.bf16.msra.mxu0 %v615
  %881 = vmatpush.bf16.msra.mxu0 %v608
  %882 = vmatpush.bf16.msra.mxu0 %v601
  %883 = vmatpush.bf16.msra.mxu0 %v594
  %884 = vmatpush.bf16.msra.mxu0 %v587
  %885 = vmatpush.bf16.msra.mxu0 %v580
  %886 = vmatmul.bf16.gmra.mxu0 %v162
  %v887 = vpop.f32.mrf.mxu0
  %v888 = vadd.f32 %v869, %v887
  %v889 = vpop.f32.mrf.mxu0
  %v890 = vadd.f32 %v871, %v889
  %891 = vmatmul.bf16.gmra.mxu0 %v164
  %v892 = vpop.f32.mrf.mxu0
  %v893 = vadd.f32 %v874, %v892
  %v894 = vpop.f32.mrf.mxu0
  %v895 = vadd.f32 %v876, %v894
  %896 = vdwg.mxu0
  %897 = vmatpush.bf16.msra.mxu0 %v574
  %898 = vmatpush.bf16.msra.mxu0 %v567
  %899 = vmatpush.bf16.msra.mxu0 %v560
  %900 = vmatpush.bf16.msra.mxu0 %v553
  %901 = vmatpush.bf16.msra.mxu0 %v546
  %902 = vmatpush.bf16.msra.mxu0 %v539
  %903 = vmatpush.bf16.msra.mxu0 %v532
  %904 = vmatpush.bf16.msra.mxu0 %v525
  %905 = vmatmul.bf16.gmra.mxu0 %v161
  %v906 = vpop.f32.mrf.mxu0
  %v907 = vadd.f32 0.0, %v906
  %v908 = vpop.f32.mrf.mxu0
  %v909 = vadd.f32 0.0, %v908
  %910 = vmatmul.bf16.gmra.mxu0 %v163
  %v911 = vpop.f32.mrf.mxu0
  %v912 = vadd.f32 0.0, %v911
  %v913 = vpop.f32.mrf.mxu0
  %v914 = vadd.f32 0.0, %v913
  %915 = vdwg.mxu0
  %916 = vmatpush.bf16.msra.mxu0 %v630
  %917 = vmatpush.bf16.msra.mxu0 %v623
  %918 = vmatpush.bf16.msra.mxu0 %v616
  %919 = vmatpush.bf16.msra.mxu0 %v609
  %920 = vmatpush.bf16.msra.mxu0 %v602
  %921 = vmatpush.bf16.msra.mxu0 %v595
  %922 = vmatpush.bf16.msra.mxu0 %v588
  %923 = vmatpush.bf16.msra.mxu0 %v581
  %924 = vmatmul.bf16.gmra.mxu0 %v162
  %v925 = vpop.f32.mrf.mxu0
  %v926 = vadd.f32 %v907, %v925
  %v927 = vpop.f32.mrf.mxu0
  %v928 = vadd.f32 %v909, %v927
  %929 = vmatmul.bf16.gmra.mxu0 %v164
  %v930 = vpop.f32.mrf.mxu0
  %v931 = vadd.f32 %v912, %v930
  %v932 = vpop.f32.mrf.mxu0
  %v933 = vadd.f32 %v914, %v932
  %934 = vdwg.mxu0
  %935 = vmatpush.bf16.msra.mxu0 %v575
  %936 = vmatpush.bf16.msra.mxu0 %v568
  %937 = vmatpush.bf16.msra.mxu0 %v561
  %938 = vmatpush.bf16.msra.mxu0 %v554
  %939 = vmatpush.bf16.msra.mxu0 %v547
  %940 = vmatpush.bf16.msra.mxu0 %v540
  %941 = vmatpush.bf16.msra.mxu0 %v533
  %942 = vmatpush.bf16.msra.mxu0 %v526
  %943 = vmatmul.bf16.gmra.mxu0 %v161
  %v944 = vpop.f32.mrf.mxu0
  %v945 = vadd.f32 0.0, %v944
  %v946 = vpop.f32.mrf.mxu0
  %v947 = vadd.f32 0.0, %v946
  %948 = vmatmul.bf16.gmra.mxu0 %v163
  %v949 = vpop.f32.mrf.mxu0
  %v950 = vadd.f32 0.0, %v949
  %v951 = vpop.f32.mrf.mxu0
  %v952 = vadd.f32 0.0, %v951
  %953 = vdwg.mxu0
  %954 = vmatpush.bf16.msra.mxu0 %v631
  %955 = vmatpush.bf16.msra.mxu0 %v624
  %956 = vmatpush.bf16.msra.mxu0 %v617
  %957 = vmatpush.bf16.msra.mxu0 %v610
  %958 = vmatpush.bf16.msra.mxu0 %v603
  %959 = vmatpush.bf16.msra.mxu0 %v596
  %960 = vmatpush.bf16.msra.mxu0 %v589
  %961 = vmatpush.bf16.msra.mxu0 %v582
  %962 = vmatmul.bf16.gmra.mxu0 %v162
  %v963 = vpop.f32.mrf.mxu0
  %v964 = vadd.f32 %v945, %v963
  %v965 = vpop.f32.mrf.mxu0
  %v966 = vadd.f32 %v947, %v965
  %967 = vmatmul.bf16.gmra.mxu0 %v164
  %v968 = vpop.f32.mrf.mxu0
  %v969 = vadd.f32 %v950, %v968
  %v970 = vpop.f32.mrf.mxu0
  %v971 = vadd.f32 %v952, %v970
  %972 = vdwg.mxu0
  %973 = vmatpush.bf16.msra.mxu0 %v576
  %974 = vmatpush.bf16.msra.mxu0 %v569
  %975 = vmatpush.bf16.msra.mxu0 %v562
  %976 = vmatpush.bf16.msra.mxu0 %v555
  %977 = vmatpush.bf16.msra.mxu0 %v548
  %978 = vmatpush.bf16.msra.mxu0 %v541
  %979 = vmatpush.bf16.msra.mxu0 %v534
  %980 = vmatpush.bf16.msra.mxu0 %v527
  %981 = vmatmul.bf16.gmra.mxu0 %v161
  %v982 = vpop.f32.mrf.mxu0
  %v983 = vadd.f32 0.0, %v982
  %v984 = vpop.f32.mrf.mxu0
  %v985 = vadd.f32 0.0, %v984
  %986 = vmatmul.bf16.gmra.mxu0 %v163
  %v987 = vpop.f32.mrf.mxu0
  %v988 = vadd.f32 0.0, %v987
  %v989 = vpop.f32.mrf.mxu0
  %v990 = vadd.f32 0.0, %v989
  %991 = vdwg.mxu0
  %992 = vmatpush.bf16.msra.mxu0 %v632
  %993 = vmatpush.bf16.msra.mxu0 %v625
  %994 = vmatpush.bf16.msra.mxu0 %v618
  %995 = vmatpush.bf16.msra.mxu0 %v611
  %996 = vmatpush.bf16.msra.mxu0 %v604
  %997 = vmatpush.bf16.msra.mxu0 %v597
  %998 = vmatpush.bf16.msra.mxu0 %v590
  %999 = vmatpush.bf16.msra.mxu0 %v583
  %1000 = vmatmul.bf16.gmra.mxu0 %v162
  %v1001 = vpop.f32.mrf.mxu0
  %v1002 = vadd.f32 %v983, %v1001
  %v1003 = vpop.f32.mrf.mxu0
  %v1004 = vadd.f32 %v985, %v1003
  %1005 = vmatmul.bf16.gmra.mxu0 %v164
  %v1006 = vpop.f32.mrf.mxu0
  %v1007 = vadd.f32 %v988, %v1006
  %v1008 = vpop.f32.mrf.mxu0
  %v1009 = vadd.f32 %v990, %v1008
  %1010 = vdwg.mxu0
  %v1011 = vadd.f32 %v774, %v812
  %v1012 = vadd.f32 %v1011, %v850
  %v1013 = vadd.f32 %v1012, %v888
  %v1014 = vadd.f32 %v1013, %v926
  %v1015 = vadd.f32 %v1014, %v964
  %vm1016 = vcmask 261120
  %v1017 = vsel %vm1016, %v1002, 0.0
  %v1018 = vadd.f32 %v1015, %v1017
  %1019 = vadd.xlane.f32.xlu0 %v1018
  %v1020 = vpop.xlane.xlu0 %1019
  %v1021 = vadd.f32 %v776, %v814
  %v1022 = vadd.f32 %v1021, %v852
  %v1023 = vadd.f32 %v1022, %v890
  %v1024 = vadd.f32 %v1023, %v928
  %v1025 = vadd.f32 %v1024, %v966
  %v1026 = vsel %vm1016, %v1004, 0.0
  %v1027 = vadd.f32 %v1025, %v1026
  %1028 = vadd.xlane.f32.xlu0 %v1027
  %v1029 = vpop.xlane.xlu0 %1028
  %v1030 = vadd.f32 %v779, %v817
  %v1031 = vadd.f32 %v1030, %v855
  %v1032 = vadd.f32 %v1031, %v893
  %v1033 = vadd.f32 %v1032, %v931
  %v1034 = vadd.f32 %v1033, %v969
  %v1035 = vsel %vm1016, %v1007, 0.0
  %v1036 = vadd.f32 %v1034, %v1035
  %1037 = vadd.xlane.f32.xlu0 %v1036
  %v1038 = vpop.xlane.xlu0 %1037
  %v1039 = vadd.f32 %v781, %v819
  %v1040 = vadd.f32 %v1039, %v857
  %v1041 = vadd.f32 %v1040, %v895
  %v1042 = vadd.f32 %v1041, %v933
  %v1043 = vadd.f32 %v1042, %v971
  %v1044 = vsel %vm1016, %v1009, 0.0
  %v1045 = vadd.f32 %v1043, %v1044
  %1046 = vadd.xlane.f32.xlu0 %v1045
  %v1047 = vpop.xlane.xlu0 %1046
  %v1048 = vrcp.pop 800.0
  %v1049 = vmul.f32 800.0, %v1048
  %v1050 = vsub.f32 1.0, %v1049
  %v1051 = vmul.f32 %v1048, %v1050
  %v1052 = vadd.f32 %v1048, %v1051
  %vm1053 = vweird.f32 %v1048
  %v1054 = vsel %vm1053, %v1048, %v1052
  %v1055 = vmul.f32 %v1020, %v1054
  %v1056 = vmul.f32 %v1029, %v1054
  %v1057 = vmul.f32 %v1038, %v1054
  %v1058 = vmul.f32 %v1047, %v1054
  %v1059 = vsub.f32 %v774, %v1055
  %v1060 = vsub.f32 %v812, %v1055
  %v1061 = vsub.f32 %v850, %v1055
  %v1062 = vsub.f32 %v888, %v1055
  %v1063 = vsub.f32 %v926, %v1055
  %v1064 = vsub.f32 %v964, %v1055
  %v1065 = vsub.f32 %v1002, %v1055
  %v1066 = vsub.f32 %v776, %v1056
  %v1067 = vsub.f32 %v814, %v1056
  %v1068 = vsub.f32 %v852, %v1056
  %v1069 = vsub.f32 %v890, %v1056
  %v1070 = vsub.f32 %v928, %v1056
  %v1071 = vsub.f32 %v966, %v1056
  %v1072 = vsub.f32 %v1004, %v1056
  %v1073 = vsub.f32 %v779, %v1057
  %v1074 = vsub.f32 %v817, %v1057
  %v1075 = vsub.f32 %v855, %v1057
  %v1076 = vsub.f32 %v893, %v1057
  %v1077 = vsub.f32 %v931, %v1057
  %v1078 = vsub.f32 %v969, %v1057
  %v1079 = vsub.f32 %v1007, %v1057
  %v1080 = vsub.f32 %v781, %v1058
  %v1081 = vsub.f32 %v819, %v1058
  %v1082 = vsub.f32 %v857, %v1058
  %v1083 = vsub.f32 %v895, %v1058
  %v1084 = vsub.f32 %v933, %v1058
  %v1085 = vsub.f32 %v971, %v1058
  %v1086 = vsub.f32 %v1009, %v1058
  %v1087 = vmul.f32 %v1059, %v1059
  %v1088 = vmul.f32 %v1060, %v1060
  %v1089 = vmul.f32 %v1061, %v1061
  %v1090 = vmul.f32 %v1062, %v1062
  %v1091 = vmul.f32 %v1063, %v1063
  %v1092 = vmul.f32 %v1064, %v1064
  %v1093 = vmul.f32 %v1065, %v1065
  %v1094 = vmul.f32 %v1066, %v1066
  %v1095 = vmul.f32 %v1067, %v1067
  %v1096 = vmul.f32 %v1068, %v1068
  %v1097 = vmul.f32 %v1069, %v1069
  %v1098 = vmul.f32 %v1070, %v1070
  %v1099 = vmul.f32 %v1071, %v1071
  %v1100 = vmul.f32 %v1072, %v1072
  %v1101 = vmul.f32 %v1073, %v1073
  %v1102 = vmul.f32 %v1074, %v1074
  %v1103 = vmul.f32 %v1075, %v1075
  %v1104 = vmul.f32 %v1076, %v1076
  %v1105 = vmul.f32 %v1077, %v1077
  %v1106 = vmul.f32 %v1078, %v1078
  %v1107 = vmul.f32 %v1079, %v1079
  %v1108 = vmul.f32 %v1080, %v1080
  %v1109 = vmul.f32 %v1081, %v1081
  %v1110 = vmul.f32 %v1082, %v1082
  %v1111 = vmul.f32 %v1083, %v1083
  %v1112 = vmul.f32 %v1084, %v1084
  %v1113 = vmul.f32 %v1085, %v1085
  %v1114 = vmul.f32 %v1086, %v1086
  %v1115 = vadd.f32 %v1087, %v1088
  %v1116 = vadd.f32 %v1115, %v1089
  %v1117 = vadd.f32 %v1116, %v1090
  %v1118 = vadd.f32 %v1117, %v1091
  %v1119 = vadd.f32 %v1118, %v1092
  %v1120 = vsel %vm1016, %v1093, 0.0
  %v1121 = vadd.f32 %v1119, %v1120
  %1122 = vadd.xlane.f32.xlu0 %v1121
  %v1123 = vpop.xlane.xlu0 %1122
  %v1124 = vadd.f32 %v1094, %v1095
  %v1125 = vadd.f32 %v1124, %v1096
  %v1126 = vadd.f32 %v1125, %v1097
  %v1127 = vadd.f32 %v1126, %v1098
  %v1128 = vadd.f32 %v1127, %v1099
  %v1129 = vsel %vm1016, %v1100, 0.0
  %v1130 = vadd.f32 %v1128, %v1129
  %1131 = vadd.xlane.f32.xlu0 %v1130
  %v1132 = vpop.xlane.xlu0 %1131
  %v1133 = vadd.f32 %v1101, %v1102
  %v1134 = vadd.f32 %v1133, %v1103
  %v1135 = vadd.f32 %v1134, %v1104
  %v1136 = vadd.f32 %v1135, %v1105
  %v1137 = vadd.f32 %v1136, %v1106
  %v1138 = vsel %vm1016, %v1107, 0.0
  %v1139 = vadd.f32 %v1137, %v1138
  %1140 = vadd.xlane.f32.xlu0 %v1139
  %v1141 = vpop.xlane.xlu0 %1140
  %v1142 = vadd.f32 %v1108, %v1109
  %v1143 = vadd.f32 %v1142, %v1110
  %v1144 = vadd.f32 %v1143, %v1111
  %v1145 = vadd.f32 %v1144, %v1112
  %v1146 = vadd.f32 %v1145, %v1113
  %v1147 = vsel %vm1016, %v1114, 0.0
  %v1148 = vadd.f32 %v1146, %v1147
  %1149 = vadd.xlane.f32.xlu0 %v1148
  %v1150 = vpop.xlane.xlu0 %1149
  %v1151 = vmul.f32 %v1123, %v1054
  %v1152 = vmul.f32 %v1132, %v1054
  %v1153 = vmul.f32 %v1141, %v1054
  %v1154 = vmul.f32 %v1150, %v1054
  %v1155 = vadd.f32 %v1151, 1e-05
  %v1156 = vadd.f32 %v1152, 1e-05
  %v1157 = vadd.f32 %v1153, 1e-05
  %v1158 = vadd.f32 %v1154, 1e-05
  %v1159 = vrsqrt.pop %v1155
  %v1160 = vmul.f32 %v1159, %v1155
  %v1161 = vmul.f32 %v1160, %v1159
  %v1162 = vmul.f32 0.5, %v1161
  %v1163 = vsub.f32 1.5, %v1162
  %v1164 = vmul.f32 %v1159, %v1163
  %vm1165 = vweird.f32 %v1155
  %vm1166 = vweird.f32 %v1159
  %vm1167 = vmor %vm1165, %vm1166
  %v1168 = vsel %vm1167, %v1159, %v1164
  %v1169 = vrsqrt.pop %v1156
  %v1170 = vmul.f32 %v1169, %v1156
  %v1171 = vmul.f32 %v1170, %v1169
  %v1172 = vmul.f32 0.5, %v1171
  %v1173 = vsub.f32 1.5, %v1172
  %v1174 = vmul.f32 %v1169, %v1173
  %vm1175 = vweird.f32 %v1156
  %vm1176 = vweird.f32 %v1169
  %vm1177 = vmor %vm1175, %vm1176
  %v1178 = vsel %vm1177, %v1169, %v1174
  %v1179 = vrsqrt.pop %v1157
  %v1180 = vmul.f32 %v1179, %v1157
  %v1181 = vmul.f32 %v1180, %v1179
  %v1182 = vmul.f32 0.5, %v1181
  %v1183 = vsub.f32 1.5, %v1182
  %v1184 = vmul.f32 %v1179, %v1183
  %vm1185 = vweird.f32 %v1157
  %vm1186 = vweird.f32 %v1179
  %vm1187 = vmor %vm1185, %vm1186
  %v1188 = vsel %vm1187, %v1179, %v1184
  %v1189 = vrsqrt.pop %v1158
  %v1190 = vmul.f32 %v1189, %v1158
  %v1191 = vmul.f32 %v1190, %v1189
  %v1192 = vmul.f32 0.5, %v1191
  %v1193 = vsub.f32 1.5, %v1192
  %v1194 = vmul.f32 %v1189, %v1193
  %vm1195 = vweird.f32 %v1158
  %vm1196 = vweird.f32 %v1189
  %vm1197 = vmor %vm1195, %vm1196
  %v1198 = vsel %vm1197, %v1189, %v1194
  %v1199 = vmul.f32 %v1059, %v1168
  %v1200 = vmul.f32 %v1060, %v1168
  %v1201 = vmul.f32 %v1061, %v1168
  %v1202 = vmul.f32 %v1062, %v1168
  %v1203 = vmul.f32 %v1063, %v1168
  %v1204 = vmul.f32 %v1064, %v1168
  %v1205 = vmul.f32 %v1065, %v1168
  %v1206 = vmul.f32 %v1066, %v1178
  %v1207 = vmul.f32 %v1067, %v1178
  %v1208 = vmul.f32 %v1068, %v1178
  %v1209 = vmul.f32 %v1069, %v1178
  %v1210 = vmul.f32 %v1070, %v1178
  %v1211 = vmul.f32 %v1071, %v1178
  %v1212 = vmul.f32 %v1072, %v1178
  %v1213 = vmul.f32 %v1073, %v1188
  %v1214 = vmul.f32 %v1074, %v1188
  %v1215 = vmul.f32 %v1075, %v1188
  %v1216 = vmul.f32 %v1076, %v1188
  %v1217 = vmul.f32 %v1077, %v1188
  %v1218 = vmul.f32 %v1078, %v1188
  %v1219 = vmul.f32 %v1079, %v1188
  %v1220 = vmul.f32 %v1080, %v1198
  %v1221 = vmul.f32 %v1081, %v1198
  %v1222 = vmul.f32 %v1082, %v1198
  %v1223 = vmul.f32 %v1083, %v1198
  %v1224 = vmul.f32 %v1084, %v1198
  %v1225 = vmul.f32 %v1085, %v1198
  %v1226 = vmul.f32 %v1086, %v1198
  %v1227 = vld [vmem:[%s2] sm:$0xff]
  %v1228 = vld [vmem:[%s2 + $0x8] sm:$0xff]
  %v1229 = vld [vmem:[%s2 + $0x10] sm:$0xff]
  %v1230 = vld [vmem:[%s2 + $0x18] sm:$0xff]
  %1232 = vset.pattern.permute.xlu0 0
  %1233 = vperm.xlu0 %1232, %v1227
  %v1234 = vpop.permute.xlu0 %1233
  %1237 = vset.pattern.permute.xlu0 0
  %1238 = vperm.xlu0 %1237, %v1228
  %v1239 = vpop.permute.xlu0 %1238
  %1242 = vset.pattern.permute.xlu0 0
  %1243 = vperm.xlu0 %1242, %v1229
  %v1244 = vpop.permute.xlu0 %1243
  %1247 = vset.pattern.permute.xlu0 0
  %1248 = vperm.xlu0 %1247, %v1230
  %v1249 = vpop.permute.xlu0 %1248
  %v1251 = vmul.f32 %v1199, %v1234
  %v1252 = vmul.f32 %v1200, %v1234
  %v1253 = vmul.f32 %v1201, %v1234
  %v1254 = vmul.f32 %v1202, %v1234
  %v1255 = vmul.f32 %v1203, %v1234
  %v1256 = vmul.f32 %v1204, %v1234
  %v1257 = vmul.f32 %v1205, %v1234
  %v1258 = vmul.f32 %v1206, %v1239
  %v1259 = vmul.f32 %v1207, %v1239
  %v1260 = vmul.f32 %v1208, %v1239
  %v1261 = vmul.f32 %v1209, %v1239
  %v1262 = vmul.f32 %v1210, %v1239
  %v1263 = vmul.f32 %v1211, %v1239
  %v1264 = vmul.f32 %v1212, %v1239
  %v1265 = vmul.f32 %v1213, %v1244
  %v1266 = vmul.f32 %v1214, %v1244
  %v1267 = vmul.f32 %v1215, %v1244
  %v1268 = vmul.f32 %v1216, %v1244
  %v1269 = vmul.f32 %v1217, %v1244
  %v1270 = vmul.f32 %v1218, %v1244
  %v1271 = vmul.f32 %v1219, %v1244
  %v1272 = vmul.f32 %v1220, %v1249
  %v1273 = vmul.f32 %v1221, %v1249
  %v1274 = vmul.f32 %v1222, %v1249
  %v1275 = vmul.f32 %v1223, %v1249
  %v1276 = vmul.f32 %v1224, %v1249
  %v1277 = vmul.f32 %v1225, %v1249
  %v1278 = vmul.f32 %v1226, %v1249
  %v1279 = vld [vmem:[%s3] sm:$0xff]
  %v1280 = vld [vmem:[%s3 + $0x8] sm:$0xff]
  %v1281 = vld [vmem:[%s3 + $0x10] sm:$0xff]
  %v1282 = vld [vmem:[%s3 + $0x18] sm:$0xff]
  %1284 = vset.pattern.permute.xlu0 0
  %1285 = vperm.xlu0 %1284, %v1279
  %v1286 = vpop.permute.xlu0 %1285
  %1289 = vset.pattern.permute.xlu0 0
  %1290 = vperm.xlu0 %1289, %v1280
  %v1291 = vpop.permute.xlu0 %1290
  %1294 = vset.pattern.permute.xlu0 0
  %1295 = vperm.xlu0 %1294, %v1281
  %v1296 = vpop.permute.xlu0 %1295
  %1299 = vset.pattern.permute.xlu0 0
  %1300 = vperm.xlu0 %1299, %v1282
  %v1301 = vpop.permute.xlu0 %1300
  %v1303 = vadd.f32 %v1251, %v1286
  %v1304 = vadd.f32 %v1252, %v1286
  %v1305 = vadd.f32 %v1253, %v1286
  %v1306 = vadd.f32 %v1254, %v1286
  %v1307 = vadd.f32 %v1255, %v1286
  %v1308 = vadd.f32 %v1256, %v1286
  %v1309 = vadd.f32 %v1257, %v1286
  %v1310 = vadd.f32 %v1258, %v1291
  %v1311 = vadd.f32 %v1259, %v1291
  %v1312 = vadd.f32 %v1260, %v1291
  %v1313 = vadd.f32 %v1261, %v1291
  %v1314 = vadd.f32 %v1262, %v1291
  %v1315 = vadd.f32 %v1263, %v1291
  %v1316 = vadd.f32 %v1264, %v1291
  %v1317 = vadd.f32 %v1265, %v1296
  %v1318 = vadd.f32 %v1266, %v1296
  %v1319 = vadd.f32 %v1267, %v1296
  %v1320 = vadd.f32 %v1268, %v1296
  %v1321 = vadd.f32 %v1269, %v1296
  %v1322 = vadd.f32 %v1270, %v1296
  %v1323 = vadd.f32 %v1271, %v1296
  %v1324 = vadd.f32 %v1272, %v1301
  %v1325 = vadd.f32 %v1273, %v1301
  %v1326 = vadd.f32 %v1274, %v1301
  %v1327 = vadd.f32 %v1275, %v1301
  %v1328 = vadd.f32 %v1276, %v1301
  %v1329 = vadd.f32 %v1277, %v1301
  %v1330 = vadd.f32 %v1278, %v1301
  %v1331 = vmax.f32 %v1303, 0.0
  %v1332 = vmax.f32 %v1304, 0.0
  %v1333 = vmax.f32 %v1305, 0.0
  %v1334 = vmax.f32 %v1306, 0.0
  %v1335 = vmax.f32 %v1307, 0.0
  %v1336 = vmax.f32 %v1308, 0.0
  %v1337 = vmax.f32 %v1309, 0.0
  %v1338 = vmax.f32 %v1310, 0.0
  %v1339 = vmax.f32 %v1311, 0.0
  %v1340 = vmax.f32 %v1312, 0.0
  %v1341 = vmax.f32 %v1313, 0.0
  %v1342 = vmax.f32 %v1314, 0.0
  %v1343 = vmax.f32 %v1315, 0.0
  %v1344 = vmax.f32 %v1316, 0.0
  %v1345 = vmax.f32 %v1317, 0.0
  %v1346 = vmax.f32 %v1318, 0.0
  %v1347 = vmax.f32 %v1319, 0.0
  %v1348 = vmax.f32 %v1320, 0.0
  %v1349 = vmax.f32 %v1321, 0.0
  %v1350 = vmax.f32 %v1322, 0.0
  %v1351 = vmax.f32 %v1323, 0.0
  %v1352 = vmax.f32 %v1324, 0.0
  %v1353 = vmax.f32 %v1325, 0.0
  %v1354 = vmax.f32 %v1326, 0.0
  %v1355 = vmax.f32 %v1327, 0.0
  %v1356 = vmax.f32 %v1328, 0.0
  %v1357 = vmax.f32 %v1329, 0.0
  %v1358 = vmax.f32 %v1330, 0.0
  %v1359 = vpack.c.bf16 %v1332, %v1331
  %v1360 = vpack.c.bf16 %v1334, %v1333
  %v1361 = vpack.c.bf16 %v1336, %v1335
  %v1362 = vpack.c.bf16 %v1337, %v1337
  %v1363 = vpack.c.bf16 %v1339, %v1338
  %v1364 = vpack.c.bf16 %v1341, %v1340
  %v1365 = vpack.c.bf16 %v1343, %v1342
  %v1366 = vpack.c.bf16 %v1344, %v1344
  %v1367 = vpack.c.bf16 %v1346, %v1345
  %v1368 = vpack.c.bf16 %v1348, %v1347
  %v1369 = vpack.c.bf16 %v1350, %v1349
  %v1370 = vpack.c.bf16 %v1351, %v1351
  %v1371 = vpack.c.bf16 %v1353, %v1352
  %v1372 = vpack.c.bf16 %v1355, %v1354
  %v1373 = vpack.c.bf16 %v1357, %v1356
  %v1374 = vpack.c.bf16 %v1358, %v1358
  %1375 = vst [vmem:[%s4] sm:$0xff] %v1359
  %1376 = vst [vmem:[%s4 + $0x8] sm:$0xff] %v1360
  %1377 = vst [vmem:[%s4 + $0x10] sm:$0xff] %v1361
  %vm1378 = vcmask 257024
  %1379 = vst.msk [vmem:[%s4 + $0x18] sm:$0xf] %vm1378, %v1362
  %1380 = vst [vmem:[%s4 + $0x1c] sm:$0xff] %v1363
  %1381 = vst [vmem:[%s4 + $0x24] sm:$0xff] %v1364
  %1382 = vst [vmem:[%s4 + $0x2c] sm:$0xff] %v1365
  %1383 = vst.msk [vmem:[%s4 + $0x34] sm:$0xf] %vm1378, %v1366
  %1384 = vst [vmem:[%s4 + $0x38] sm:$0xff] %v1367
  %1385 = vst [vmem:[%s4 + $0x40] sm:$0xff] %v1368
  %1386 = vst [vmem:[%s4 + $0x48] sm:$0xff] %v1369
  %1387 = vst.msk [vmem:[%s4 + $0x50] sm:$0xf] %vm1378, %v1370
  %1388 = vst [vmem:[%s4 + $0x54] sm:$0xff] %v1371
  %1389 = vst [vmem:[%s4 + $0x5c] sm:$0xff] %v1372
  %1390 = vst [vmem:[%s4 + $0x64] sm:$0xff] %v1373
  %1391 = vst.msk [vmem:[%s4 + $0x6c] sm:$0xf] %vm1378, %v1374
  // Predicated region
  $region18: #{lstm_policy_forward.6} parent=0 // pred_check
    _
  $region19: #{lstm_policy_forward.6} parent=0 // pred_check_branch
    %1393 = sbr.rel (0) target = $region21
  $region20: #{lstm_policy_forward.6} parent=0 // pred_region
    _
  $region21: #{lstm_policy_forward.6} parent=0 // pred_fallthru
    _
  // Predicated region
  $region22: #{lstm_policy_forward.6} parent=0 // pred_check
    _
  $region23: #{lstm_policy_forward.6} parent=0 // pred_check_branch
    %1395 = sbr.rel (0) target = $region25
  $region24: #{lstm_policy_forward.6} parent=0 // pred_region
    _
  $region25: #{lstm_policy_forward.6} parent=0 // pred_fallthru
    _

// kernel: lstm_policy_forward.7
$region0: #{lstm_policy_forward.7}
  #allocation0 [shape = 'u32[]', space=smem, size = 0x4, offset = 0x4, fixed_abs, tag = 'smem constant byte address 0x4 - core index']
  #allocation1 [shape = 'u32[72,128]{1,0:T(1,128)}', space=vmem, size = 0x9000, scoped, tag = 'internal scratch']
  %s0 = inlined_call_operand.vmem [shape: bf16[32,512], index: 0, kind: input, shape index: {}]
  %s1 = inlined_call_operand.vmem [shape: bf16[512,200], index: 1, kind: input, shape index: {}]
  %s2 = inlined_call_operand.vmem [shape: f32[32,1], index: 2, kind: input, shape index: {}]
  %s3 = inlined_call_operand.vmem [shape: f32[32,1], index: 3, kind: input, shape index: {}]
  %s4 = inlined_call_operand.vmem [shape: bf16[32,200], index: 4, kind: output, shape index: {}]
  %s5 = sld [smem:[#allocation0]]
  $region26: #{lstm_policy_forward.7} parent=0
    _
  %s7 = ssub.s32 1, %s5
  %s8 = scalar_select 0, %s7, %s5
  // Predicated region
  $region2: #{lstm_policy_forward.7} parent=0 // pred_check
    _
  $region3: #{lstm_policy_forward.7} parent=0 // pred_check_branch
    %10 = sbr.rel (0) target = $region5
  $region4: #{lstm_policy_forward.7} parent=0 // pred_region
    _
  $region5: #{lstm_policy_forward.7} parent=0 // pred_fallthru
    _
  // Predicated region
  $region6: #{lstm_policy_forward.7} parent=0 // pred_check
    _
  $region7: #{lstm_policy_forward.7} parent=0 // pred_check_branch
    %12 = sbr.rel (0) target = $region9
  $region8: #{lstm_policy_forward.7} parent=0 // pred_region
    _
  $region9: #{lstm_policy_forward.7} parent=0 // pred_fallthru
    _
  // Predicated region
  $region10: #{lstm_policy_forward.7} parent=0 // pred_check
    _
  $region11: #{lstm_policy_forward.7} parent=0 // pred_check_branch
    %14 = sbr.rel (0) target = $region13
  $region12: #{lstm_policy_forward.7} parent=0 // pred_region
    _
  $region13: #{lstm_policy_forward.7} parent=0 // pred_fallthru
    _
  // Predicated region
  $region14: #{lstm_policy_forward.7} parent=0 // pred_check
    _
  $region15: #{lstm_policy_forward.7} parent=0 // pred_check_branch
    %16 = sbr.rel (0) target = $region17
  $region16: #{lstm_policy_forward.7} parent=0 // pred_region
    _
  $region17: #{lstm_policy_forward.7} parent=0 // pred_fallthru
    _
  %v17 = vld [vmem:[%s0] sm:$0xff]
  %v18 = vld [vmem:[%s0 + $0x8] sm:$0xff]
  %v19 = vld [vmem:[%s0 + $0x10] sm:$0xff]
  %v20 = vld [vmem:[%s0 + $0x18] sm:$0xff]
  %v21 = vld [vmem:[%s0 + $0x20] sm:$0xff]
  %v22 = vld [vmem:[%s0 + $0x28] sm:$0xff]
  %v23 = vld [vmem:[%s0 + $0x30] sm:$0xff]
  %v24 = vld [vmem:[%s0 + $0x38] sm:$0xff]
  %v25 = vld [vmem:[%s1] sm:$0xff]
  %v26 = vld [vmem:[%s1 + $0x8] sm:$0xff]
  %v27 = vld [vmem:[%s1 + $0x10] sm:$0xff]
  %v28 = vld [vmem:[%s1 + $0x18] sm:$0xff]
  %v29 = vld [vmem:[%s1 + $0x20] sm:$0xff]
  %v30 = vld [vmem:[%s1 + $0x28] sm:$0xff]
  %v31 = vld [vmem:[%s1 + $0x30] sm:$0xff]
  %v32 = vld [vmem:[%s1 + $0x38] sm:$0xff]
  %v33 = vld [vmem:[%s1 + $0x40] sm:$0xff]
  %v34 = vld [vmem:[%s1 + $0x48] sm:$0xff]
  %v35 = vld [vmem:[%s1 + $0x50] sm:$0xff]
  %v36 = vld [vmem:[%s1 + $0x58] sm:$0xff]
  %v37 = vld [vmem:[%s1 + $0x60] sm:$0xff]
  %v38 = vld [vmem:[%s1 + $0x68] sm:$0xff]
  %v39 = vld [vmem:[%s1 + $0x70] sm:$0xff]
  %v40 = vld [vmem:[%s1 + $0x78] sm:$0xff]
  %v41 = vld [vmem:[%s1 + $0x80] sm:$0xff]
  %v42 = vld [vmem:[%s1 + $0x88] sm:$0xff]
  %v43 = vld [vmem:[%s1 + $0x90] sm:$0xff]
  %v44 = vld [vmem:[%s1 + $0x98] sm:$0xff]
  %v45 = vld [vmem:[%s1 + $0xa0] sm:$0xff]
  %v46 = vld [vmem:[%s1 + $0xa8] sm:$0xff]
  %v47 = vld [vmem:[%s1 + $0xb0] sm:$0xff]
  %v48 = vld [vmem:[%s1 + $0xb8] sm:$0xff]
  %v49 = vld [vmem:[%s1 + $0xc0] sm:$0xff]
  %v50 = vld [vmem:[%s1 + $0xc8] sm:$0xff]
  %v51 = vld [vmem:[%s1 + $0xd0] sm:$0xff]
  %v52 = vld [vmem:[%s1 + $0xd8] sm:$0xff]
  %v53 = vld [vmem:[%s1 + $0xe0] sm:$0xff]
  %v54 = vld [vmem:[%s1 + $0xe8] sm:$0xff]
  %v55 = vld [vmem:[%s1 + $0xf0] sm:$0xff]
  %v56 = vld [vmem:[%s1 + $0xf8] sm:$0xff]
  %v57 = vld [vmem:[%s1 + $0x100] sm:$0xff]
  %v58 = vld [vmem:[%s1 + $0x108] sm:$0xff]
  %v59 = vld [vmem:[%s1 + $0x110] sm:$0xff]
  %v60 = vld [vmem:[%s1 + $0x118] sm:$0xff]
  %v61 = vld [vmem:[%s1 + $0x120] sm:$0xff]
  %v62 = vld [vmem:[%s1 + $0x128] sm:$0xff]
  %v63 = vld [vmem:[%s1 + $0x130] sm:$0xff]
  %v64 = vld [vmem:[%s1 + $0x138] sm:$0xff]
  %v65 = vld [vmem:[%s1 + $0x140] sm:$0xff]
  %v66 = vld [vmem:[%s1 + $0x148] sm:$0xff]
  %v67 = vld [vmem:[%s1 + $0x150] sm:$0xff]
  %v68 = vld [vmem:[%s1 + $0x158] sm:$0xff]
  %v69 = vld [vmem:[%s1 + $0x160] sm:$0xff]
  %v70 = vld [vmem:[%s1 + $0x168] sm:$0xff]
  %v71 = vld [vmem:[%s1 + $0x170] sm:$0xff]
  %v72 = vld [vmem:[%s1 + $0x178] sm:$0xff]
  %v73 = vld [vmem:[%s1 + $0x180] sm:$0xff]
  %v74 = vld [vmem:[%s1 + $0x188] sm:$0xff]
  %v75 = vld [vmem:[%s1 + $0x190] sm:$0xff]
  %v76 = vld [vmem:[%s1 + $0x198] sm:$0xff]
  %v77 = vld [vmem:[%s1 + $0x1a0] sm:$0xff]
  %v78 = vld [vmem:[%s1 + $0x1a8] sm:$0xff]
  %v79 = vld [vmem:[%s1 + $0x1b0] sm:$0xff]
  %v80 = vld [vmem:[%s1 + $0x1b8] sm:$0xff]
  %v81 = vld [vmem:[%s1 + $0x1c0] sm:$0xff]
  %v82 = vld [vmem:[%s1 + $0x1c8] sm:$0xff]
  %v83 = vld [vmem:[%s1 + $0x1d0] sm:$0xff]
  %v84 = vld [vmem:[%s1 + $0x1d8] sm:$0xff]
  %v85 = vld [vmem:[%s1 + $0x1e0] sm:$0xff]
  %v86 = vld [vmem:[%s1 + $0x1e8] sm:$0xff]
  %v87 = vld [vmem:[%s1 + $0x1f0] sm:$0xff]
  %v88 = vld [vmem:[%s1 + $0x1f8] sm:$0xff]
  %v97 = vunpack.c.l.b16 %v17
  %v98 = vunpack.c.h.b16 %v17
  %v99 = vunpack.c.l.b16 %v18
  %v100 = vunpack.c.h.b16 %v18
  %v101 = vunpack.c.l.b16 %v19
  %v102 = vunpack.c.h.b16 %v19
  %v103 = vunpack.c.l.b16 %v20
  %v104 = vunpack.c.h.b16 %v20
  %v105 = vunpack.c.l.b16 %v21
  %v106 = vunpack.c.h.b16 %v21
  %v107 = vunpack.c.l.b16 %v22
  %v108 = vunpack.c.h.b16 %v22
  %v109 = vunpack.c.l.b16 %v23
  %v110 = vunpack.c.h.b16 %v23
  %v111 = vunpack.c.l.b16 %v24
  %v112 = vunpack.c.h.b16 %v24
  %v113 = vpack.c.b16 %v101, %v97
  %v114 = vpack.c.b16 %v102, %v98
  %v115 = vpack.c.b16 %v103, %v99
  %v116 = vpack.c.b16 %v104, %v100
  %v117 = vpack.c.b16 %v109, %v105
  %v118 = vpack.c.b16 %v110, %v106
  %v119 = vpack.c.b16 %v111, %v107
  %v120 = vpack.c.b16 %v112, %v108
  %v193 = vunpack.c.l.b16 %v25
  %v194 = vunpack.c.h.b16 %v25
  %v195 = vunpack.c.l.b16 %v26
  %v196 = vunpack.c.h.b16 %v26
  %v197 = vunpack.c.l.b16 %v27
  %v198 = vunpack.c.h.b16 %v27
  %v199 = vunpack.c.l.b16 %v28
  %v200 = vunpack.c.h.b16 %v28
  %v201 = vunpack.c.l.b16 %v29
  %v202 = vunpack.c.h.b16 %v29
  %v203 = vunpack.c.l.b16 %v30
  %v204 = vunpack.c.h.b16 %v30
  %v205 = vunpack.c.l.b16 %v31
  %v206 = vunpack.c.h.b16 %v31
  %v207 = vunpack.c.l.b16 %v32
  %v208 = vunpack.c.h.b16 %v32
  %v209 = vunpack.c.l.b16 %v33
  %v210 = vunpack.c.h.b16 %v33
  %v211 = vunpack.c.l.b16 %v34
  %v212 = vunpack.c.h.b16 %v34
  %v213 = vunpack.c.l.b16 %v35
  %v214 = vunpack.c.h.b16 %v35
  %v215 = vunpack.c.l.b16 %v36
  %v216 = vunpack.c.h.b16 %v36
  %v217 = vunpack.c.l.b16 %v37
  %v218 = vunpack.c.h.b16 %v37
  %v219 = vunpack.c.l.b16 %v38
  %v220 = vunpack.c.h.b16 %v38
  %v221 = vunpack.c.l.b16 %v39
  %v222 = vunpack.c.h.b16 %v39
  %v223 = vunpack.c.l.b16 %v40
  %v224 = vunpack.c.h.b16 %v40
  %v225 = vunpack.c.l.b16 %v41
  %v226 = vunpack.c.h.b16 %v41
  %v227 = vunpack.c.l.b16 %v42
  %v228 = vunpack.c.h.b16 %v42
  %v229 = vunpack.c.l.b16 %v43
  %v230 = vunpack.c.h.b16 %v43
  %v231 = vunpack.c.l.b16 %v44
  %v232 = vunpack.c.h.b16 %v44
  %v233 = vunpack.c.l.b16 %v45
  %v234 = vunpack.c.h.b16 %v45
  %v235 = vunpack.c.l.b16 %v46
  %v236 = vunpack.c.h.b16 %v46
  %v237 = vunpack.c.l.b16 %v47
  %v238 = vunpack.c.h.b16 %v47
  %v239 = vunpack.c.l.b16 %v48
  %v240 = vunpack.c.h.b16 %v48
  %v241 = vunpack.c.l.b16 %v49
  %v242 = vunpack.c.h.b16 %v49
  %v243 = vunpack.c.l.b16 %v50
  %v244 = vunpack.c.h.b16 %v50
  %v245 = vunpack.c.l.b16 %v51
  %v246 = vunpack.c.h.b16 %v51
  %v247 = vunpack.c.l.b16 %v52
  %v248 = vunpack.c.h.b16 %v52
  %v249 = vunpack.c.l.b16 %v53
  %v250 = vunpack.c.h.b16 %v53
  %v251 = vunpack.c.l.b16 %v54
  %v252 = vunpack.c.h.b16 %v54
  %v253 = vunpack.c.l.b16 %v55
  %v254 = vunpack.c.h.b16 %v55
  %v255 = vunpack.c.l.b16 %v56
  %v256 = vunpack.c.h.b16 %v56
  %v257 = vunpack.c.l.b16 %v57
  %v258 = vunpack.c.h.b16 %v57
  %v259 = vunpack.c.l.b16 %v58
  %v260 = vunpack.c.h.b16 %v58
  %v261 = vunpack.c.l.b16 %v59
  %v262 = vunpack.c.h.b16 %v59
  %v263 = vunpack.c.l.b16 %v60
  %v264 = vunpack.c.h.b16 %v60
  %v265 = vunpack.c.l.b16 %v61
  %v266 = vunpack.c.h.b16 %v61
  %v267 = vunpack.c.l.b16 %v62
  %v268 = vunpack.c.h.b16 %v62
  %v269 = vunpack.c.l.b16 %v63
  %v270 = vunpack.c.h.b16 %v63
  %v271 = vunpack.c.l.b16 %v64
  %v272 = vunpack.c.h.b16 %v64
  %v273 = vunpack.c.l.b16 %v65
  %v274 = vunpack.c.h.b16 %v65
  %v275 = vunpack.c.l.b16 %v66
  %v276 = vunpack.c.h.b16 %v66
  %v277 = vunpack.c.l.b16 %v67
  %v278 = vunpack.c.h.b16 %v67
  %v279 = vunpack.c.l.b16 %v68
  %v280 = vunpack.c.h.b16 %v68
  %v281 = vunpack.c.l.b16 %v69
  %v282 = vunpack.c.h.b16 %v69
  %v283 = vunpack.c.l.b16 %v70
  %v284 = vunpack.c.h.b16 %v70
  %v285 = vunpack.c.l.b16 %v71
  %v286 = vunpack.c.h.b16 %v71
  %v287 = vunpack.c.l.b16 %v72
  %v288 = vunpack.c.h.b16 %v72
  %v289 = vunpack.c.l.b16 %v73
  %v290 = vunpack.c.h.b16 %v73
  %v291 = vunpack.c.l.b16 %v74
  %v292 = vunpack.c.h.b16 %v74
  %v293 = vunpack.c.l.b16 %v75
  %v294 = vunpack.c.h.b16 %v75
  %v295 = vunpack.c.l.b16 %v76
  %v296 = vunpack.c.h.b16 %v76
  %v297 = vunpack.c.l.b16 %v77
  %v298 = vunpack.c.h.b16 %v77
  %v299 = vunpack.c.l.b16 %v78
  %v300 = vunpack.c.h.b16 %v78
  %v301 = vunpack.c.l.b16 %v79
  %v302 = vunpack.c.h.b16 %v79
  %v303 = vunpack.c.l.b16 %v80
  %v304 = vunpack.c.h.b16 %v80
  %v305 = vunpack.c.l.b16 %v81
  %v306 = vunpack.c.h.b16 %v81
  %v307 = vunpack.c.l.b16 %v82
  %v308 = vunpack.c.h.b16 %v82
  %v309 = vunpack.c.l.b16 %v83
  %v310 = vunpack.c.h.b16 %v83
  %v311 = vunpack.c.l.b16 %v84
  %v312 = vunpack.c.h.b16 %v84
  %v313 = vunpack.c.l.b16 %v85
  %v314 = vunpack.c.h.b16 %v85
  %v315 = vunpack.c.l.b16 %v86
  %v316 = vunpack.c.h.b16 %v86
  %v317 = vunpack.c.l.b16 %v87
  %v318 = vunpack.c.h.b16 %v87
  %v319 = vunpack.c.l.b16 %v88
  %v320 = vunpack.c.h.b16 %v88
  %v321 = vpack.c.b16 %v195, %v193
  %v322 = vpack.c.b16 %v196, %v194
  %v323 = vpack.c.b16 %v199, %v197
  %v324 = vpack.c.b16 %v200, %v198
  %v325 = vpack.c.b16 %v203, %v201
  %v326 = vpack.c.b16 %v204, %v202
  %v327 = vpack.c.b16 %v207, %v205
  %v328 = vpack.c.b16 %v208, %v206
  %v329 = vpack.c.b16 %v211, %v209
  %v330 = vpack.c.b16 %v212, %v210
  %v331 = vpack.c.b16 %v215, %v213
  %v332 = vpack.c.b16 %v216, %v214
  %v333 = vpack.c.b16 %v219, %v217
  %v334 = vpack.c.b16 %v220, %v218
  %v335 = vpack.c.b16 %v223, %v221
  %v336 = vpack.c.b16 %v224, %v222
  %v337 = vpack.c.b16 %v227, %v225
  %v338 = vpack.c.b16 %v228, %v226
  %v339 = vpack.c.b16 %v231, %v229
  %v340 = vpack.c.b16 %v232, %v230
  %v341 = vpack.c.b16 %v235, %v233
  %v342 = vpack.c.b16 %v236, %v234
  %v343 = vpack.c.b16 %v239, %v237
  %v344 = vpack.c.b16 %v240, %v238
  %v345 = vpack.c.b16 %v243, %v241
  %v346 = vpack.c.b16 %v244, %v242
  %v347 = vpack.c.b16 %v247, %v245
  %v348 = vpack.c.b16 %v248, %v246
  %v349 = vpack.c.b16 %v251, %v249
  %v350 = vpack.c.b16 %v252, %v250
  %v351 = vpack.c.b16 %v255, %v253
  %v352 = vpack.c.b16 %v256, %v254
  %v353 = vpack.c.b16 %v259, %v257
  %v354 = vpack.c.b16 %v260, %v258
  %v355 = vpack.c.b16 %v263, %v261
  %v356 = vpack.c.b16 %v264, %v262
  %v357 = vpack.c.b16 %v267, %v265
  %v358 = vpack.c.b16 %v268, %v266
  %v359 = vpack.c.b16 %v271, %v269
  %v360 = vpack.c.b16 %v272, %v270
  %v361 = vpack.c.b16 %v275, %v273
  %v362 = vpack.c.b16 %v276, %v274
  %v363 = vpack.c.b16 %v279, %v277
  %v364 = vpack.c.b16 %v280, %v278
  %v365 = vpack.c.b16 %v283, %v281
  %v366 = vpack.c.b16 %v284, %v282
  %v367 = vpack.c.b16 %v287, %v285
  %v368 = vpack.c.b16 %v288, %v286
  %v369 = vpack.c.b16 %v291, %v289
  %v370 = vpack.c.b16 %v292, %v290
  %v371 = vpack.c.b16 %v295, %v293
  %v372 = vpack.c.b16 %v296, %v294
  %v373 = vpack.c.b16 %v299, %v297
  %v374 = vpack.c.b16 %v300, %v298
  %v375 = vpack.c.b16 %v303, %v301
  %v376 = vpack.c.b16 %v304, %v302
  %v377 = vpack.c.b16 %v307, %v305
  %v378 = vpack.c.b16 %v308, %v306
  %v379 = vpack.c.b16 %v311, %v309
  %v380 = vpack.c.b16 %v312, %v310
  %v381 = vpack.c.b16 %v315, %v313
  %v382 = vpack.c.b16 %v316, %v314
  %v383 = vpack.c.b16 %v319, %v317
  %v384 = vpack.c.b16 %v320, %v318
  %449 = vmatpush.bf16.msra.mxu0 %v335
  %450 = vmatpush.bf16.msra.mxu0 %v333
  %451 = vmatpush.bf16.msra.mxu0 %v331
  %452 = vmatpush.bf16.msra.mxu0 %v329
  %453 = vmatpush.bf16.msra.mxu0 %v327
  %454 = vmatpush.bf16.msra.mxu0 %v325
  %455 = vmatpush.bf16.msra.mxu0 %v323
  %456 = vmatpush.bf16.msra.mxu0 %v321
  %457 = vmatmul.bf16.gmra.mxu0 %v113
  %v458 = vpop.f32.mrf.mxu0
  %v459 = vadd.f32 0.0, %v458
  %v460 = vpop.f32.mrf.mxu0
  %v461 = vadd.f32 0.0, %v460
  %462 = vmatmul.bf16.gmra.mxu0 %v117
  %v463 = vpop.f32.mrf.mxu0
  %v464 = vadd.f32 0.0, %v463
  %v465 = vpop.f32.mrf.mxu0
  %v466 = vadd.f32 0.0, %v465
  %467 = vdwg.mxu0
  %468 = vmatpush.bf16.msra.mxu0 %v351
  %469 = vmatpush.bf16.msra.mxu0 %v349
  %470 = vmatpush.bf16.msra.mxu0 %v347
  %471 = vmatpush.bf16.msra.mxu0 %v345
  %472 = vmatpush.bf16.msra.mxu0 %v343
  %473 = vmatpush.bf16.msra.mxu0 %v341
  %474 = vmatpush.bf16.msra.mxu0 %v339
  %475 = vmatpush.bf16.msra.mxu0 %v337
  %476 = vmatmul.bf16.gmra.mxu0 %v114
  %v477 = vpop.f32.mrf.mxu0
  %v478 = vadd.f32 %v459, %v477
  %v479 = vpop.f32.mrf.mxu0
  %v480 = vadd.f32 %v461, %v479
  %481 = vmatmul.bf16.gmra.mxu0 %v118
  %v482 = vpop.f32.mrf.mxu0
  %v483 = vadd.f32 %v464, %v482
  %v484 = vpop.f32.mrf.mxu0
  %v485 = vadd.f32 %v466, %v484
  %486 = vdwg.mxu0
  %487 = vmatpush.bf16.msra.mxu0 %v367
  %488 = vmatpush.bf16.msra.mxu0 %v365
  %489 = vmatpush.bf16.msra.mxu0 %v363
  %490 = vmatpush.bf16.msra.mxu0 %v361
  %491 = vmatpush.bf16.msra.mxu0 %v359
  %492 = vmatpush.bf16.msra.mxu0 %v357
  %493 = vmatpush.bf16.msra.mxu0 %v355
  %494 = vmatpush.bf16.msra.mxu0 %v353
  %495 = vmatmul.bf16.gmra.mxu0 %v115
  %v496 = vpop.f32.mrf.mxu0
  %v497 = vadd.f32 %v478, %v496
  %v498 = vpop.f32.mrf.mxu0
  %v499 = vadd.f32 %v480, %v498
  %500 = vmatmul.bf16.gmra.mxu0 %v119
  %v501 = vpop.f32.mrf.mxu0
  %v502 = vadd.f32 %v483, %v501
  %v503 = vpop.f32.mrf.mxu0
  %v504 = vadd.f32 %v485, %v503
  %505 = vdwg.mxu0
  %506 = vmatpush.bf16.msra.mxu0 %v383
  %507 = vmatpush.bf16.msra.mxu0 %v381
  %508 = vmatpush.bf16.msra.mxu0 %v379
  %509 = vmatpush.bf16.msra.mxu0 %v377
  %510 = vmatpush.bf16.msra.mxu0 %v375
  %511 = vmatpush.bf16.msra.mxu0 %v373
  %512 = vmatpush.bf16.msra.mxu0 %v371
  %513 = vmatpush.bf16.msra.mxu0 %v369
  %514 = vmatmul.bf16.gmra.mxu0 %v116
  %v515 = vpop.f32.mrf.mxu0
  %v516 = vadd.f32 %v497, %v515
  %v517 = vpop.f32.mrf.mxu0
  %v518 = vadd.f32 %v499, %v517
  %519 = vmatmul.bf16.gmra.mxu0 %v120
  %v520 = vpop.f32.mrf.mxu0
  %v521 = vadd.f32 %v502, %v520
  %v522 = vpop.f32.mrf.mxu0
  %v523 = vadd.f32 %v504, %v522
  %524 = vdwg.mxu0
  %525 = vmatpush.bf16.msra.mxu0 %v336
  %526 = vmatpush.bf16.msra.mxu0 %v334
  %527 = vmatpush.bf16.msra.mxu0 %v332
  %528 = vmatpush.bf16.msra.mxu0 %v330
  %529 = vmatpush.bf16.msra.mxu0 %v328
  %530 = vmatpush.bf16.msra.mxu0 %v326
  %531 = vmatpush.bf16.msra.mxu0 %v324
  %532 = vmatpush.bf16.msra.mxu0 %v322
  %533 = vmatmul.bf16.gmra.mxu0 %v113
  %v534 = vpop.f32.mrf.mxu0
  %v535 = vadd.f32 0.0, %v534
  %v536 = vpop.f32.mrf.mxu0
  %v537 = vadd.f32 0.0, %v536
  %538 = vmatmul.bf16.gmra.mxu0 %v117
  %v539 = vpop.f32.mrf.mxu0
  %v540 = vadd.f32 0.0, %v539
  %v541 = vpop.f32.mrf.mxu0
  %v542 = vadd.f32 0.0, %v541
  %543 = vdwg.mxu0
  %544 = vmatpush.bf16.msra.mxu0 %v352
  %545 = vmatpush.bf16.msra.mxu0 %v350
  %546 = vmatpush.bf16.msra.mxu0 %v348
  %547 = vmatpush.bf16.msra.mxu0 %v346
  %548 = vmatpush.bf16.msra.mxu0 %v344
  %549 = vmatpush.bf16.msra.mxu0 %v342
  %550 = vmatpush.bf16.msra.mxu0 %v340
  %551 = vmatpush.bf16.msra.mxu0 %v338
  %552 = vmatmul.bf16.gmra.mxu0 %v114
  %v553 = vpop.f32.mrf.mxu0
  %v554 = vadd.f32 %v535, %v553
  %v555 = vpop.f32.mrf.mxu0
  %v556 = vadd.f32 %v537, %v555
  %557 = vmatmul.bf16.gmra.mxu0 %v118
  %v558 = vpop.f32.mrf.mxu0
  %v559 = vadd.f32 %v540, %v558
  %v560 = vpop.f32.mrf.mxu0
  %v561 = vadd.f32 %v542, %v560
  %562 = vdwg.mxu0
  %563 = vmatpush.bf16.msra.mxu0 %v368
  %564 = vmatpush.bf16.msra.mxu0 %v366
  %565 = vmatpush.bf16.msra.mxu0 %v364
  %566 = vmatpush.bf16.msra.mxu0 %v362
  %567 = vmatpush.bf16.msra.mxu0 %v360
  %568 = vmatpush.bf16.msra.mxu0 %v358
  %569 = vmatpush.bf16.msra.mxu0 %v356
  %570 = vmatpush.bf16.msra.mxu0 %v354
  %571 = vmatmul.bf16.gmra.mxu0 %v115
  %v572 = vpop.f32.mrf.mxu0
  %v573 = vadd.f32 %v554, %v572
  %v574 = vpop.f32.mrf.mxu0
  %v575 = vadd.f32 %v556, %v574
  %576 = vmatmul.bf16.gmra.mxu0 %v119
  %v577 = vpop.f32.mrf.mxu0
  %v578 = vadd.f32 %v559, %v577
  %v579 = vpop.f32.mrf.mxu0
  %v580 = vadd.f32 %v561, %v579
  %581 = vdwg.mxu0
  %582 = vmatpush.bf16.msra.mxu0 %v384
  %583 = vmatpush.bf16.msra.mxu0 %v382
  %584 = vmatpush.bf16.msra.mxu0 %v380
  %585 = vmatpush.bf16.msra.mxu0 %v378
  %586 = vmatpush.bf16.msra.mxu0 %v376
  %587 = vmatpush.bf16.msra.mxu0 %v374
  %588 = vmatpush.bf16.msra.mxu0 %v372
  %589 = vmatpush.bf16.msra.mxu0 %v370
  %590 = vmatmul.bf16.gmra.mxu0 %v116
  %v591 = vpop.f32.mrf.mxu0
  %v592 = vadd.f32 %v573, %v591
  %v593 = vpop.f32.mrf.mxu0
  %v594 = vadd.f32 %v575, %v593
  %595 = vmatmul.bf16.gmra.mxu0 %v120
  %v596 = vpop.f32.mrf.mxu0
  %v597 = vadd.f32 %v578, %v596
  %v598 = vpop.f32.mrf.mxu0
  %v599 = vadd.f32 %v580, %v598
  %600 = vdwg.mxu0
  %vm601 = vcmask 588800
  %v602 = vsel %vm601, %v592, 0.0
  %v603 = vadd.f32 %v516, %v602
  %604 = vadd.xlane.f32.xlu0 %v603
  %v605 = vpop.xlane.xlu0 %604
  %v606 = vsel %vm601, %v594, 0.0
  %v607 = vadd.f32 %v518, %v606
  %608 = vadd.xlane.f32.xlu0 %v607
  %v609 = vpop.xlane.xlu0 %608
  %v610 = vsel %vm601, %v597, 0.0
  %v611 = vadd.f32 %v521, %v610
  %612 = vadd.xlane.f32.xlu0 %v611
  %v613 = vpop.xlane.xlu0 %612
  %v614 = vsel %vm601, %v599, 0.0
  %v615 = vadd.f32 %v523, %v614
  %616 = vadd.xlane.f32.xlu0 %v615
  %v617 = vpop.xlane.xlu0 %616
  %v618 = vrcp.pop 200.0
  %v619 = vmul.f32 200.0, %v618
  %v620 = vsub.f32 1.0, %v619
  %v621 = vmul.f32 %v618, %v620
  %v622 = vadd.f32 %v618, %v621
  %vm623 = vweird.f32 %v618
  %v624 = vsel %vm623, %v618, %v622
  %v625 = vmul.f32 %v605, %v624
  %v626 = vmul.f32 %v609, %v624
  %v627 = vmul.f32 %v613, %v624
  %v628 = vmul.f32 %v617, %v624
  %v629 = vsub.f32 %v516, %v625
  %v630 = vsub.f32 %v592, %v625
  %v631 = vsub.f32 %v518, %v626
  %v632 = vsub.f32 %v594, %v626
  %v633 = vsub.f32 %v521, %v627
  %v634 = vsub.f32 %v597, %v627
  %v635 = vsub.f32 %v523, %v628
  %v636 = vsub.f32 %v599, %v628
  %v637 = vmul.f32 %v629, %v629
  %v638 = vmul.f32 %v630, %v630
  %v639 = vmul.f32 %v631, %v631
  %v640 = vmul.f32 %v632, %v632
  %v641 = vmul.f32 %v633, %v633
  %v642 = vmul.f32 %v634, %v634
  %v643 = vmul.f32 %v635, %v635
  %v644 = vmul.f32 %v636, %v636
  %v645 = vsel %vm601, %v638, 0.0
  %v646 = vadd.f32 %v637, %v645
  %647 = vadd.xlane.f32.xlu0 %v646
  %v648 = vpop.xlane.xlu0 %647
  %v649 = vsel %vm601, %v640, 0.0
  %v650 = vadd.f32 %v639, %v649
  %651 = vadd.xlane.f32.xlu0 %v650
  %v652 = vpop.xlane.xlu0 %651
  %v653 = vsel %vm601, %v642, 0.0
  %v654 = vadd.f32 %v641, %v653
  %655 = vadd.xlane.f32.xlu0 %v654
  %v656 = vpop.xlane.xlu0 %655
  %v657 = vsel %vm601, %v644, 0.0
  %v658 = vadd.f32 %v643, %v657
  %659 = vadd.xlane.f32.xlu0 %v658
  %v660 = vpop.xlane.xlu0 %659
  %v661 = vmul.f32 %v648, %v624
  %v662 = vmul.f32 %v652, %v624
  %v663 = vmul.f32 %v656, %v624
  %v664 = vmul.f32 %v660, %v624
  %v665 = vadd.f32 %v661, 1e-05
  %v666 = vadd.f32 %v662, 1e-05
  %v667 = vadd.f32 %v663, 1e-05
  %v668 = vadd.f32 %v664, 1e-05
  %v669 = vrsqrt.pop %v665
  %v670 = vmul.f32 %v669, %v665
  %v671 = vmul.f32 %v670, %v669
  %v672 = vmul.f32 0.5, %v671
  %v673 = vsub.f32 1.5, %v672
  %v674 = vmul.f32 %v669, %v673
  %vm675 = vweird.f32 %v665
  %vm676 = vweird.f32 %v669
  %vm677 = vmor %vm675, %vm676
  %v678 = vsel %vm677, %v669, %v674
  %v679 = vrsqrt.pop %v666
  %v680 = vmul.f32 %v679, %v666
  %v681 = vmul.f32 %v680, %v679
  %v682 = vmul.f32 0.5, %v681
  %v683 = vsub.f32 1.5, %v682
  %v684 = vmul.f32 %v679, %v683
  %vm685 = vweird.f32 %v666
  %vm686 = vweird.f32 %v679
  %vm687 = vmor %vm685, %vm686
  %v688 = vsel %vm687, %v679, %v684
  %v689 = vrsqrt.pop %v667
  %v690 = vmul.f32 %v689, %v667
  %v691 = vmul.f32 %v690, %v689
  %v692 = vmul.f32 0.5, %v691
  %v693 = vsub.f32 1.5, %v692
  %v694 = vmul.f32 %v689, %v693
  %vm695 = vweird.f32 %v667
  %vm696 = vweird.f32 %v689
  %vm697 = vmor %vm695, %vm696
  %v698 = vsel %vm697, %v689, %v694
  %v699 = vrsqrt.pop %v668
  %v700 = vmul.f32 %v699, %v668
  %v701 = vmul.f32 %v700, %v699
  %v702 = vmul.f32 0.5, %v701
  %v703 = vsub.f32 1.5, %v702
  %v704 = vmul.f32 %v699, %v703
  %vm705 = vweird.f32 %v668
  %vm706 = vweird.f32 %v699
  %vm707 = vmor %vm705, %vm706
  %v708 = vsel %vm707, %v699, %v704
  %v709 = vmul.f32 %v629, %v678
  %v710 = vmul.f32 %v630, %v678
  %v711 = vmul.f32 %v631, %v688
  %v712 = vmul.f32 %v632, %v688
  %v713 = vmul.f32 %v633, %v698
  %v714 = vmul.f32 %v634, %v698
  %v715 = vmul.f32 %v635, %v708
  %v716 = vmul.f32 %v636, %v708
  %v717 = vld [vmem:[%s2] sm:$0xff]
  %v718 = vld [vmem:[%s2 + $0x8] sm:$0xff]
  %v719 = vld [vmem:[%s2 + $0x10] sm:$0xff]
  %v720 = vld [vmem:[%s2 + $0x18] sm:$0xff]
  %722 = vset.pattern.permute.xlu0 0
  %723 = vperm.xlu0 %722, %v717
  %v724 = vpop.permute.xlu0 %723
  %727 = vset.pattern.permute.xlu0 0
  %728 = vperm.xlu0 %727, %v718
  %v729 = vpop.permute.xlu0 %728
  %732 = vset.pattern.permute.xlu0 0
  %733 = vperm.xlu0 %732, %v719
  %v734 = vpop.permute.xlu0 %733
  %737 = vset.pattern.permute.xlu0 0
  %738 = vperm.xlu0 %737, %v720
  %v739 = vpop.permute.xlu0 %738
  %v741 = vmul.f32 %v709, %v724
  %v742 = vmul.f32 %v710, %v724
  %v743 = vmul.f32 %v711, %v729
  %v744 = vmul.f32 %v712, %v729
  %v745 = vmul.f32 %v713, %v734
  %v746 = vmul.f32 %v714, %v734
  %v747 = vmul.f32 %v715, %v739
  %v748 = vmul.f32 %v716, %v739
  %v749 = vld [vmem:[%s3] sm:$0xff]
  %v750 = vld [vmem:[%s3 + $0x8] sm:$0xff]
  %v751 = vld [vmem:[%s3 + $0x10] sm:$0xff]
  %v752 = vld [vmem:[%s3 + $0x18] sm:$0xff]
  %754 = vset.pattern.permute.xlu0 0
  %755 = vperm.xlu0 %754, %v749
  %v756 = vpop.permute.xlu0 %755
  %759 = vset.pattern.permute.xlu0 0
  %760 = vperm.xlu0 %759, %v750
  %v761 = vpop.permute.xlu0 %760
  %764 = vset.pattern.permute.xlu0 0
  %765 = vperm.xlu0 %764, %v751
  %v766 = vpop.permute.xlu0 %765
  %769 = vset.pattern.permute.xlu0 0
  %770 = vperm.xlu0 %769, %v752
  %v771 = vpop.permute.xlu0 %770
  %v773 = vadd.f32 %v741, %v756
  %v774 = vadd.f32 %v742, %v756
  %v775 = vadd.f32 %v743, %v761
  %v776 = vadd.f32 %v744, %v761
  %v777 = vadd.f32 %v745, %v766
  %v778 = vadd.f32 %v746, %v766
  %v779 = vadd.f32 %v747, %v771
  %v780 = vadd.f32 %v748, %v771
  %v781 = vmax.f32 %v773, 0.0
  %v782 = vmax.f32 %v774, 0.0
  %v783 = vmax.f32 %v775, 0.0
  %v784 = vmax.f32 %v776, 0.0
  %v785 = vmax.f32 %v777, 0.0
  %v786 = vmax.f32 %v778, 0.0
  %v787 = vmax.f32 %v779, 0.0
  %v788 = vmax.f32 %v780, 0.0
  %v789 = vpack.c.bf16 %v782, %v781
  %v790 = vpack.c.bf16 %v784, %v783
  %v791 = vpack.c.bf16 %v786, %v785
  %v792 = vpack.c.bf16 %v788, %v787
  %vm793 = vcmask 1043456
  %vm794 = vcmask 588804
  %vm795 = vmor %vm794, %vm793
  %796 = vst.msk [vmem:[%s4] sm:$0xff] %vm795, %v789
  %797 = vst.msk [vmem:[%s4 + $0x8] sm:$0xff] %vm795, %v790
  %798 = vst.msk [vmem:[%s4 + $0x10] sm:$0xff] %vm795, %v791
  %799 = vst.msk [vmem:[%s4 + $0x18] sm:$0xff] %vm795, %v792
  // Predicated region
  $region18: #{lstm_policy_forward.7} parent=0 // pred_check
    _
  $region19: #{lstm_policy_forward.7} parent=0 // pred_check_branch
    %801 = sbr.rel (0) target = $region21
  $region20: #{lstm_policy_forward.7} parent=0 // pred_region
    _
  $region21: #{lstm_policy_forward.7} parent=0 // pred_fallthru
    _
  // Predicated region
  $region22: #{lstm_policy_forward.7} parent=0 // pred_check
    _
  $region23: #{lstm_policy_forward.7} parent=0 // pred_check_branch
    %803 = sbr.rel (0) target = $region25
  $region24: #{lstm_policy_forward.7} parent=0 // pred_region
    _
  $region25: #{lstm_policy_forward.7} parent=0 // pred_fallthru
    _

// kernel: lstm_policy_forward.8
$region0: #{lstm_policy_forward.8}
  #allocation0 [shape = 'u32[]', space=smem, size = 0x4, offset = 0x4, fixed_abs, tag = 'smem constant byte address 0x4 - core index']
  #allocation1 [shape = 'u32[72,128]{1,0:T(1,128)}', space=vmem, size = 0x9000, scoped, tag = 'internal scratch']
  %s0 = inlined_call_operand.vmem [shape: bf16[32,512], index: 0, kind: input, shape index: {}]
  %s1 = inlined_call_operand.vmem [shape: bf16[512,50], index: 1, kind: input, shape index: {}]
  %s2 = inlined_call_operand.vmem [shape: f32[32,1], index: 2, kind: input, shape index: {}]
  %s3 = inlined_call_operand.vmem [shape: f32[32,1], index: 3, kind: input, shape index: {}]
  %s4 = inlined_call_operand.vmem [shape: bf16[32,50], index: 4, kind: output, shape index: {}]
  %s5 = sld [smem:[#allocation0]]
  $region26: #{lstm_policy_forward.8} parent=0
    _
  %s7 = ssub.s32 1, %s5
  %s8 = scalar_select 0, %s7, %s5
  // Predicated region
  $region2: #{lstm_policy_forward.8} parent=0 // pred_check
    _
  $region3: #{lstm_policy_forward.8} parent=0 // pred_check_branch
    %10 = sbr.rel (0) target = $region5
  $region4: #{lstm_policy_forward.8} parent=0 // pred_region
    _
  $region5: #{lstm_policy_forward.8} parent=0 // pred_fallthru
    _
  // Predicated region
  $region6: #{lstm_policy_forward.8} parent=0 // pred_check
    _
  $region7: #{lstm_policy_forward.8} parent=0 // pred_check_branch
    %12 = sbr.rel (0) target = $region9
  $region8: #{lstm_policy_forward.8} parent=0 // pred_region
    _
  $region9: #{lstm_policy_forward.8} parent=0 // pred_fallthru
    _
  // Predicated region
  $region10: #{lstm_policy_forward.8} parent=0 // pred_check
    _
  $region11: #{lstm_policy_forward.8} parent=0 // pred_check_branch
    %14 = sbr.rel (0) target = $region13
  $region12: #{lstm_policy_forward.8} parent=0 // pred_region
    _
  $region13: #{lstm_policy_forward.8} parent=0 // pred_fallthru
    _
  // Predicated region
  $region14: #{lstm_policy_forward.8} parent=0 // pred_check
    _
  $region15: #{lstm_policy_forward.8} parent=0 // pred_check_branch
    %16 = sbr.rel (0) target = $region17
  $region16: #{lstm_policy_forward.8} parent=0 // pred_region
    _
  $region17: #{lstm_policy_forward.8} parent=0 // pred_fallthru
    _
  %v17 = vld [vmem:[%s0] sm:$0xff]
  %v18 = vld [vmem:[%s0 + $0x8] sm:$0xff]
  %v19 = vld [vmem:[%s0 + $0x10] sm:$0xff]
  %v20 = vld [vmem:[%s0 + $0x18] sm:$0xff]
  %v21 = vld [vmem:[%s0 + $0x20] sm:$0xff]
  %v22 = vld [vmem:[%s0 + $0x28] sm:$0xff]
  %v23 = vld [vmem:[%s0 + $0x30] sm:$0xff]
  %v24 = vld [vmem:[%s0 + $0x38] sm:$0xff]
  %v25 = vld [vmem:[%s1] sm:$0xf]
  %v26 = vld [vmem:[%s1 + $0x4] sm:$0xf]
  %v27 = vld [vmem:[%s1 + $0x8] sm:$0xf]
  %v28 = vld [vmem:[%s1 + $0xc] sm:$0xf]
  %v29 = vld [vmem:[%s1 + $0x10] sm:$0xf]
  %v30 = vld [vmem:[%s1 + $0x14] sm:$0xf]
  %v31 = vld [vmem:[%s1 + $0x18] sm:$0xf]
  %v32 = vld [vmem:[%s1 + $0x1c] sm:$0xf]
  %v33 = vld [vmem:[%s1 + $0x20] sm:$0xf]
  %v34 = vld [vmem:[%s1 + $0x24] sm:$0xf]
  %v35 = vld [vmem:[%s1 + $0x28] sm:$0xf]
  %v36 = vld [vmem:[%s1 + $0x2c] sm:$0xf]
  %v37 = vld [vmem:[%s1 + $0x30] sm:$0xf]
  %v38 = vld [vmem:[%s1 + $0x34] sm:$0xf]
  %v39 = vld [vmem:[%s1 + $0x38] sm:$0xf]
  %v40 = vld [vmem:[%s1 + $0x3c] sm:$0xf]
  %v41 = vld [vmem:[%s1 + $0x40] sm:$0xf]
  %v42 = vld [vmem:[%s1 + $0x44] sm:$0xf]
  %v43 = vld [vmem:[%s1 + $0x48] sm:$0xf]
  %v44 = vld [vmem:[%s1 + $0x4c] sm:$0xf]
  %v45 = vld [vmem:[%s1 + $0x50] sm:$0xf]
  %v46 = vld [vmem:[%s1 + $0x54] sm:$0xf]
  %v47 = vld [vmem:[%s1 + $0x58] sm:$0xf]
  %v48 = vld [vmem:[%s1 + $0x5c] sm:$0xf]
  %v49 = vld [vmem:[%s1 + $0x60] sm:$0xf]
  %v50 = vld [vmem:[%s1 + $0x64] sm:$0xf]
  %v51 = vld [vmem:[%s1 + $0x68] sm:$0xf]
  %v52 = vld [vmem:[%s1 + $0x6c] sm:$0xf]
  %v53 = vld [vmem:[%s1 + $0x70] sm:$0xf]
  %v54 = vld [vmem:[%s1 + $0x74] sm:$0xf]
  %v55 = vld [vmem:[%s1 + $0x78] sm:$0xf]
  %v56 = vld [vmem:[%s1 + $0x7c] sm:$0xf]
  %v57 = vld [vmem:[%s1 + $0x80] sm:$0xf]
  %v58 = vld [vmem:[%s1 + $0x84] sm:$0xf]
  %v59 = vld [vmem:[%s1 + $0x88] sm:$0xf]
  %v60 = vld [vmem:[%s1 + $0x8c] sm:$0xf]
  %v61 = vld [vmem:[%s1 + $0x90] sm:$0xf]
  %v62 = vld [vmem:[%s1 + $0x94] sm:$0xf]
  %v63 = vld [vmem:[%s1 + $0x98] sm:$0xf]
  %v64 = vld [vmem:[%s1 + $0x9c] sm:$0xf]
  %v65 = vld [vmem:[%s1 + $0xa0] sm:$0xf]
  %v66 = vld [vmem:[%s1 + $0xa4] sm:$0xf]
  %v67 = vld [vmem:[%s1 + $0xa8] sm:$0xf]
  %v68 = vld [vmem:[%s1 + $0xac] sm:$0xf]
  %v69 = vld [vmem:[%s1 + $0xb0] sm:$0xf]
  %v70 = vld [vmem:[%s1 + $0xb4] sm:$0xf]
  %v71 = vld [vmem:[%s1 + $0xb8] sm:$0xf]
  %v72 = vld [vmem:[%s1 + $0xbc] sm:$0xf]
  %v73 = vld [vmem:[%s1 + $0xc0] sm:$0xf]
  %v74 = vld [vmem:[%s1 + $0xc4] sm:$0xf]
  %v75 = vld [vmem:[%s1 + $0xc8] sm:$0xf]
  %v76 = vld [vmem:[%s1 + $0xcc] sm:$0xf]
  %v77 = vld [vmem:[%s1 + $0xd0] sm:$0xf]
  %v78 = vld [vmem:[%s1 + $0xd4] sm:$0xf]
  %v79 = vld [vmem:[%s1 + $0xd8] sm:$0xf]
  %v80 = vld [vmem:[%s1 + $0xdc] sm:$0xf]
  %v81 = vld [vmem:[%s1 + $0xe0] sm:$0xf]
  %v82 = vld [vmem:[%s1 + $0xe4] sm:$0xf]
  %v83 = vld [vmem:[%s1 + $0xe8] sm:$0xf]
  %v84 = vld [vmem:[%s1 + $0xec] sm:$0xf]
  %v85 = vld [vmem:[%s1 + $0xf0] sm:$0xf]
  %v86 = vld [vmem:[%s1 + $0xf4] sm:$0xf]
  %v87 = vld [vmem:[%s1 + $0xf8] sm:$0xf]
  %v88 = vld [vmem:[%s1 + $0xfc] sm:$0xf]
  %v97 = vunpack.c.l.b16 %v17
  %v98 = vunpack.c.h.b16 %v17
  %v99 = vunpack.c.l.b16 %v18
  %v100 = vunpack.c.h.b16 %v18
  %v101 = vunpack.c.l.b16 %v19
  %v102 = vunpack.c.h.b16 %v19
  %v103 = vunpack.c.l.b16 %v20
  %v104 = vunpack.c.h.b16 %v20
  %v105 = vunpack.c.l.b16 %v21
  %v106 = vunpack.c.h.b16 %v21
  %v107 = vunpack.c.l.b16 %v22
  %v108 = vunpack.c.h.b16 %v22
  %v109 = vunpack.c.l.b16 %v23
  %v110 = vunpack.c.h.b16 %v23
  %v111 = vunpack.c.l.b16 %v24
  %v112 = vunpack.c.h.b16 %v24
  %v113 = vpack.c.b16 %v101, %v97
  %v114 = vpack.c.b16 %v102, %v98
  %v115 = vpack.c.b16 %v103, %v99
  %v116 = vpack.c.b16 %v104, %v100
  %v117 = vpack.c.b16 %v109, %v105
  %v118 = vpack.c.b16 %v110, %v106
  %v119 = vpack.c.b16 %v111, %v107
  %v120 = vpack.c.b16 %v112, %v108
  %v193 = vunpack.c.l.b16 %v25
  %v194 = vunpack.c.l.b16 %v26
  %v195 = vunpack.c.l.b16 %v27
  %v196 = vunpack.c.l.b16 %v28
  %v197 = vunpack.c.l.b16 %v29
  %v198 = vunpack.c.l.b16 %v30
  %v199 = vunpack.c.l.b16 %v31
  %v200 = vunpack.c.l.b16 %v32
  %v201 = vunpack.c.l.b16 %v33
  %v202 = vunpack.c.l.b16 %v34
  %v203 = vunpack.c.l.b16 %v35
  %v204 = vunpack.c.l.b16 %v36
  %v205 = vunpack.c.l.b16 %v37
  %v206 = vunpack.c.l.b16 %v38
  %v207 = vunpack.c.l.b16 %v39
  %v208 = vunpack.c.l.b16 %v40
  %v209 = vunpack.c.l.b16 %v41
  %v210 = vunpack.c.l.b16 %v42
  %v211 = vunpack.c.l.b16 %v43
  %v212 = vunpack.c.l.b16 %v44
  %v213 = vunpack.c.l.b16 %v45
  %v214 = vunpack.c.l.b16 %v46
  %v215 = vunpack.c.l.b16 %v47
  %v216 = vunpack.c.l.b16 %v48
  %v217 = vunpack.c.l.b16 %v49
  %v218 = vunpack.c.l.b16 %v50
  %v219 = vunpack.c.l.b16 %v51
  %v220 = vunpack.c.l.b16 %v52
  %v221 = vunpack.c.l.b16 %v53
  %v222 = vunpack.c.l.b16 %v54
  %v223 = vunpack.c.l.b16 %v55
  %v224 = vunpack.c.l.b16 %v56
  %v225 = vunpack.c.l.b16 %v57
  %v226 = vunpack.c.l.b16 %v58
  %v227 = vunpack.c.l.b16 %v59
  %v228 = vunpack.c.l.b16 %v60
  %v229 = vunpack.c.l.b16 %v61
  %v230 = vunpack.c.l.b16 %v62
  %v231 = vunpack.c.l.b16 %v63
  %v232 = vunpack.c.l.b16 %v64
  %v233 = vunpack.c.l.b16 %v65
  %v234 = vunpack.c.l.b16 %v66
  %v235 = vunpack.c.l.b16 %v67
  %v236 = vunpack.c.l.b16 %v68
  %v237 = vunpack.c.l.b16 %v69
  %v238 = vunpack.c.l.b16 %v70
  %v239 = vunpack.c.l.b16 %v71
  %v240 = vunpack.c.l.b16 %v72
  %v241 = vunpack.c.l.b16 %v73
  %v242 = vunpack.c.l.b16 %v74
  %v243 = vunpack.c.l.b16 %v75
  %v244 = vunpack.c.l.b16 %v76
  %v245 = vunpack.c.l.b16 %v77
  %v246 = vunpack.c.l.b16 %v78
  %v247 = vunpack.c.l.b16 %v79
  %v248 = vunpack.c.l.b16 %v80
  %v249 = vunpack.c.l.b16 %v81
  %v250 = vunpack.c.l.b16 %v82
  %v251 = vunpack.c.l.b16 %v83
  %v252 = vunpack.c.l.b16 %v84
  %v253 = vunpack.c.l.b16 %v85
  %v254 = vunpack.c.l.b16 %v86
  %v255 = vunpack.c.l.b16 %v87
  %v256 = vunpack.c.l.b16 %v88
  %v257 = vpack.c.b16 %v194, %v193
  %v258 = vpack.c.b16 %v196, %v195
  %v259 = vpack.c.b16 %v198, %v197
  %v260 = vpack.c.b16 %v200, %v199
  %v261 = vpack.c.b16 %v202, %v201
  %v262 = vpack.c.b16 %v204, %v203
  %v263 = vpack.c.b16 %v206, %v205
  %v264 = vpack.c.b16 %v208, %v207
  %v265 = vpack.c.b16 %v210, %v209
  %v266 = vpack.c.b16 %v212, %v211
  %v267 = vpack.c.b16 %v214, %v213
  %v268 = vpack.c.b16 %v216, %v215
  %v269 = vpack.c.b16 %v218, %v217
  %v270 = vpack.c.b16 %v220, %v219
  %v271 = vpack.c.b16 %v222, %v221
  %v272 = vpack.c.b16 %v224, %v223
  %v273 = vpack.c.b16 %v226, %v225
  %v274 = vpack.c.b16 %v228, %v227
  %v275 = vpack.c.b16 %v230, %v229
  %v276 = vpack.c.b16 %v232, %v231
  %v277 = vpack.c.b16 %v234, %v233
  %v278 = vpack.c.b16 %v236, %v235
  %v279 = vpack.c.b16 %v238, %v237
  %v280 = vpack.c.b16 %v240, %v239
  %v281 = vpack.c.b16 %v242, %v241
  %v282 = vpack.c.b16 %v244, %v243
  %v283 = vpack.c.b16 %v246, %v245
  %v284 = vpack.c.b16 %v248, %v247
  %v285 = vpack.c.b16 %v250, %v249
  %v286 = vpack.c.b16 %v252, %v251
  %v287 = vpack.c.b16 %v254, %v253
  %v288 = vpack.c.b16 %v256, %v255
  %321 = vmatpush.bf16.msra.mxu0 %v264
  %322 = vmatpush.bf16.msra.mxu0 %v263
  %323 = vmatpush.bf16.msra.mxu0 %v262
  %324 = vmatpush.bf16.msra.mxu0 %v261
  %325 = vmatpush.bf16.msra.mxu0 %v260
  %326 = vmatpush.bf16.msra.mxu0 %v259
  %327 = vmatpush.bf16.msra.mxu0 %v258
  %328 = vmatpush.bf16.msra.mxu0 %v257
  %329 = vmatmul.bf16.gmra.mxu0 %v113
  %v330 = vpop.f32.mrf.mxu0
  %v331 = vadd.f32 0.0, %v330
  %v332 = vpop.f32.mrf.mxu0
  %v333 = vadd.f32 0.0, %v332
  %334 = vmatmul.bf16.gmra.mxu0 %v117
  %v335 = vpop.f32.mrf.mxu0
  %v336 = vadd.f32 0.0, %v335
  %v337 = vpop.f32.mrf.mxu0
  %v338 = vadd.f32 0.0, %v337
  %339 = vdwg.mxu0
  %340 = vmatpush.bf16.msra.mxu0 %v272
  %341 = vmatpush.bf16.msra.mxu0 %v271
  %342 = vmatpush.bf16.msra.mxu0 %v270
  %343 = vmatpush.bf16.msra.mxu0 %v269
  %344 = vmatpush.bf16.msra.mxu0 %v268
  %345 = vmatpush.bf16.msra.mxu0 %v267
  %346 = vmatpush.bf16.msra.mxu0 %v266
  %347 = vmatpush.bf16.msra.mxu0 %v265
  %348 = vmatmul.bf16.gmra.mxu0 %v114
  %v349 = vpop.f32.mrf.mxu0
  %v350 = vadd.f32 %v331, %v349
  %v351 = vpop.f32.mrf.mxu0
  %v352 = vadd.f32 %v333, %v351
  %353 = vmatmul.bf16.gmra.mxu0 %v118
  %v354 = vpop.f32.mrf.mxu0
  %v355 = vadd.f32 %v336, %v354
  %v356 = vpop.f32.mrf.mxu0
  %v357 = vadd.f32 %v338, %v356
  %358 = vdwg.mxu0
  %359 = vmatpush.bf16.msra.mxu0 %v280
  %360 = vmatpush.bf16.msra.mxu0 %v279
  %361 = vmatpush.bf16.msra.mxu0 %v278
  %362 = vmatpush.bf16.msra.mxu0 %v277
  %363 = vmatpush.bf16.msra.mxu0 %v276
  %364 = vmatpush.bf16.msra.mxu0 %v275
  %365 = vmatpush.bf16.msra.mxu0 %v274
  %366 = vmatpush.bf16.msra.mxu0 %v273
  %367 = vmatmul.bf16.gmra.mxu0 %v115
  %v368 = vpop.f32.mrf.mxu0
  %v369 = vadd.f32 %v350, %v368
  %v370 = vpop.f32.mrf.mxu0
  %v371 = vadd.f32 %v352, %v370
  %372 = vmatmul.bf16.gmra.mxu0 %v119
  %v373 = vpop.f32.mrf.mxu0
  %v374 = vadd.f32 %v355, %v373
  %v375 = vpop.f32.mrf.mxu0
  %v376 = vadd.f32 %v357, %v375
  %377 = vdwg.mxu0
  %378 = vmatpush.bf16.msra.mxu0 %v288
  %379 = vmatpush.bf16.msra.mxu0 %v287
  %380 = vmatpush.bf16.msra.mxu0 %v286
  %381 = vmatpush.bf16.msra.mxu0 %v285
  %382 = vmatpush.bf16.msra.mxu0 %v284
  %383 = vmatpush.bf16.msra.mxu0 %v283
  %384 = vmatpush.bf16.msra.mxu0 %v282
  %385 = vmatpush.bf16.msra.mxu0 %v281
  %386 = vmatmul.bf16.gmra.mxu0 %v116
  %v387 = vpop.f32.mrf.mxu0
  %v388 = vadd.f32 %v369, %v387
  %v389 = vpop.f32.mrf.mxu0
  %v390 = vadd.f32 %v371, %v389
  %391 = vmatmul.bf16.gmra.mxu0 %v120
  %v392 = vpop.f32.mrf.mxu0
  %v393 = vadd.f32 %v374, %v392
  %v394 = vpop.f32.mrf.mxu0
  %v395 = vadd.f32 %v376, %v394
  %396 = vdwg.mxu0
  %vm397 = vcmask 408576
  %v398 = vsel %vm397, %v388, 0.0
  %399 = vadd.xlane.f32.xlu0 %v398
  %v400 = vpop.xlane.xlu0 %399
  %v401 = vsel %vm397, %v390, 0.0
  %402 = vadd.xlane.f32.xlu0 %v401
  %v403 = vpop.xlane.xlu0 %402
  %v404 = vsel %vm397, %v393, 0.0
  %405 = vadd.xlane.f32.xlu0 %v404
  %v406 = vpop.xlane.xlu0 %405
  %v407 = vsel %vm397, %v395, 0.0
  %408 = vadd.xlane.f32.xlu0 %v407
  %v409 = vpop.xlane.xlu0 %408
  %v410 = vrcp.pop 50.0
  %v411 = vmul.f32 50.0, %v410
  %v412 = vsub.f32 1.0, %v411
  %v413 = vmul.f32 %v410, %v412
  %v414 = vadd.f32 %v410, %v413
  %vm415 = vweird.f32 %v410
  %v416 = vsel %vm415, %v410, %v414
  %v417 = vmul.f32 %v400, %v416
  %v418 = vmul.f32 %v403, %v416
  %v419 = vmul.f32 %v406, %v416
  %v420 = vmul.f32 %v409, %v416
  %v421 = vsub.f32 %v388, %v417
  %v422 = vsub.f32 %v390, %v418
  %v423 = vsub.f32 %v393, %v419
  %v424 = vsub.f32 %v395, %v420
  %v425 = vmul.f32 %v421, %v421
  %v426 = vmul.f32 %v422, %v422
  %v427 = vmul.f32 %v423, %v423
  %v428 = vmul.f32 %v424, %v424
  %v429 = vsel %vm397, %v425, 0.0
  %430 = vadd.xlane.f32.xlu0 %v429
  %v431 = vpop.xlane.xlu0 %430
  %v432 = vsel %vm397, %v426, 0.0
  %433 = vadd.xlane.f32.xlu0 %v432
  %v434 = vpop.xlane.xlu0 %433
  %v435 = vsel %vm397, %v427, 0.0
  %436 = vadd.xlane.f32.xlu0 %v435
  %v437 = vpop.xlane.xlu0 %436
  %v438 = vsel %vm397, %v428, 0.0
  %439 = vadd.xlane.f32.xlu0 %v438
  %v440 = vpop.xlane.xlu0 %439
  %v441 = vmul.f32 %v431, %v416
  %v442 = vmul.f32 %v434, %v416
  %v443 = vmul.f32 %v437, %v416
  %v444 = vmul.f32 %v440, %v416
  %v445 = vadd.f32 %v441, 1e-05
  %v446 = vadd.f32 %v442, 1e-05
  %v447 = vadd.f32 %v443, 1e-05
  %v448 = vadd.f32 %v444, 1e-05
  %v449 = vrsqrt.pop %v445
  %v450 = vmul.f32 %v449, %v445
  %v451 = vmul.f32 %v450, %v449
  %v452 = vmul.f32 0.5, %v451
  %v453 = vsub.f32 1.5, %v452
  %v454 = vmul.f32 %v449, %v453
  %vm455 = vweird.f32 %v445
  %vm456 = vweird.f32 %v449
  %vm457 = vmor %vm455, %vm456
  %v458 = vsel %vm457, %v449, %v454
  %v459 = vrsqrt.pop %v446
  %v460 = vmul.f32 %v459, %v446
  %v461 = vmul.f32 %v460, %v459
  %v462 = vmul.f32 0.5, %v461
  %v463 = vsub.f32 1.5, %v462
  %v464 = vmul.f32 %v459, %v463
  %vm465 = vweird.f32 %v446
  %vm466 = vweird.f32 %v459
  %vm467 = vmor %vm465, %vm466
  %v468 = vsel %vm467, %v459, %v464
  %v469 = vrsqrt.pop %v447
  %v470 = vmul.f32 %v469, %v447
  %v471 = vmul.f32 %v470, %v469
  %v472 = vmul.f32 0.5, %v471
  %v473 = vsub.f32 1.5, %v472
  %v474 = vmul.f32 %v469, %v473
  %vm475 = vweird.f32 %v447
  %vm476 = vweird.f32 %v469
  %vm477 = vmor %vm475, %vm476
  %v478 = vsel %vm477, %v469, %v474
  %v479 = vrsqrt.pop %v448
  %v480 = vmul.f32 %v479, %v448
  %v481 = vmul.f32 %v480, %v479
  %v482 = vmul.f32 0.5, %v481
  %v483 = vsub.f32 1.5, %v482
  %v484 = vmul.f32 %v479, %v483
  %vm485 = vweird.f32 %v448
  %vm486 = vweird.f32 %v479
  %vm487 = vmor %vm485, %vm486
  %v488 = vsel %vm487, %v479, %v484
  %v489 = vmul.f32 %v421, %v458
  %v490 = vmul.f32 %v422, %v468
  %v491 = vmul.f32 %v423, %v478
  %v492 = vmul.f32 %v424, %v488
  %v493 = vld [vmem:[%s2] sm:$0xff]
  %v494 = vld [vmem:[%s2 + $0x8] sm:$0xff]
  %v495 = vld [vmem:[%s2 + $0x10] sm:$0xff]
  %v496 = vld [vmem:[%s2 + $0x18] sm:$0xff]
  %498 = vset.pattern.permute.xlu0 0
  %499 = vperm.xlu0 %498, %v493
  %v500 = vpop.permute.xlu0 %499
  %503 = vset.pattern.permute.xlu0 0
  %504 = vperm.xlu0 %503, %v494
  %v505 = vpop.permute.xlu0 %504
  %508 = vset.pattern.permute.xlu0 0
  %509 = vperm.xlu0 %508, %v495
  %v510 = vpop.permute.xlu0 %509
  %513 = vset.pattern.permute.xlu0 0
  %514 = vperm.xlu0 %513, %v496
  %v515 = vpop.permute.xlu0 %514
  %v517 = vmul.f32 %v489, %v500
  %v518 = vmul.f32 %v490, %v505
  %v519 = vmul.f32 %v491, %v510
  %v520 = vmul.f32 %v492, %v515
  %v521 = vld [vmem:[%s3] sm:$0xff]
  %v522 = vld [vmem:[%s3 + $0x8] sm:$0xff]
  %v523 = vld [vmem:[%s3 + $0x10] sm:$0xff]
  %v524 = vld [vmem:[%s3 + $0x18] sm:$0xff]
  %526 = vset.pattern.permute.xlu0 0
  %527 = vperm.xlu0 %526, %v521
  %v528 = vpop.permute.xlu0 %527
  %531 = vset.pattern.permute.xlu0 0
  %532 = vperm.xlu0 %531, %v522
  %v533 = vpop.permute.xlu0 %532
  %536 = vset.pattern.permute.xlu0 0
  %537 = vperm.xlu0 %536, %v523
  %v538 = vpop.permute.xlu0 %537
  %541 = vset.pattern.permute.xlu0 0
  %542 = vperm.xlu0 %541, %v524
  %v543 = vpop.permute.xlu0 %542
  %v545 = vadd.f32 %v517, %v528
  %v546 = vadd.f32 %v518, %v533
  %v547 = vadd.f32 %v519, %v538
  %v548 = vadd.f32 %v520, %v543
  %v549 = vmax.f32 %v545, 0.0
  %v550 = vmax.f32 %v546, 0.0
  %v551 = vmax.f32 %v547, 0.0
  %v552 = vmax.f32 %v548, 0.0
  %v553 = vpack.c.bf16 %v549, %v549
  %v554 = vpack.c.bf16 %v550, %v550
  %v555 = vpack.c.bf16 %v551, %v551
  %v556 = vpack.c.bf16 %v552, %v552
  %vm557 = vcmask 404480
  %558 = vst.msk [vmem:[%s4] sm:$0xf] %vm557, %v553
  %559 = vst.msk [vmem:[%s4 + $0x4] sm:$0xf] %vm557, %v554
  %560 = vst.msk [vmem:[%s4 + $0x8] sm:$0xf] %vm557, %v555
  %561 = vst.msk [vmem:[%s4 + $0xc] sm:$0xf] %vm557, %v556
  // Predicated region
  $region18: #{lstm_policy_forward.8} parent=0 // pred_check
    _
  $region19: #{lstm_policy_forward.8} parent=0 // pred_check_branch
    %563 = sbr.rel (0) target = $region21
  $region20: #{lstm_policy_forward.8} parent=0 // pred_region
    _
  $region21: #{lstm_policy_forward.8} parent=0 // pred_fallthru
    _
  // Predicated region
  $region22: #{lstm_policy_forward.8} parent=0 // pred_check
    _
  $region23: #{lstm_policy_forward.8} parent=0 // pred_check_branch
    %565 = sbr.rel (0) target = $region25
  $region24: #{lstm_policy_forward.8} parent=0 // pred_region
    _
  $region25: #{lstm_policy_forward.8} parent=0 // pred_fallthru
    _

// kernel: lstm_policy_forward.9
$region0: #{lstm_policy_forward.9}
  #allocation0 [shape = 'u32[]', space=smem, size = 0x4, offset = 0x4, fixed_abs, tag = 'smem constant byte address 0x4 - core index']
  #allocation1 [shape = 'u32[72,128]{1,0:T(1,128)}', space=vmem, size = 0x9000, scoped, tag = 'internal scratch']
  %s0 = inlined_call_operand.vmem [shape: bf16[2,928], index: 0, kind: input, shape index: {}]
  %s1 = inlined_call_operand.vmem [shape: f32[2,128], index: 1, kind: input, shape index: {}]
  %s2 = inlined_call_operand.vmem [shape: bf16[928,512], index: 2, kind: input, shape index: {}]
  %s3 = inlined_call_operand.vmem [shape: f32[1,512], index: 3, kind: input, shape index: {}]
  %s4 = inlined_call_operand.vmem [shape: bf16[128,128], index: 4, kind: input, shape index: {}]
  %s5 = inlined_call_operand.vmem [shape: f32[1,128], index: 5, kind: input, shape index: {}]
  %s6 = inlined_call_operand.vmem [shape: f32[2,128], index: 6, kind: output, shape index: {0}]
  %s7 = inlined_call_operand.hbm [shape: f32[2,128], index: 7, kind: output, shape index: {1}]
  %s8 = inlined_call_operand.hbm [shape: f32[2,128], index: 8, kind: output, shape index: {2}]
  %9 = xla_tuple %s6, %s7, %s8
  %s10 = sld [smem:[#allocation0]]
  $region50: #{lstm_policy_forward.9} parent=0
    _
  %s12 = ssub.s32 1, %s10
  %s13 = scalar_select 0, %s12, %s10
  $region1: #{lstm_policy_forward.9} parent=0
    #allocation2 [shape = 'u8[1024]{0}', space=vmem, size = 0x400, scoped, tag = 'output window, operand 1, single buffered']
    #allocation3 [shape = 's32[1]{0}', space=sflag, size = 0x4, scoped, tag = 'scoped memory for lstm_policy_forward.9']
    #allocation4 [shape = 'u8[1024]{0}', space=vmem, size = 0x400, scoped, tag = 'output window, operand 2, single buffered']
    #allocation5 [shape = 's32[1]{0}', space=sflag, size = 0x4, scoped, tag = 'scoped memory for lstm_policy_forward.9']
    %14 = vsyncpa [#allocation3], 0
    %15 = vsyncpa [#allocation5], 0
    // Predicated region
    $region2: #{lstm_policy_forward.9} parent=1 // pred_check
      _
    $region3: #{lstm_policy_forward.9} parent=1 // pred_check_branch
      %17 = sbr.rel (0) target = $region5
    $region4: #{lstm_policy_forward.9} parent=1 // pred_region
      _
    $region5: #{lstm_policy_forward.9} parent=1 // pred_fallthru
      _
    // Predicated region
    $region6: #{lstm_policy_forward.9} parent=1 // pred_check
      _
    $region7: #{lstm_policy_forward.9} parent=1 // pred_check_branch
      %19 = sbr.rel (0) target = $region9
    $region8: #{lstm_policy_forward.9} parent=1 // pred_region
      _
    $region9: #{lstm_policy_forward.9} parent=1 // pred_fallthru
      _
    // Predicated region
    $region10: #{lstm_policy_forward.9} parent=1 // pred_check
      _
    $region11: #{lstm_policy_forward.9} parent=1 // pred_check_branch
      %21 = sbr.rel (0) target = $region13
    $region12: #{lstm_policy_forward.9} parent=1 // pred_region
      _
    $region13: #{lstm_policy_forward.9} parent=1 // pred_fallthru
      _
    // Predicated region
    $region14: #{lstm_policy_forward.9} parent=1 // pred_check
      _
    $region15: #{lstm_policy_forward.9} parent=1 // pred_check_branch
      %23 = sbr.rel (0) target = $region17
    $region16: #{lstm_policy_forward.9} parent=1 // pred_region
      _
    $region17: #{lstm_policy_forward.9} parent=1 // pred_fallthru
      _
    // Predicated region
    $region18: #{lstm_policy_forward.9} parent=1 // pred_check
      _
    $region19: #{lstm_policy_forward.9} parent=1 // pred_check_branch
      %25 = sbr.rel (0) target = $region21
    $region20: #{lstm_policy_forward.9} parent=1 // pred_region
      _
    $region21: #{lstm_policy_forward.9} parent=1 // pred_fallthru
      _
    // Predicated region
    $region22: #{lstm_policy_forward.9} parent=1 // pred_check
      _
    $region23: #{lstm_policy_forward.9} parent=1 // pred_check_branch
      %27 = sbr.rel (0) target = $region25
    $region24: #{lstm_policy_forward.9} parent=1 // pred_region
      _
    $region25: #{lstm_policy_forward.9} parent=1 // pred_fallthru
      _
    %v29 = vld [vmem:[%s0] sm:$0xff]
    %v30 = vld [vmem:[%s2] sm:$0xff]
    %v31 = vld [vmem:[%s2 + $0x8] sm:$0xff]
    %v32 = vld [vmem:[%s2 + $0x10] sm:$0xff]
    %v33 = vld [vmem:[%s2 + $0x18] sm:$0xff]
    %v34 = vld [vmem:[%s2 + $0x20] sm:$0xff]
    %v35 = vld [vmem:[%s2 + $0x28] sm:$0xff]
    %v36 = vld [vmem:[%s2 + $0x30] sm:$0xff]
    %v37 = vld [vmem:[%s2 + $0x38] sm:$0xff]
    %v38 = vld [vmem:[%s2 + $0x40] sm:$0xff]
    %v39 = vld [vmem:[%s2 + $0x48] sm:$0xff]
    %v40 = vld [vmem:[%s2 + $0x50] sm:$0xff]
    %v41 = vld [vmem:[%s2 + $0x58] sm:$0xff]
    %v42 = vld [vmem:[%s2 + $0x60] sm:$0xff]
    %v43 = vld [vmem:[%s2 + $0x68] sm:$0xff]
    %v44 = vld [vmem:[%s2 + $0x70] sm:$0xff]
    %v45 = vld [vmem:[%s2 + $0x78] sm:$0xff]
    %v46 = vld [vmem:[%s2 + $0x80] sm:$0xff]
    %v47 = vld [vmem:[%s2 + $0x88] sm:$0xff]
    %v48 = vld [vmem:[%s2 + $0x90] sm:$0xff]
    %v49 = vld [vmem:[%s2 + $0x98] sm:$0xff]
    %v50 = vld [vmem:[%s2 + $0xa0] sm:$0xff]
    %v51 = vld [vmem:[%s2 + $0xa8] sm:$0xff]
    %v52 = vld [vmem:[%s2 + $0xb0] sm:$0xff]
    %v53 = vld [vmem:[%s2 + $0xb8] sm:$0xff]
    %v54 = vld [vmem:[%s2 + $0xc0] sm:$0xff]
    %v55 = vld [vmem:[%s2 + $0xc8] sm:$0xff]
    %v56 = vld [vmem:[%s2 + $0xd0] sm:$0xff]
    %v57 = vld [vmem:[%s2 + $0xd8] sm:$0xff]
    %v58 = vld [vmem:[%s2 + $0xe0] sm:$0xff]
    %v59 = vld [vmem:[%s2 + $0xe8] sm:$0xff]
    %v60 = vld [vmem:[%s2 + $0xf0] sm:$0xff]
    %v61 = vld [vmem:[%s2 + $0xf8] sm:$0xff]
    %v62 = vld [vmem:[%s2 + $0x100] sm:$0xff]
    %v63 = vld [vmem:[%s2 + $0x108] sm:$0xff]
    %v64 = vld [vmem:[%s2 + $0x110] sm:$0xff]
    %v65 = vld [vmem:[%s2 + $0x118] sm:$0xff]
    %v66 = vld [vmem:[%s2 + $0x120] sm:$0xff]
    %v67 = vld [vmem:[%s2 + $0x128] sm:$0xff]
    %v68 = vld [vmem:[%s2 + $0x130] sm:$0xff]
    %v69 = vld [vmem:[%s2 + $0x138] sm:$0xff]
    %v70 = vld [vmem:[%s2 + $0x140] sm:$0xff]
    %v71 = vld [vmem:[%s2 + $0x148] sm:$0xff]
    %v72 = vld [vmem:[%s2 + $0x150] sm:$0xff]
    %v73 = vld [vmem:[%s2 + $0x158] sm:$0xff]
    %v74 = vld [vmem:[%s2 + $0x160] sm:$0xff]
    %v75 = vld [vmem:[%s2 + $0x168] sm:$0xff]
    %v76 = vld [vmem:[%s2 + $0x170] sm:$0xff]
    %v77 = vld [vmem:[%s2 + $0x178] sm:$0xff]
    %v78 = vld [vmem:[%s2 + $0x180] sm:$0xff]
    %v79 = vld [vmem:[%s2 + $0x188] sm:$0xff]
    %v80 = vld [vmem:[%s2 + $0x190] sm:$0xff]
    %v81 = vld [vmem:[%s2 + $0x198] sm:$0xff]
    %v82 = vld [vmem:[%s2 + $0x1a0] sm:$0xff]
    %v83 = vld [vmem:[%s2 + $0x1a8] sm:$0xff]
    %v84 = vld [vmem:[%s2 + $0x1b0] sm:$0xff]
    %v85 = vld [vmem:[%s2 + $0x1b8] sm:$0xff]
    %v86 = vld [vmem:[%s2 + $0x1c0] sm:$0xff]
    %v87 = vld [vmem:[%s2 + $0x1c8] sm:$0xff]
    %v88 = vld [vmem:[%s2 + $0x1d0] sm:$0xff]
    %v89 = vld [vmem:[%s2 + $0x1d8] sm:$0xff]
    %v90 = vld [vmem:[%s2 + $0x1e0] sm:$0xff]
    %v91 = vld [vmem:[%s2 + $0x1e8] sm:$0xff]
    %v92 = vld [vmem:[%s2 + $0x1f0] sm:$0xff]
    %v93 = vld [vmem:[%s2 + $0x1f8] sm:$0xff]
    %v94 = vld [vmem:[%s2 + $0x200] sm:$0xff]
    %v95 = vld [vmem:[%s2 + $0x208] sm:$0xff]
    %v96 = vld [vmem:[%s2 + $0x210] sm:$0xff]
    %v97 = vld [vmem:[%s2 + $0x218] sm:$0xff]
    %v98 = vld [vmem:[%s2 + $0x220] sm:$0xff]
    %v99 = vld [vmem:[%s2 + $0x228] sm:$0xff]
    %v100 = vld [vmem:[%s2 + $0x230] sm:$0xff]
    %v101 = vld [vmem:[%s2 + $0x238] sm:$0xff]
    %v102 = vld [vmem:[%s2 + $0x240] sm:$0xff]
    %v103 = vld [vmem:[%s2 + $0x248] sm:$0xff]
    %v104 = vld [vmem:[%s2 + $0x250] sm:$0xff]
    %v105 = vld [vmem:[%s2 + $0x258] sm:$0xff]
    %v106 = vld [vmem:[%s2 + $0x260] sm:$0xff]
    %v107 = vld [vmem:[%s2 + $0x268] sm:$0xff]
    %v108 = vld [vmem:[%s2 + $0x270] sm:$0xff]
    %v109 = vld [vmem:[%s2 + $0x278] sm:$0xff]
    %v110 = vld [vmem:[%s2 + $0x280] sm:$0xff]
    %v111 = vld [vmem:[%s2 + $0x288] sm:$0xff]
    %v112 = vld [vmem:[%s2 + $0x290] sm:$0xff]
    %v113 = vld [vmem:[%s2 + $0x298] sm:$0xff]
    %v114 = vld [vmem:[%s2 + $0x2a0] sm:$0xff]
    %v115 = vld [vmem:[%s2 + $0x2a8] sm:$0xff]
    %v116 = vld [vmem:[%s2 + $0x2b0] sm:$0xff]
    %v117 = vld [vmem:[%s2 + $0x2b8] sm:$0xff]
    %v118 = vld [vmem:[%s2 + $0x2c0] sm:$0xff]
    %v119 = vld [vmem:[%s2 + $0x2c8] sm:$0xff]
    %v120 = vld [vmem:[%s2 + $0x2d0] sm:$0xff]
    %v121 = vld [vmem:[%s2 + $0x2d8] sm:$0xff]
    %v122 = vld [vmem:[%s2 + $0x2e0] sm:$0xff]
    %v123 = vld [vmem:[%s2 + $0x2e8] sm:$0xff]
    %v124 = vld [vmem:[%s2 + $0x2f0] sm:$0xff]
    %v125 = vld [vmem:[%s2 + $0x2f8] sm:$0xff]
    %v126 = vld [vmem:[%s2 + $0x300] sm:$0xff]
    %v127 = vld [vmem:[%s2 + $0x308] sm:$0xff]
    %v128 = vld [vmem:[%s2 + $0x310] sm:$0xff]
    %v129 = vld [vmem:[%s2 + $0x318] sm:$0xff]
    %v130 = vld [vmem:[%s2 + $0x320] sm:$0xff]
    %v131 = vld [vmem:[%s2 + $0x328] sm:$0xff]
    %v132 = vld [vmem:[%s2 + $0x330] sm:$0xff]
    %v133 = vld [vmem:[%s2 + $0x338] sm:$0xff]
    %v134 = vld [vmem:[%s2 + $0x340] sm:$0xff]
    %v135 = vld [vmem:[%s2 + $0x348] sm:$0xff]
    %v136 = vld [vmem:[%s2 + $0x350] sm:$0xff]
    %v137 = vld [vmem:[%s2 + $0x358] sm:$0xff]
    %v138 = vld [vmem:[%s2 + $0x360] sm:$0xff]
    %v139 = vld [vmem:[%s2 + $0x368] sm:$0xff]
    %v140 = vld [vmem:[%s2 + $0x370] sm:$0xff]
    %v141 = vld [vmem:[%s2 + $0x378] sm:$0xff]
    %v142 = vld [vmem:[%s2 + $0x380] sm:$0xff]
    %v143 = vld [vmem:[%s2 + $0x388] sm:$0xff]
    %v144 = vld [vmem:[%s2 + $0x390] sm:$0xff]
    %v145 = vld [vmem:[%s2 + $0x398] sm:$0xff]
    %v146 = vld [vmem:[%s2 + $0x3a0] sm:$0xff]
    %v147 = vld [vmem:[%s2 + $0x3a8] sm:$0xff]
    %v148 = vld [vmem:[%s2 + $0x3b0] sm:$0xff]
    %v149 = vld [vmem:[%s2 + $0x3b8] sm:$0xff]
    %v150 = vld [vmem:[%s2 + $0x3c0] sm:$0xff]
    %v151 = vld [vmem:[%s2 + $0x3c8] sm:$0xff]
    %v152 = vld [vmem:[%s2 + $0x3d0] sm:$0xff]
    %v153 = vld [vmem:[%s2 + $0x3d8] sm:$0xff]
    %v154 = vld [vmem:[%s2 + $0x3e0] sm:$0xff]
    %v155 = vld [vmem:[%s2 + $0x3e8] sm:$0xff]
    %v156 = vld [vmem:[%s2 + $0x3f0] sm:$0xff]
    %v157 = vld [vmem:[%s2 + $0x3f8] sm:$0xff]
    %v158 = vld [vmem:[%s2 + $0x400] sm:$0xff]
    %v159 = vld [vmem:[%s2 + $0x408] sm:$0xff]
    %v160 = vld [vmem:[%s2 + $0x410] sm:$0xff]
    %v161 = vld [vmem:[%s2 + $0x418] sm:$0xff]
    %v162 = vld [vmem:[%s2 + $0x420] sm:$0xff]
    %v163 = vld [vmem:[%s2 + $0x428] sm:$0xff]
    %v164 = vld [vmem:[%s2 + $0x430] sm:$0xff]
    %v165 = vld [vmem:[%s2 + $0x438] sm:$0xff]
    %v166 = vld [vmem:[%s2 + $0x440] sm:$0xff]
    %v167 = vld [vmem:[%s2 + $0x448] sm:$0xff]
    %v168 = vld [vmem:[%s2 + $0x450] sm:$0xff]
    %v169 = vld [vmem:[%s2 + $0x458] sm:$0xff]
    %v170 = vld [vmem:[%s2 + $0x460] sm:$0xff]
    %v171 = vld [vmem:[%s2 + $0x468] sm:$0xff]
    %v172 = vld [vmem:[%s2 + $0x470] sm:$0xff]
    %v173 = vld [vmem:[%s2 + $0x478] sm:$0xff]
    %v174 = vld [vmem:[%s2 + $0x480] sm:$0xff]
    %v175 = vld [vmem:[%s2 + $0x488] sm:$0xff]
    %v176 = vld [vmem:[%s2 + $0x490] sm:$0xff]
    %v177 = vld [vmem:[%s2 + $0x498] sm:$0xff]
    %v178 = vld [vmem:[%s2 + $0x4a0] sm:$0xff]
    %v179 = vld [vmem:[%s2 + $0x4a8] sm:$0xff]
    %v180 = vld [vmem:[%s2 + $0x4b0] sm:$0xff]
    %v181 = vld [vmem:[%s2 + $0x4b8] sm:$0xff]
    %v182 = vld [vmem:[%s2 + $0x4c0] sm:$0xff]
    %v183 = vld [vmem:[%s2 + $0x4c8] sm:$0xff]
    %v184 = vld [vmem:[%s2 + $0x4d0] sm:$0xff]
    %v185 = vld [vmem:[%s2 + $0x4d8] sm:$0xff]
    %v186 = vld [vmem:[%s2 + $0x4e0] sm:$0xff]
    %v187 = vld [vmem:[%s2 + $0x4e8] sm:$0xff]
    %v188 = vld [vmem:[%s2 + $0x4f0] sm:$0xff]
    %v189 = vld [vmem:[%s2 + $0x4f8] sm:$0xff]
    %v190 = vld [vmem:[%s2 + $0x500] sm:$0xff]
    %v191 = vld [vmem:[%s2 + $0x508] sm:$0xff]
    %v192 = vld [vmem:[%s2 + $0x510] sm:$0xff]
    %v193 = vld [vmem:[%s2 + $0x518] sm:$0xff]
    %v194 = vld [vmem:[%s2 + $0x520] sm:$0xff]
    %v195 = vld [vmem:[%s2 + $0x528] sm:$0xff]
    %v196 = vld [vmem:[%s2 + $0x530] sm:$0xff]
    %v197 = vld [vmem:[%s2 + $0x538] sm:$0xff]
    %v198 = vld [vmem:[%s2 + $0x540] sm:$0xff]
    %v199 = vld [vmem:[%s2 + $0x548] sm:$0xff]
    %v200 = vld [vmem:[%s2 + $0x550] sm:$0xff]
    %v201 = vld [vmem:[%s2 + $0x558] sm:$0xff]
    %v202 = vld [vmem:[%s2 + $0x560] sm:$0xff]
    %v203 = vld [vmem:[%s2 + $0x568] sm:$0xff]
    %v204 = vld [vmem:[%s2 + $0x570] sm:$0xff]
    %v205 = vld [vmem:[%s2 + $0x578] sm:$0xff]
    %v206 = vld [vmem:[%s2 + $0x580] sm:$0xff]
    %v207 = vld [vmem:[%s2 + $0x588] sm:$0xff]
    %v208 = vld [vmem:[%s2 + $0x590] sm:$0xff]
    %v209 = vld [vmem:[%s2 + $0x598] sm:$0xff]
    %v210 = vld [vmem:[%s2 + $0x5a0] sm:$0xff]
    %v211 = vld [vmem:[%s2 + $0x5a8] sm:$0xff]
    %v212 = vld [vmem:[%s2 + $0x5b0] sm:$0xff]
    %v213 = vld [vmem:[%s2 + $0x5b8] sm:$0xff]
    %v214 = vld [vmem:[%s2 + $0x5c0] sm:$0xff]
    %v215 = vld [vmem:[%s2 + $0x5c8] sm:$0xff]
    %v216 = vld [vmem:[%s2 + $0x5d0] sm:$0xff]
    %v217 = vld [vmem:[%s2 + $0x5d8] sm:$0xff]
    %v218 = vld [vmem:[%s2 + $0x5e0] sm:$0xff]
    %v219 = vld [vmem:[%s2 + $0x5e8] sm:$0xff]
    %v220 = vld [vmem:[%s2 + $0x5f0] sm:$0xff]
    %v221 = vld [vmem:[%s2 + $0x5f8] sm:$0xff]
    %v222 = vld [vmem:[%s2 + $0x600] sm:$0xff]
    %v223 = vld [vmem:[%s2 + $0x608] sm:$0xff]
    %v224 = vld [vmem:[%s2 + $0x610] sm:$0xff]
    %v225 = vld [vmem:[%s2 + $0x618] sm:$0xff]
    %v226 = vld [vmem:[%s2 + $0x620] sm:$0xff]
    %v227 = vld [vmem:[%s2 + $0x628] sm:$0xff]
    %v228 = vld [vmem:[%s2 + $0x630] sm:$0xff]
    %v229 = vld [vmem:[%s2 + $0x638] sm:$0xff]
    %v230 = vld [vmem:[%s2 + $0x640] sm:$0xff]
    %v231 = vld [vmem:[%s2 + $0x648] sm:$0xff]
    %v232 = vld [vmem:[%s2 + $0x650] sm:$0xff]
    %v233 = vld [vmem:[%s2 + $0x658] sm:$0xff]
    %v234 = vld [vmem:[%s2 + $0x660] sm:$0xff]
    %v235 = vld [vmem:[%s2 + $0x668] sm:$0xff]
    %v236 = vld [vmem:[%s2 + $0x670] sm:$0xff]
    %v237 = vld [vmem:[%s2 + $0x678] sm:$0xff]
    %v238 = vld [vmem:[%s2 + $0x680] sm:$0xff]
    %v239 = vld [vmem:[%s2 + $0x688] sm:$0xff]
    %v240 = vld [vmem:[%s2 + $0x690] sm:$0xff]
    %v241 = vld [vmem:[%s2 + $0x698] sm:$0xff]
    %v242 = vld [vmem:[%s2 + $0x6a0] sm:$0xff]
    %v243 = vld [vmem:[%s2 + $0x6a8] sm:$0xff]
    %v244 = vld [vmem:[%s2 + $0x6b0] sm:$0xff]
    %v245 = vld [vmem:[%s2 + $0x6b8] sm:$0xff]
    %v246 = vld [vmem:[%s2 + $0x6c0] sm:$0xff]
    %v247 = vld [vmem:[%s2 + $0x6c8] sm:$0xff]
    %v248 = vld [vmem:[%s2 + $0x6d0] sm:$0xff]
    %v249 = vld [vmem:[%s2 + $0x6d8] sm:$0xff]
    %v250 = vld [vmem:[%s2 + $0x6e0] sm:$0xff]
    %v251 = vld [vmem:[%s2 + $0x6e8] sm:$0xff]
    %v252 = vld [vmem:[%s2 + $0x6f0] sm:$0xff]
    %v253 = vld [vmem:[%s2 + $0x6f8] sm:$0xff]
    %v254 = vld [vmem:[%s2 + $0x700] sm:$0xff]
    %v255 = vld [vmem:[%s2 + $0x708] sm:$0xff]
    %v256 = vld [vmem:[%s2 + $0x710] sm:$0xff]
    %v257 = vld [vmem:[%s2 + $0x718] sm:$0xff]
    %v258 = vld [vmem:[%s2 + $0x720] sm:$0xff]
    %v259 = vld [vmem:[%s2 + $0x728] sm:$0xff]
    %v260 = vld [vmem:[%s2 + $0x730] sm:$0xff]
    %v261 = vld [vmem:[%s2 + $0x738] sm:$0xff]
    %v262 = vld [vmem:[%s3] sm:$0xf]
    %v264 = vperm.slane %v262, 0
    %v265 = vperm.slane %v262, 1
    %v266 = vperm.slane %v262, 2
    %v267 = vperm.slane %v262, 3
    %273 = vst [vmem:[#allocation1] ss:$9 sm:$0xff] %v29
    %v274 = vld [vmem:[#allocation1] sm:$0xff]
    %v275 = vld [vmem:[#allocation1 + $0x9] sm:$0xff]
    %v276 = vld [vmem:[#allocation1 + $0x12] sm:$0xff]
    %v277 = vld [vmem:[#allocation1 + $0x1b] sm:$0xff]
    %v278 = vld [vmem:[#allocation1 + $0x24] sm:$0xff]
    %v279 = vld [vmem:[#allocation1 + $0x2d] sm:$0xff]
    %v280 = vld [vmem:[#allocation1 + $0x36] sm:$0xff]
    %v281 = vld [vmem:[#allocation1 + $0x3f] sm:$0xff]
    %v521 = vunpack.c.l.b16 %v30
    %v522 = vunpack.c.h.b16 %v30
    %v523 = vunpack.c.l.b16 %v31
    %v524 = vunpack.c.h.b16 %v31
    %v525 = vunpack.c.l.b16 %v32
    %v526 = vunpack.c.h.b16 %v32
    %v527 = vunpack.c.l.b16 %v33
    %v528 = vunpack.c.h.b16 %v33
    %v529 = vunpack.c.l.b16 %v34
    %v530 = vunpack.c.h.b16 %v34
    %v531 = vunpack.c.l.b16 %v35
    %v532 = vunpack.c.h.b16 %v35
    %v533 = vunpack.c.l.b16 %v36
    %v534 = vunpack.c.h.b16 %v36
    %v535 = vunpack.c.l.b16 %v37
    %v536 = vunpack.c.h.b16 %v37
    %v537 = vunpack.c.l.b16 %v38
    %v538 = vunpack.c.h.b16 %v38
    %v539 = vunpack.c.l.b16 %v39
    %v540 = vunpack.c.h.b16 %v39
    %v541 = vunpack.c.l.b16 %v40
    %v542 = vunpack.c.h.b16 %v40
    %v543 = vunpack.c.l.b16 %v41
    %v544 = vunpack.c.h.b16 %v41
    %v545 = vunpack.c.l.b16 %v42
    %v546 = vunpack.c.h.b16 %v42
    %v547 = vunpack.c.l.b16 %v43
    %v548 = vunpack.c.h.b16 %v43
    %v549 = vunpack.c.l.b16 %v44
    %v550 = vunpack.c.h.b16 %v44
    %v551 = vunpack.c.l.b16 %v45
    %v552 = vunpack.c.h.b16 %v45
    %v553 = vunpack.c.l.b16 %v46
    %v554 = vunpack.c.h.b16 %v46
    %v555 = vunpack.c.l.b16 %v47
    %v556 = vunpack.c.h.b16 %v47
    %v557 = vunpack.c.l.b16 %v48
    %v558 = vunpack.c.h.b16 %v48
    %v559 = vunpack.c.l.b16 %v49
    %v560 = vunpack.c.h.b16 %v49
    %v561 = vunpack.c.l.b16 %v50
    %v562 = vunpack.c.h.b16 %v50
    %v563 = vunpack.c.l.b16 %v51
    %v564 = vunpack.c.h.b16 %v51
    %v565 = vunpack.c.l.b16 %v52
    %v566 = vunpack.c.h.b16 %v52
    %v567 = vunpack.c.l.b16 %v53
    %v568 = vunpack.c.h.b16 %v53
    %v569 = vunpack.c.l.b16 %v54
    %v570 = vunpack.c.h.b16 %v54
    %v571 = vunpack.c.l.b16 %v55
    %v572 = vunpack.c.h.b16 %v55
    %v573 = vunpack.c.l.b16 %v56
    %v574 = vunpack.c.h.b16 %v56
    %v575 = vunpack.c.l.b16 %v57
    %v576 = vunpack.c.h.b16 %v57
    %v577 = vunpack.c.l.b16 %v58
    %v578 = vunpack.c.h.b16 %v58
    %v579 = vunpack.c.l.b16 %v59
    %v580 = vunpack.c.h.b16 %v59
    %v581 = vunpack.c.l.b16 %v60
    %v582 = vunpack.c.h.b16 %v60
    %v583 = vunpack.c.l.b16 %v61
    %v584 = vunpack.c.h.b16 %v61
    %v585 = vunpack.c.l.b16 %v62
    %v586 = vunpack.c.h.b16 %v62
    %v587 = vunpack.c.l.b16 %v63
    %v588 = vunpack.c.h.b16 %v63
    %v589 = vunpack.c.l.b16 %v64
    %v590 = vunpack.c.h.b16 %v64
    %v591 = vunpack.c.l.b16 %v65
    %v592 = vunpack.c.h.b16 %v65
    %v593 = vunpack.c.l.b16 %v66
    %v594 = vunpack.c.h.b16 %v66
    %v595 = vunpack.c.l.b16 %v67
    %v596 = vunpack.c.h.b16 %v67
    %v597 = vunpack.c.l.b16 %v68
    %v598 = vunpack.c.h.b16 %v68
    %v599 = vunpack.c.l.b16 %v69
    %v600 = vunpack.c.h.b16 %v69
    %v601 = vunpack.c.l.b16 %v70
    %v602 = vunpack.c.h.b16 %v70
    %v603 = vunpack.c.l.b16 %v71
    %v604 = vunpack.c.h.b16 %v71
    %v605 = vunpack.c.l.b16 %v72
    %v606 = vunpack.c.h.b16 %v72
    %v607 = vunpack.c.l.b16 %v73
    %v608 = vunpack.c.h.b16 %v73
    %v609 = vunpack.c.l.b16 %v74
    %v610 = vunpack.c.h.b16 %v74
    %v611 = vunpack.c.l.b16 %v75
    %v612 = vunpack.c.h.b16 %v75
    %v613 = vunpack.c.l.b16 %v76
    %v614 = vunpack.c.h.b16 %v76
    %v615 = vunpack.c.l.b16 %v77
    %v616 = vunpack.c.h.b16 %v77
    %v617 = vunpack.c.l.b16 %v78
    %v618 = vunpack.c.h.b16 %v78
    %v619 = vunpack.c.l.b16 %v79
    %v620 = vunpack.c.h.b16 %v79
    %v621 = vunpack.c.l.b16 %v80
    %v622 = vunpack.c.h.b16 %v80
    %v623 = vunpack.c.l.b16 %v81
    %v624 = vunpack.c.h.b16 %v81
    %v625 = vunpack.c.l.b16 %v82
    %v626 = vunpack.c.h.b16 %v82
    %v627 = vunpack.c.l.b16 %v83
    %v628 = vunpack.c.h.b16 %v83
    %v629 = vunpack.c.l.b16 %v84
    %v630 = vunpack.c.h.b16 %v84
    %v631 = vunpack.c.l.b16 %v85
    %v632 = vunpack.c.h.b16 %v85
    %v633 = vunpack.c.l.b16 %v86
    %v634 = vunpack.c.h.b16 %v86
    %v635 = vunpack.c.l.b16 %v87
    %v636 = vunpack.c.h.b16 %v87
    %v637 = vunpack.c.l.b16 %v88
    %v638 = vunpack.c.h.b16 %v88
    %v639 = vunpack.c.l.b16 %v89
    %v640 = vunpack.c.h.b16 %v89
    %v641 = vunpack.c.l.b16 %v90
    %v642 = vunpack.c.h.b16 %v90
    %v643 = vunpack.c.l.b16 %v91
    %v644 = vunpack.c.h.b16 %v91
    %v645 = vunpack.c.l.b16 %v92
    %v646 = vunpack.c.h.b16 %v92
    %v647 = vunpack.c.l.b16 %v93
    %v648 = vunpack.c.h.b16 %v93
    %v649 = vunpack.c.l.b16 %v94
    %v650 = vunpack.c.h.b16 %v94
    %v651 = vunpack.c.l.b16 %v95
    %v652 = vunpack.c.h.b16 %v95
    %v653 = vunpack.c.l.b16 %v96
    %v654 = vunpack.c.h.b16 %v96
    %v655 = vunpack.c.l.b16 %v97
    %v656 = vunpack.c.h.b16 %v97
    %v657 = vunpack.c.l.b16 %v98
    %v658 = vunpack.c.h.b16 %v98
    %v659 = vunpack.c.l.b16 %v99
    %v660 = vunpack.c.h.b16 %v99
    %v661 = vunpack.c.l.b16 %v100
    %v662 = vunpack.c.h.b16 %v100
    %v663 = vunpack.c.l.b16 %v101
    %v664 = vunpack.c.h.b16 %v101
    %v665 = vunpack.c.l.b16 %v102
    %v666 = vunpack.c.h.b16 %v102
    %v667 = vunpack.c.l.b16 %v103
    %v668 = vunpack.c.h.b16 %v103
    %v669 = vunpack.c.l.b16 %v104
    %v670 = vunpack.c.h.b16 %v104
    %v671 = vunpack.c.l.b16 %v105
    %v672 = vunpack.c.h.b16 %v105
    %v673 = vunpack.c.l.b16 %v106
    %v674 = vunpack.c.h.b16 %v106
    %v675 = vunpack.c.l.b16 %v107
    %v676 = vunpack.c.h.b16 %v107
    %v677 = vunpack.c.l.b16 %v108
    %v678 = vunpack.c.h.b16 %v108
    %v679 = vunpack.c.l.b16 %v109
    %v680 = vunpack.c.h.b16 %v109
    %v681 = vunpack.c.l.b16 %v110
    %v682 = vunpack.c.h.b16 %v110
    %v683 = vunpack.c.l.b16 %v111
    %v684 = vunpack.c.h.b16 %v111
    %v685 = vunpack.c.l.b16 %v112
    %v686 = vunpack.c.h.b16 %v112
    %v687 = vunpack.c.l.b16 %v113
    %v688 = vunpack.c.h.b16 %v113
    %v689 = vunpack.c.l.b16 %v114
    %v690 = vunpack.c.h.b16 %v114
    %v691 = vunpack.c.l.b16 %v115
    %v692 = vunpack.c.h.b16 %v115
    %v693 = vunpack.c.l.b16 %v116
    %v694 = vunpack.c.h.b16 %v116
    %v695 = vunpack.c.l.b16 %v117
    %v696 = vunpack.c.h.b16 %v117
    %v697 = vunpack.c.l.b16 %v118
    %v698 = vunpack.c.h.b16 %v118
    %v699 = vunpack.c.l.b16 %v119
    %v700 = vunpack.c.h.b16 %v119
    %v701 = vunpack.c.l.b16 %v120
    %v702 = vunpack.c.h.b16 %v120
    %v703 = vunpack.c.l.b16 %v121
    %v704 = vunpack.c.h.b16 %v121
    %v705 = vunpack.c.l.b16 %v122
    %v706 = vunpack.c.h.b16 %v122
    %v707 = vunpack.c.l.b16 %v123
    %v708 = vunpack.c.h.b16 %v123
    %v709 = vunpack.c.l.b16 %v124
    %v710 = vunpack.c.h.b16 %v124
    %v711 = vunpack.c.l.b16 %v125
    %v712 = vunpack.c.h.b16 %v125
    %v713 = vunpack.c.l.b16 %v126
    %v714 = vunpack.c.h.b16 %v126
    %v715 = vunpack.c.l.b16 %v127
    %v716 = vunpack.c.h.b16 %v127
    %v717 = vunpack.c.l.b16 %v128
    %v718 = vunpack.c.h.b16 %v128
    %v719 = vunpack.c.l.b16 %v129
    %v720 = vunpack.c.h.b16 %v129
    %v721 = vunpack.c.l.b16 %v130
    %v722 = vunpack.c.h.b16 %v130
    %v723 = vunpack.c.l.b16 %v131
    %v724 = vunpack.c.h.b16 %v131
    %v725 = vunpack.c.l.b16 %v132
    %v726 = vunpack.c.h.b16 %v132
    %v727 = vunpack.c.l.b16 %v133
    %v728 = vunpack.c.h.b16 %v133
    %v729 = vunpack.c.l.b16 %v134
    %v730 = vunpack.c.h.b16 %v134
    %v731 = vunpack.c.l.b16 %v135
    %v732 = vunpack.c.h.b16 %v135
    %v733 = vunpack.c.l.b16 %v136
    %v734 = vunpack.c.h.b16 %v136
    %v735 = vunpack.c.l.b16 %v137
    %v736 = vunpack.c.h.b16 %v137
    %v737 = vunpack.c.l.b16 %v138
    %v738 = vunpack.c.h.b16 %v138
    %v739 = vunpack.c.l.b16 %v139
    %v740 = vunpack.c.h.b16 %v139
    %v741 = vunpack.c.l.b16 %v140
    %v742 = vunpack.c.h.b16 %v140
    %v743 = vunpack.c.l.b16 %v141
    %v744 = vunpack.c.h.b16 %v141
    %v745 = vunpack.c.l.b16 %v142
    %v746 = vunpack.c.h.b16 %v142
    %v747 = vunpack.c.l.b16 %v143
    %v748 = vunpack.c.h.b16 %v143
    %v749 = vunpack.c.l.b16 %v144
    %v750 = vunpack.c.h.b16 %v144
    %v751 = vunpack.c.l.b16 %v145
    %v752 = vunpack.c.h.b16 %v145
    %v753 = vunpack.c.l.b16 %v146
    %v754 = vunpack.c.h.b16 %v146
    %v755 = vunpack.c.l.b16 %v147
    %v756 = vunpack.c.h.b16 %v147
    %v757 = vunpack.c.l.b16 %v148
    %v758 = vunpack.c.h.b16 %v148
    %v759 = vunpack.c.l.b16 %v149
    %v760 = vunpack.c.h.b16 %v149
    %v761 = vunpack.c.l.b16 %v150
    %v762 = vunpack.c.h.b16 %v150
    %v763 = vunpack.c.l.b16 %v151
    %v764 = vunpack.c.h.b16 %v151
    %v765 = vunpack.c.l.b16 %v152
    %v766 = vunpack.c.h.b16 %v152
    %v767 = vunpack.c.l.b16 %v153
    %v768 = vunpack.c.h.b16 %v153
    %v769 = vunpack.c.l.b16 %v154
    %v770 = vunpack.c.h.b16 %v154
    %v771 = vunpack.c.l.b16 %v155
    %v772 = vunpack.c.h.b16 %v155
    %v773 = vunpack.c.l.b16 %v156
    %v774 = vunpack.c.h.b16 %v156
    %v775 = vunpack.c.l.b16 %v157
    %v776 = vunpack.c.h.b16 %v157
    %v777 = vunpack.c.l.b16 %v158
    %v778 = vunpack.c.h.b16 %v158
    %v779 = vunpack.c.l.b16 %v159
    %v780 = vunpack.c.h.b16 %v159
    %v781 = vunpack.c.l.b16 %v160
    %v782 = vunpack.c.h.b16 %v160
    %v783 = vunpack.c.l.b16 %v161
    %v784 = vunpack.c.h.b16 %v161
    %v785 = vunpack.c.l.b16 %v162
    %v786 = vunpack.c.h.b16 %v162
    %v787 = vunpack.c.l.b16 %v163
    %v788 = vunpack.c.h.b16 %v163
    %v789 = vunpack.c.l.b16 %v164
    %v790 = vunpack.c.h.b16 %v164
    %v791 = vunpack.c.l.b16 %v165
    %v792 = vunpack.c.h.b16 %v165
    %v793 = vunpack.c.l.b16 %v166
    %v794 = vunpack.c.h.b16 %v166
    %v795 = vunpack.c.l.b16 %v167
    %v796 = vunpack.c.h.b16 %v167
    %v797 = vunpack.c.l.b16 %v168
    %v798 = vunpack.c.h.b16 %v168
    %v799 = vunpack.c.l.b16 %v169
    %v800 = vunpack.c.h.b16 %v169
    %v801 = vunpack.c.l.b16 %v170
    %v802 = vunpack.c.h.b16 %v170
    %v803 = vunpack.c.l.b16 %v171
    %v804 = vunpack.c.h.b16 %v171
    %v805 = vunpack.c.l.b16 %v172
    %v806 = vunpack.c.h.b16 %v172
    %v807 = vunpack.c.l.b16 %v173
    %v808 = vunpack.c.h.b16 %v173
    %v809 = vunpack.c.l.b16 %v174
    %v810 = vunpack.c.h.b16 %v174
    %v811 = vunpack.c.l.b16 %v175
    %v812 = vunpack.c.h.b16 %v175
    %v813 = vunpack.c.l.b16 %v176
    %v814 = vunpack.c.h.b16 %v176
    %v815 = vunpack.c.l.b16 %v177
    %v816 = vunpack.c.h.b16 %v177
    %v817 = vunpack.c.l.b16 %v178
    %v818 = vunpack.c.h.b16 %v178
    %v819 = vunpack.c.l.b16 %v179
    %v820 = vunpack.c.h.b16 %v179
    %v821 = vunpack.c.l.b16 %v180
    %v822 = vunpack.c.h.b16 %v180
    %v823 = vunpack.c.l.b16 %v181
    %v824 = vunpack.c.h.b16 %v181
    %v825 = vunpack.c.l.b16 %v182
    %v826 = vunpack.c.h.b16 %v182
    %v827 = vunpack.c.l.b16 %v183
    %v828 = vunpack.c.h.b16 %v183
    %v829 = vunpack.c.l.b16 %v184
    %v830 = vunpack.c.h.b16 %v184
    %v831 = vunpack.c.l.b16 %v185
    %v832 = vunpack.c.h.b16 %v185
    %v833 = vunpack.c.l.b16 %v186
    %v834 = vunpack.c.h.b16 %v186
    %v835 = vunpack.c.l.b16 %v187
    %v836 = vunpack.c.h.b16 %v187
    %v837 = vunpack.c.l.b16 %v188
    %v838 = vunpack.c.h.b16 %v188
    %v839 = vunpack.c.l.b16 %v189
    %v840 = vunpack.c.h.b16 %v189
    %v841 = vunpack.c.l.b16 %v190
    %v842 = vunpack.c.h.b16 %v190
    %v843 = vunpack.c.l.b16 %v191
    %v844 = vunpack.c.h.b16 %v191
    %v845 = vunpack.c.l.b16 %v192
    %v846 = vunpack.c.h.b16 %v192
    %v847 = vunpack.c.l.b16 %v193
    %v848 = vunpack.c.h.b16 %v193
    %v849 = vunpack.c.l.b16 %v194
    %v850 = vunpack.c.h.b16 %v194
    %v851 = vunpack.c.l.b16 %v195
    %v852 = vunpack.c.h.b16 %v195
    %v853 = vunpack.c.l.b16 %v196
    %v854 = vunpack.c.h.b16 %v196
    %v855 = vunpack.c.l.b16 %v197
    %v856 = vunpack.c.h.b16 %v197
    %v857 = vunpack.c.l.b16 %v198
    %v858 = vunpack.c.h.b16 %v198
    %v859 = vunpack.c.l.b16 %v199
    %v860 = vunpack.c.h.b16 %v199
    %v861 = vunpack.c.l.b16 %v200
    %v862 = vunpack.c.h.b16 %v200
    %v863 = vunpack.c.l.b16 %v201
    %v864 = vunpack.c.h.b16 %v201
    %v865 = vunpack.c.l.b16 %v202
    %v866 = vunpack.c.h.b16 %v202
    %v867 = vunpack.c.l.b16 %v203
    %v868 = vunpack.c.h.b16 %v203
    %v869 = vunpack.c.l.b16 %v204
    %v870 = vunpack.c.h.b16 %v204
    %v871 = vunpack.c.l.b16 %v205
    %v872 = vunpack.c.h.b16 %v205
    %v873 = vunpack.c.l.b16 %v206
    %v874 = vunpack.c.h.b16 %v206
    %v875 = vunpack.c.l.b16 %v207
    %v876 = vunpack.c.h.b16 %v207
    %v877 = vunpack.c.l.b16 %v208
    %v878 = vunpack.c.h.b16 %v208
    %v879 = vunpack.c.l.b16 %v209
    %v880 = vunpack.c.h.b16 %v209
    %v881 = vunpack.c.l.b16 %v210
    %v882 = vunpack.c.h.b16 %v210
    %v883 = vunpack.c.l.b16 %v211
    %v884 = vunpack.c.h.b16 %v211
    %v885 = vunpack.c.l.b16 %v212
    %v886 = vunpack.c.h.b16 %v212
    %v887 = vunpack.c.l.b16 %v213
    %v888 = vunpack.c.h.b16 %v213
    %v889 = vunpack.c.l.b16 %v214
    %v890 = vunpack.c.h.b16 %v214
    %v891 = vunpack.c.l.b16 %v215
    %v892 = vunpack.c.h.b16 %v215
    %v893 = vunpack.c.l.b16 %v216
    %v894 = vunpack.c.h.b16 %v216
    %v895 = vunpack.c.l.b16 %v217
    %v896 = vunpack.c.h.b16 %v217
    %v897 = vunpack.c.l.b16 %v218
    %v898 = vunpack.c.h.b16 %v218
    %v899 = vunpack.c.l.b16 %v219
    %v900 = vunpack.c.h.b16 %v219
    %v901 = vunpack.c.l.b16 %v220
    %v902 = vunpack.c.h.b16 %v220
    %v903 = vunpack.c.l.b16 %v221
    %v904 = vunpack.c.h.b16 %v221
    %v905 = vunpack.c.l.b16 %v222
    %v906 = vunpack.c.h.b16 %v222
    %v907 = vunpack.c.l.b16 %v223
    %v908 = vunpack.c.h.b16 %v223
    %v909 = vunpack.c.l.b16 %v224
    %v910 = vunpack.c.h.b16 %v224
    %v911 = vunpack.c.l.b16 %v225
    %v912 = vunpack.c.h.b16 %v225
    %v913 = vunpack.c.l.b16 %v226
    %v914 = vunpack.c.h.b16 %v226
    %v915 = vunpack.c.l.b16 %v227
    %v916 = vunpack.c.h.b16 %v227
    %v917 = vunpack.c.l.b16 %v228
    %v918 = vunpack.c.h.b16 %v228
    %v919 = vunpack.c.l.b16 %v229
    %v920 = vunpack.c.h.b16 %v229
    %v921 = vunpack.c.l.b16 %v230
    %v922 = vunpack.c.h.b16 %v230
    %v923 = vunpack.c.l.b16 %v231
    %v924 = vunpack.c.h.b16 %v231
    %v925 = vunpack.c.l.b16 %v232
    %v926 = vunpack.c.h.b16 %v232
    %v927 = vunpack.c.l.b16 %v233
    %v928 = vunpack.c.h.b16 %v233
    %v929 = vunpack.c.l.b16 %v234
    %v930 = vunpack.c.h.b16 %v234
    %v931 = vunpack.c.l.b16 %v235
    %v932 = vunpack.c.h.b16 %v235
    %v933 = vunpack.c.l.b16 %v236
    %v934 = vunpack.c.h.b16 %v236
    %v935 = vunpack.c.l.b16 %v237
    %v936 = vunpack.c.h.b16 %v237
    %v937 = vunpack.c.l.b16 %v238
    %v938 = vunpack.c.h.b16 %v238
    %v939 = vunpack.c.l.b16 %v239
    %v940 = vunpack.c.h.b16 %v239
    %v941 = vunpack.c.l.b16 %v240
    %v942 = vunpack.c.h.b16 %v240
    %v943 = vunpack.c.l.b16 %v241
    %v944 = vunpack.c.h.b16 %v241
    %v945 = vunpack.c.l.b16 %v242
    %v946 = vunpack.c.h.b16 %v242
    %v947 = vunpack.c.l.b16 %v243
    %v948 = vunpack.c.h.b16 %v243
    %v949 = vunpack.c.l.b16 %v244
    %v950 = vunpack.c.h.b16 %v244
    %v951 = vunpack.c.l.b16 %v245
    %v952 = vunpack.c.h.b16 %v245
    %v953 = vunpack.c.l.b16 %v246
    %v954 = vunpack.c.h.b16 %v246
    %v955 = vunpack.c.l.b16 %v247
    %v956 = vunpack.c.h.b16 %v247
    %v957 = vunpack.c.l.b16 %v248
    %v958 = vunpack.c.h.b16 %v248
    %v959 = vunpack.c.l.b16 %v249
    %v960 = vunpack.c.h.b16 %v249
    %v961 = vunpack.c.l.b16 %v250
    %v962 = vunpack.c.h.b16 %v250
    %v963 = vunpack.c.l.b16 %v251
    %v964 = vunpack.c.h.b16 %v251
    %v965 = vunpack.c.l.b16 %v252
    %v966 = vunpack.c.h.b16 %v252
    %v967 = vunpack.c.l.b16 %v253
    %v968 = vunpack.c.h.b16 %v253
    %v969 = vunpack.c.l.b16 %v254
    %v970 = vunpack.c.h.b16 %v254
    %v971 = vunpack.c.l.b16 %v255
    %v972 = vunpack.c.h.b16 %v255
    %v973 = vunpack.c.l.b16 %v256
    %v974 = vunpack.c.h.b16 %v256
    %v975 = vunpack.c.l.b16 %v257
    %v976 = vunpack.c.h.b16 %v257
    %v977 = vunpack.c.l.b16 %v258
    %v978 = vunpack.c.h.b16 %v258
    %v979 = vunpack.c.l.b16 %v259
    %v980 = vunpack.c.h.b16 %v259
    %v981 = vunpack.c.l.b16 %v260
    %v982 = vunpack.c.h.b16 %v260
    %v983 = vunpack.c.l.b16 %v261
    %v984 = vunpack.c.h.b16 %v261
    %v985 = vpack.c.b16 %v525, %v521
    %v986 = vpack.c.b16 %v526, %v522
    %v987 = vpack.c.b16 %v527, %v523
    %v988 = vpack.c.b16 %v528, %v524
    %v989 = vpack.c.b16 %v533, %v529
    %v990 = vpack.c.b16 %v534, %v530
    %v991 = vpack.c.b16 %v535, %v531
    %v992 = vpack.c.b16 %v536, %v532
    %v993 = vpack.c.b16 %v541, %v537
    %v994 = vpack.c.b16 %v542, %v538
    %v995 = vpack.c.b16 %v543, %v539
    %v996 = vpack.c.b16 %v544, %v540
    %v997 = vpack.c.b16 %v549, %v545
    %v998 = vpack.c.b16 %v550, %v546
    %v999 = vpack.c.b16 %v551, %v547
    %v1000 = vpack.c.b16 %v552, %v548
    %v1001 = vpack.c.b16 %v557, %v553
    %v1002 = vpack.c.b16 %v558, %v554
    %v1003 = vpack.c.b16 %v559, %v555
    %v1004 = vpack.c.b16 %v560, %v556
    %v1005 = vpack.c.b16 %v565, %v561
    %v1006 = vpack.c.b16 %v566, %v562
    %v1007 = vpack.c.b16 %v567, %v563
    %v1008 = vpack.c.b16 %v568, %v564
    %v1009 = vpack.c.b16 %v573, %v569
    %v1010 = vpack.c.b16 %v574, %v570
    %v1011 = vpack.c.b16 %v575, %v571
    %v1012 = vpack.c.b16 %v576, %v572
    %v1013 = vpack.c.b16 %v581, %v577
    %v1014 = vpack.c.b16 %v582, %v578
    %v1015 = vpack.c.b16 %v583, %v579
    %v1016 = vpack.c.b16 %v584, %v580
    %v1017 = vpack.c.b16 %v589, %v585
    %v1018 = vpack.c.b16 %v590, %v586
    %v1019 = vpack.c.b16 %v591, %v587
    %v1020 = vpack.c.b16 %v592, %v588
    %v1021 = vpack.c.b16 %v597, %v593
    %v1022 = vpack.c.b16 %v598, %v594
    %v1023 = vpack.c.b16 %v599, %v595
    %v1024 = vpack.c.b16 %v600, %v596
    %v1025 = vpack.c.b16 %v605, %v601
    %v1026 = vpack.c.b16 %v606, %v602
    %v1027 = vpack.c.b16 %v607, %v603
    %v1028 = vpack.c.b16 %v608, %v604
    %v1029 = vpack.c.b16 %v613, %v609
    %v1030 = vpack.c.b16 %v614, %v610
    %v1031 = vpack.c.b16 %v615, %v611
    %v1032 = vpack.c.b16 %v616, %v612
    %v1033 = vpack.c.b16 %v621, %v617
    %v1034 = vpack.c.b16 %v622, %v618
    %v1035 = vpack.c.b16 %v623, %v619
    %v1036 = vpack.c.b16 %v624, %v620
    %v1037 = vpack.c.b16 %v629, %v625
    %v1038 = vpack.c.b16 %v630, %v626
    %v1039 = vpack.c.b16 %v631, %v627
    %v1040 = vpack.c.b16 %v632, %v628
    %v1041 = vpack.c.b16 %v637, %v633
    %v1042 = vpack.c.b16 %v638, %v634
    %v1043 = vpack.c.b16 %v639, %v635
    %v1044 = vpack.c.b16 %v640, %v636
    %v1045 = vpack.c.b16 %v645, %v641
    %v1046 = vpack.c.b16 %v646, %v642
    %v1047 = vpack.c.b16 %v647, %v643
    %v1048 = vpack.c.b16 %v648, %v644
    %v1049 = vpack.c.b16 %v653, %v649
    %v1050 = vpack.c.b16 %v654, %v650
    %v1051 = vpack.c.b16 %v655, %v651
    %v1052 = vpack.c.b16 %v656, %v652
    %v1053 = vpack.c.b16 %v661, %v657
    %v1054 = vpack.c.b16 %v662, %v658
    %v1055 = vpack.c.b16 %v663, %v659
    %v1056 = vpack.c.b16 %v664, %v660
    %v1057 = vpack.c.b16 %v669, %v665
    %v1058 = vpack.c.b16 %v670, %v666
    %v1059 = vpack.c.b16 %v671, %v667
    %v1060 = vpack.c.b16 %v672, %v668
    %v1061 = vpack.c.b16 %v677, %v673
    %v1062 = vpack.c.b16 %v678, %v674
    %v1063 = vpack.c.b16 %v679, %v675
    %v1064 = vpack.c.b16 %v680, %v676
    %v1065 = vpack.c.b16 %v685, %v681
    %v1066 = vpack.c.b16 %v686, %v682
    %v1067 = vpack.c.b16 %v687, %v683
    %v1068 = vpack.c.b16 %v688, %v684
    %v1069 = vpack.c.b16 %v693, %v689
    %v1070 = vpack.c.b16 %v694, %v690
    %v1071 = vpack.c.b16 %v695, %v691
    %v1072 = vpack.c.b16 %v696, %v692
    %v1073 = vpack.c.b16 %v701, %v697
    %v1074 = vpack.c.b16 %v702, %v698
    %v1075 = vpack.c.b16 %v703, %v699
    %v1076 = vpack.c.b16 %v704, %v700
    %v1077 = vpack.c.b16 %v709, %v705
    %v1078 = vpack.c.b16 %v710, %v706
    %v1079 = vpack.c.b16 %v711, %v707
    %v1080 = vpack.c.b16 %v712, %v708
    %v1081 = vpack.c.b16 %v717, %v713
    %v1082 = vpack.c.b16 %v718, %v714
    %v1083 = vpack.c.b16 %v719, %v715
    %v1084 = vpack.c.b16 %v720, %v716
    %v1085 = vpack.c.b16 %v725, %v721
    %v1086 = vpack.c.b16 %v726, %v722
    %v1087 = vpack.c.b16 %v727, %v723
    %v1088 = vpack.c.b16 %v728, %v724
    %v1089 = vpack.c.b16 %v733, %v729
    %v1090 = vpack.c.b16 %v734, %v730
    %v1091 = vpack.c.b16 %v735, %v731
    %v1092 = vpack.c.b16 %v736, %v732
    %v1093 = vpack.c.b16 %v741, %v737
    %v1094 = vpack.c.b16 %v742, %v738
    %v1095 = vpack.c.b16 %v743, %v739
    %v1096 = vpack.c.b16 %v744, %v740
    %v1097 = vpack.c.b16 %v749, %v745
    %v1098 = vpack.c.b16 %v750, %v746
    %v1099 = vpack.c.b16 %v751, %v747
    %v1100 = vpack.c.b16 %v752, %v748
    %v1101 = vpack.c.b16 %v757, %v753
    %v1102 = vpack.c.b16 %v758, %v754
    %v1103 = vpack.c.b16 %v759, %v755
    %v1104 = vpack.c.b16 %v760, %v756
    %v1105 = vpack.c.b16 %v765, %v761
    %v1106 = vpack.c.b16 %v766, %v762
    %v1107 = vpack.c.b16 %v767, %v763
    %v1108 = vpack.c.b16 %v768, %v764
    %v1109 = vpack.c.b16 %v773, %v769
    %v1110 = vpack.c.b16 %v774, %v770
    %v1111 = vpack.c.b16 %v775, %v771
    %v1112 = vpack.c.b16 %v776, %v772
    %v1113 = vpack.c.b16 %v781, %v777
    %v1114 = vpack.c.b16 %v782, %v778
    %v1115 = vpack.c.b16 %v783, %v779
    %v1116 = vpack.c.b16 %v784, %v780
    %v1117 = vpack.c.b16 %v789, %v785
    %v1118 = vpack.c.b16 %v790, %v786
    %v1119 = vpack.c.b16 %v791, %v787
    %v1120 = vpack.c.b16 %v792, %v788
    %v1121 = vpack.c.b16 %v797, %v793
    %v1122 = vpack.c.b16 %v798, %v794
    %v1123 = vpack.c.b16 %v799, %v795
    %v1124 = vpack.c.b16 %v800, %v796
    %v1125 = vpack.c.b16 %v805, %v801
    %v1126 = vpack.c.b16 %v806, %v802
    %v1127 = vpack.c.b16 %v807, %v803
    %v1128 = vpack.c.b16 %v808, %v804
    %v1129 = vpack.c.b16 %v813, %v809
    %v1130 = vpack.c.b16 %v814, %v810
    %v1131 = vpack.c.b16 %v815, %v811
    %v1132 = vpack.c.b16 %v816, %v812
    %v1133 = vpack.c.b16 %v821, %v817
    %v1134 = vpack.c.b16 %v822, %v818
    %v1135 = vpack.c.b16 %v823, %v819
    %v1136 = vpack.c.b16 %v824, %v820
    %v1137 = vpack.c.b16 %v829, %v825
    %v1138 = vpack.c.b16 %v830, %v826
    %v1139 = vpack.c.b16 %v831, %v827
    %v1140 = vpack.c.b16 %v832, %v828
    %v1141 = vpack.c.b16 %v837, %v833
    %v1142 = vpack.c.b16 %v838, %v834
    %v1143 = vpack.c.b16 %v839, %v835
    %v1144 = vpack.c.b16 %v840, %v836
    %v1145 = vpack.c.b16 %v845, %v841
    %v1146 = vpack.c.b16 %v846, %v842
    %v1147 = vpack.c.b16 %v847, %v843
    %v1148 = vpack.c.b16 %v848, %v844
    %v1149 = vpack.c.b16 %v853, %v849
    %v1150 = vpack.c.b16 %v854, %v850
    %v1151 = vpack.c.b16 %v855, %v851
    %v1152 = vpack.c.b16 %v856, %v852
    %v1153 = vpack.c.b16 %v861, %v857
    %v1154 = vpack.c.b16 %v862, %v858
    %v1155 = vpack.c.b16 %v863, %v859
    %v1156 = vpack.c.b16 %v864, %v860
    %v1157 = vpack.c.b16 %v869, %v865
    %v1158 = vpack.c.b16 %v870, %v866
    %v1159 = vpack.c.b16 %v871, %v867
    %v1160 = vpack.c.b16 %v872, %v868
    %v1161 = vpack.c.b16 %v877, %v873
    %v1162 = vpack.c.b16 %v878, %v874
    %v1163 = vpack.c.b16 %v879, %v875
    %v1164 = vpack.c.b16 %v880, %v876
    %v1165 = vpack.c.b16 %v885, %v881
    %v1166 = vpack.c.b16 %v886, %v882
    %v1167 = vpack.c.b16 %v887, %v883
    %v1168 = vpack.c.b16 %v888, %v884
    %v1169 = vpack.c.b16 %v893, %v889
    %v1170 = vpack.c.b16 %v894, %v890
    %v1171 = vpack.c.b16 %v895, %v891
    %v1172 = vpack.c.b16 %v896, %v892
    %v1173 = vpack.c.b16 %v901, %v897
    %v1174 = vpack.c.b16 %v902, %v898
    %v1175 = vpack.c.b16 %v903, %v899
    %v1176 = vpack.c.b16 %v904, %v900
    %v1177 = vpack.c.b16 %v909, %v905
    %v1178 = vpack.c.b16 %v910, %v906
    %v1179 = vpack.c.b16 %v911, %v907
    %v1180 = vpack.c.b16 %v912, %v908
    %v1181 = vpack.c.b16 %v917, %v913
    %v1182 = vpack.c.b16 %v918, %v914
    %v1183 = vpack.c.b16 %v919, %v915
    %v1184 = vpack.c.b16 %v920, %v916
    %v1185 = vpack.c.b16 %v925, %v921
    %v1186 = vpack.c.b16 %v926, %v922
    %v1187 = vpack.c.b16 %v927, %v923
    %v1188 = vpack.c.b16 %v928, %v924
    %v1189 = vpack.c.b16 %v933, %v929
    %v1190 = vpack.c.b16 %v934, %v930
    %v1191 = vpack.c.b16 %v935, %v931
    %v1192 = vpack.c.b16 %v936, %v932
    %v1193 = vpack.c.b16 %v941, %v937
    %v1194 = vpack.c.b16 %v942, %v938
    %v1195 = vpack.c.b16 %v943, %v939
    %v1196 = vpack.c.b16 %v944, %v940
    %v1197 = vpack.c.b16 %v949, %v945
    %v1198 = vpack.c.b16 %v950, %v946
    %v1199 = vpack.c.b16 %v951, %v947
    %v1200 = vpack.c.b16 %v952, %v948
    %v1201 = vpack.c.b16 %v957, %v953
    %v1202 = vpack.c.b16 %v958, %v954
    %v1203 = vpack.c.b16 %v959, %v955
    %v1204 = vpack.c.b16 %v960, %v956
    %v1205 = vpack.c.b16 %v965, %v961
    %v1206 = vpack.c.b16 %v966, %v962
    %v1207 = vpack.c.b16 %v967, %v963
    %v1208 = vpack.c.b16 %v968, %v964
    %v1209 = vpack.c.b16 %v973, %v969
    %v1210 = vpack.c.b16 %v974, %v970
    %v1211 = vpack.c.b16 %v975, %v971
    %v1212 = vpack.c.b16 %v976, %v972
    %v1213 = vpack.c.b16 %v981, %v977
    %v1214 = vpack.c.b16 %v982, %v978
    %v1215 = vpack.c.b16 %v983, %v979
    %v1216 = vpack.c.b16 %v984, %v980
    %vm1449 = vcmask 261120
    %v1450 = vsel %vm1449, %v281, 0
    %1452 = vmatpush.bf16.msra.mxu0 %v1013
    %1453 = vmatpush.bf16.msra.mxu0 %v1009
    %1454 = vmatpush.bf16.msra.mxu0 %v1005
    %1455 = vmatpush.bf16.msra.mxu0 %v1001
    %1456 = vmatpush.bf16.msra.mxu0 %v997
    %1457 = vmatpush.bf16.msra.mxu0 %v993
    %1458 = vmatpush.bf16.msra.mxu0 %v989
    %1459 = vmatpush.bf16.msra.mxu0 %v985
    %1460 = vmatmul.bf16.gmra.mxu0 %v274
    %v1461 = vpop.f32.mrf.mxu0
    %v1462 = vadd.f32 %v264, %v1461
    %v1463 = vpop.f32.mrf.mxu0
    %1464 = vdwg.mxu0
    %1465 = vmatpush.bf16.msra.mxu0 %v1045
    %1466 = vmatpush.bf16.msra.mxu0 %v1041
    %1467 = vmatpush.bf16.msra.mxu0 %v1037
    %1468 = vmatpush.bf16.msra.mxu0 %v1033
    %1469 = vmatpush.bf16.msra.mxu0 %v1029
    %1470 = vmatpush.bf16.msra.mxu0 %v1025
    %1471 = vmatpush.bf16.msra.mxu0 %v1021
    %1472 = vmatpush.bf16.msra.mxu0 %v1017
    %1473 = vmatmul.bf16.gmra.mxu0 %v275
    %v1474 = vpop.f32.mrf.mxu0
    %v1475 = vadd.f32 %v1462, %v1474
    %v1476 = vpop.f32.mrf.mxu0
    %1477 = vdwg.mxu0
    %1478 = vmatpush.bf16.msra.mxu0 %v1077
    %1479 = vmatpush.bf16.msra.mxu0 %v1073
    %1480 = vmatpush.bf16.msra.mxu0 %v1069
    %1481 = vmatpush.bf16.msra.mxu0 %v1065
    %1482 = vmatpush.bf16.msra.mxu0 %v1061
    %1483 = vmatpush.bf16.msra.mxu0 %v1057
    %1484 = vmatpush.bf16.msra.mxu0 %v1053
    %1485 = vmatpush.bf16.msra.mxu0 %v1049
    %1486 = vmatmul.bf16.gmra.mxu0 %v276
    %v1487 = vpop.f32.mrf.mxu0
    %v1488 = vadd.f32 %v1475, %v1487
    %v1489 = vpop.f32.mrf.mxu0
    %1490 = vdwg.mxu0
    %1491 = vmatpush.bf16.msra.mxu0 %v1109
    %1492 = vmatpush.bf16.msra.mxu0 %v1105
    %1493 = vmatpush.bf16.msra.mxu0 %v1101
    %1494 = vmatpush.bf16.msra.mxu0 %v1097
    %1495 = vmatpush.bf16.msra.mxu0 %v1093
    %1496 = vmatpush.bf16.msra.mxu0 %v1089
    %1497 = vmatpush.bf16.msra.mxu0 %v1085
    %1498 = vmatpush.bf16.msra.mxu0 %v1081
    %1499 = vmatmul.bf16.gmra.mxu0 %v277
    %v1500 = vpop.f32.mrf.mxu0
    %v1501 = vadd.f32 %v1488, %v1500
    %v1502 = vpop.f32.mrf.mxu0
    %1503 = vdwg.mxu0
    %1504 = vmatpush.bf16.msra.mxu0 %v1141
    %1505 = vmatpush.bf16.msra.mxu0 %v1137
    %1506 = vmatpush.bf16.msra.mxu0 %v1133
    %1507 = vmatpush.bf16.msra.mxu0 %v1129
    %1508 = vmatpush.bf16.msra.mxu0 %v1125
    %1509 = vmatpush.bf16.msra.mxu0 %v1121
    %1510 = vmatpush.bf16.msra.mxu0 %v1117
    %1511 = vmatpush.bf16.msra.mxu0 %v1113
    %1512 = vmatmul.bf16.gmra.mxu0 %v278
    %v1513 = vpop.f32.mrf.mxu0
    %v1514 = vadd.f32 %v1501, %v1513
    %v1515 = vpop.f32.mrf.mxu0
    %1516 = vdwg.mxu0
    %1517 = vmatpush.bf16.msra.mxu0 %v1173
    %1518 = vmatpush.bf16.msra.mxu0 %v1169
    %1519 = vmatpush.bf16.msra.mxu0 %v1165
    %1520 = vmatpush.bf16.msra.mxu0 %v1161
    %1521 = vmatpush.bf16.msra.mxu0 %v1157
    %1522 = vmatpush.bf16.msra.mxu0 %v1153
    %1523 = vmatpush.bf16.msra.mxu0 %v1149
    %1524 = vmatpush.bf16.msra.mxu0 %v1145
    %1525 = vmatmul.bf16.gmra.mxu0 %v279
    %v1526 = vpop.f32.mrf.mxu0
    %v1527 = vadd.f32 %v1514, %v1526
    %v1528 = vpop.f32.mrf.mxu0
    %1529 = vdwg.mxu0
    %1530 = vmatpush.bf16.msra.mxu0 %v1205
    %1531 = vmatpush.bf16.msra.mxu0 %v1201
    %1532 = vmatpush.bf16.msra.mxu0 %v1197
    %1533 = vmatpush.bf16.msra.mxu0 %v1193
    %1534 = vmatpush.bf16.msra.mxu0 %v1189
    %1535 = vmatpush.bf16.msra.mxu0 %v1185
    %1536 = vmatpush.bf16.msra.mxu0 %v1181
    %1537 = vmatpush.bf16.msra.mxu0 %v1177
    %1538 = vmatmul.bf16.gmra.mxu0 %v280
    %v1539 = vpop.f32.mrf.mxu0
    %v1540 = vadd.f32 %v1527, %v1539
    %v1541 = vpop.f32.mrf.mxu0
    %1542 = vdwg.mxu0
    %1543 = vmatpush.bf16.msra.mxu0 0
    %1544 = vmatpush.bf16.msra.mxu0 0
    %1545 = vmatpush.bf16.msra.mxu0 0
    %1546 = vmatpush.bf16.msra.mxu0 0
    %1547 = vmatpush.bf16.msra.mxu0 0
    %1548 = vmatpush.bf16.msra.mxu0 0
    %1549 = vmatpush.bf16.msra.mxu0 %v1213
    %1550 = vmatpush.bf16.msra.mxu0 %v1209
    %1551 = vmatmul.bf16.gmra.mxu0 %v1450
    %v1552 = vpop.f32.mrf.mxu0
    %v1553 = vadd.f32 %v1540, %v1552
    %v1554 = vpop.f32.mrf.mxu0
    %1555 = vdwg.mxu0
    %1556 = vmatpush.bf16.msra.mxu0 %v1014
    %1557 = vmatpush.bf16.msra.mxu0 %v1010
    %1558 = vmatpush.bf16.msra.mxu0 %v1006
    %1559 = vmatpush.bf16.msra.mxu0 %v1002
    %1560 = vmatpush.bf16.msra.mxu0 %v998
    %1561 = vmatpush.bf16.msra.mxu0 %v994
    %1562 = vmatpush.bf16.msra.mxu0 %v990
    %1563 = vmatpush.bf16.msra.mxu0 %v986
    %1564 = vmatmul.bf16.gmra.mxu0 %v274
    %v1565 = vpop.f32.mrf.mxu0
    %v1566 = vadd.f32 %v265, %v1565
    %v1567 = vpop.f32.mrf.mxu0
    %1568 = vdwg.mxu0
    %1569 = vmatpush.bf16.msra.mxu0 %v1046
    %1570 = vmatpush.bf16.msra.mxu0 %v1042
    %1571 = vmatpush.bf16.msra.mxu0 %v1038
    %1572 = vmatpush.bf16.msra.mxu0 %v1034
    %1573 = vmatpush.bf16.msra.mxu0 %v1030
    %1574 = vmatpush.bf16.msra.mxu0 %v1026
    %1575 = vmatpush.bf16.msra.mxu0 %v1022
    %1576 = vmatpush.bf16.msra.mxu0 %v1018
    %1577 = vmatmul.bf16.gmra.mxu0 %v275
    %v1578 = vpop.f32.mrf.mxu0
    %v1579 = vadd.f32 %v1566, %v1578
    %v1580 = vpop.f32.mrf.mxu0
    %1581 = vdwg.mxu0
    %1582 = vmatpush.bf16.msra.mxu0 %v1078
    %1583 = vmatpush.bf16.msra.mxu0 %v1074
    %1584 = vmatpush.bf16.msra.mxu0 %v1070
    %1585 = vmatpush.bf16.msra.mxu0 %v1066
    %1586 = vmatpush.bf16.msra.mxu0 %v1062
    %1587 = vmatpush.bf16.msra.mxu0 %v1058
    %1588 = vmatpush.bf16.msra.mxu0 %v1054
    %1589 = vmatpush.bf16.msra.mxu0 %v1050
    %1590 = vmatmul.bf16.gmra.mxu0 %v276
    %v1591 = vpop.f32.mrf.mxu0
    %v1592 = vadd.f32 %v1579, %v1591
    %v1593 = vpop.f32.mrf.mxu0
    %1594 = vdwg.mxu0
    %1595 = vmatpush.bf16.msra.mxu0 %v1110
    %1596 = vmatpush.bf16.msra.mxu0 %v1106
    %1597 = vmatpush.bf16.msra.mxu0 %v1102
    %1598 = vmatpush.bf16.msra.mxu0 %v1098
    %1599 = vmatpush.bf16.msra.mxu0 %v1094
    %1600 = vmatpush.bf16.msra.mxu0 %v1090
    %1601 = vmatpush.bf16.msra.mxu0 %v1086
    %1602 = vmatpush.bf16.msra.mxu0 %v1082
    %1603 = vmatmul.bf16.gmra.mxu0 %v277
    %v1604 = vpop.f32.mrf.mxu0
    %v1605 = vadd.f32 %v1592, %v1604
    %v1606 = vpop.f32.mrf.mxu0
    %1607 = vdwg.mxu0
    %1608 = vmatpush.bf16.msra.mxu0 %v1142
    %1609 = vmatpush.bf16.msra.mxu0 %v1138
    %1610 = vmatpush.bf16.msra.mxu0 %v1134
    %1611 = vmatpush.bf16.msra.mxu0 %v1130
    %1612 = vmatpush.bf16.msra.mxu0 %v1126
    %1613 = vmatpush.bf16.msra.mxu0 %v1122
    %1614 = vmatpush.bf16.msra.mxu0 %v1118
    %1615 = vmatpush.bf16.msra.mxu0 %v1114
    %1616 = vmatmul.bf16.gmra.mxu0 %v278
    %v1617 = vpop.f32.mrf.mxu0
    %v1618 = vadd.f32 %v1605, %v1617
    %v1619 = vpop.f32.mrf.mxu0
    %1620 = vdwg.mxu0
    %1621 = vmatpush.bf16.msra.mxu0 %v1174
    %1622 = vmatpush.bf16.msra.mxu0 %v1170
    %1623 = vmatpush.bf16.msra.mxu0 %v1166
    %1624 = vmatpush.bf16.msra.mxu0 %v1162
    %1625 = vmatpush.bf16.msra.mxu0 %v1158
    %1626 = vmatpush.bf16.msra.mxu0 %v1154
    %1627 = vmatpush.bf16.msra.mxu0 %v1150
    %1628 = vmatpush.bf16.msra.mxu0 %v1146
    %1629 = vmatmul.bf16.gmra.mxu0 %v279
    %v1630 = vpop.f32.mrf.mxu0
    %v1631 = vadd.f32 %v1618, %v1630
    %v1632 = vpop.f32.mrf.mxu0
    %1633 = vdwg.mxu0
    %1634 = vmatpush.bf16.msra.mxu0 %v1206
    %1635 = vmatpush.bf16.msra.mxu0 %v1202
    %1636 = vmatpush.bf16.msra.mxu0 %v1198
    %1637 = vmatpush.bf16.msra.mxu0 %v1194
    %1638 = vmatpush.bf16.msra.mxu0 %v1190
    %1639 = vmatpush.bf16.msra.mxu0 %v1186
    %1640 = vmatpush.bf16.msra.mxu0 %v1182
    %1641 = vmatpush.bf16.msra.mxu0 %v1178
    %1642 = vmatmul.bf16.gmra.mxu0 %v280
    %v1643 = vpop.f32.mrf.mxu0
    %v1644 = vadd.f32 %v1631, %v1643
    %v1645 = vpop.f32.mrf.mxu0
    %1646 = vdwg.mxu0
    %1647 = vmatpush.bf16.msra.mxu0 0
    %1648 = vmatpush.bf16.msra.mxu0 0
    %1649 = vmatpush.bf16.msra.mxu0 0
    %1650 = vmatpush.bf16.msra.mxu0 0
    %1651 = vmatpush.bf16.msra.mxu0 0
    %1652 = vmatpush.bf16.msra.mxu0 0
    %1653 = vmatpush.bf16.msra.mxu0 %v1214
    %1654 = vmatpush.bf16.msra.mxu0 %v1210
    %1655 = vmatmul.bf16.gmra.mxu0 %v1450
    %v1656 = vpop.f32.mrf.mxu0
    %v1657 = vadd.f32 %v1644, %v1656
    %v1658 = vpop.f32.mrf.mxu0
    %1659 = vdwg.mxu0
    %1660 = vmatpush.bf16.msra.mxu0 %v1015
    %1661 = vmatpush.bf16.msra.mxu0 %v1011
    %1662 = vmatpush.bf16.msra.mxu0 %v1007
    %1663 = vmatpush.bf16.msra.mxu0 %v1003
    %1664 = vmatpush.bf16.msra.mxu0 %v999
    %1665 = vmatpush.bf16.msra.mxu0 %v995
    %1666 = vmatpush.bf16.msra.mxu0 %v991
    %1667 = vmatpush.bf16.msra.mxu0 %v987
    %1668 = vmatmul.bf16.gmra.mxu0 %v274
    %v1669 = vpop.f32.mrf.mxu0
    %v1670 = vadd.f32 %v266, %v1669
    %v1671 = vpop.f32.mrf.mxu0
    %1672 = vdwg.mxu0
    %1673 = vmatpush.bf16.msra.mxu0 %v1047
    %1674 = vmatpush.bf16.msra.mxu0 %v1043
    %1675 = vmatpush.bf16.msra.mxu0 %v1039
    %1676 = vmatpush.bf16.msra.mxu0 %v1035
    %1677 = vmatpush.bf16.msra.mxu0 %v1031
    %1678 = vmatpush.bf16.msra.mxu0 %v1027
    %1679 = vmatpush.bf16.msra.mxu0 %v1023
    %1680 = vmatpush.bf16.msra.mxu0 %v1019
    %1681 = vmatmul.bf16.gmra.mxu0 %v275
    %v1682 = vpop.f32.mrf.mxu0
    %v1683 = vadd.f32 %v1670, %v1682
    %v1684 = vpop.f32.mrf.mxu0
    %1685 = vdwg.mxu0
    %1686 = vmatpush.bf16.msra.mxu0 %v1079
    %1687 = vmatpush.bf16.msra.mxu0 %v1075
    %1688 = vmatpush.bf16.msra.mxu0 %v1071
    %1689 = vmatpush.bf16.msra.mxu0 %v1067
    %1690 = vmatpush.bf16.msra.mxu0 %v1063
    %1691 = vmatpush.bf16.msra.mxu0 %v1059
    %1692 = vmatpush.bf16.msra.mxu0 %v1055
    %1693 = vmatpush.bf16.msra.mxu0 %v1051
    %1694 = vmatmul.bf16.gmra.mxu0 %v276
    %v1695 = vpop.f32.mrf.mxu0
    %v1696 = vadd.f32 %v1683, %v1695
    %v1697 = vpop.f32.mrf.mxu0
    %1698 = vdwg.mxu0
    %1699 = vmatpush.bf16.msra.mxu0 %v1111
    %1700 = vmatpush.bf16.msra.mxu0 %v1107
    %1701 = vmatpush.bf16.msra.mxu0 %v1103
    %1702 = vmatpush.bf16.msra.mxu0 %v1099
    %1703 = vmatpush.bf16.msra.mxu0 %v1095
    %1704 = vmatpush.bf16.msra.mxu0 %v1091
    %1705 = vmatpush.bf16.msra.mxu0 %v1087
    %1706 = vmatpush.bf16.msra.mxu0 %v1083
    %1707 = vmatmul.bf16.gmra.mxu0 %v277
    %v1708 = vpop.f32.mrf.mxu0
    %v1709 = vadd.f32 %v1696, %v1708
    %v1710 = vpop.f32.mrf.mxu0
    %1711 = vdwg.mxu0
    %1712 = vmatpush.bf16.msra.mxu0 %v1143
    %1713 = vmatpush.bf16.msra.mxu0 %v1139
    %1714 = vmatpush.bf16.msra.mxu0 %v1135
    %1715 = vmatpush.bf16.msra.mxu0 %v1131
    %1716 = vmatpush.bf16.msra.mxu0 %v1127
    %1717 = vmatpush.bf16.msra.mxu0 %v1123
    %1718 = vmatpush.bf16.msra.mxu0 %v1119
    %1719 = vmatpush.bf16.msra.mxu0 %v1115
    %1720 = vmatmul.bf16.gmra.mxu0 %v278
    %v1721 = vpop.f32.mrf.mxu0
    %v1722 = vadd.f32 %v1709, %v1721
    %v1723 = vpop.f32.mrf.mxu0
    %1724 = vdwg.mxu0
    %1725 = vmatpush.bf16.msra.mxu0 %v1175
    %1726 = vmatpush.bf16.msra.mxu0 %v1171
    %1727 = vmatpush.bf16.msra.mxu0 %v1167
    %1728 = vmatpush.bf16.msra.mxu0 %v1163
    %1729 = vmatpush.bf16.msra.mxu0 %v1159
    %1730 = vmatpush.bf16.msra.mxu0 %v1155
    %1731 = vmatpush.bf16.msra.mxu0 %v1151
    %1732 = vmatpush.bf16.msra.mxu0 %v1147
    %1733 = vmatmul.bf16.gmra.mxu0 %v279
    %v1734 = vpop.f32.mrf.mxu0
    %v1735 = vadd.f32 %v1722, %v1734
    %v1736 = vpop.f32.mrf.mxu0
    %1737 = vdwg.mxu0
    %1738 = vmatpush.bf16.msra.mxu0 %v1207
    %1739 = vmatpush.bf16.msra.mxu0 %v1203
    %1740 = vmatpush.bf16.msra.mxu0 %v1199
    %1741 = vmatpush.bf16.msra.mxu0 %v1195
    %1742 = vmatpush.bf16.msra.mxu0 %v1191
    %1743 = vmatpush.bf16.msra.mxu0 %v1187
    %1744 = vmatpush.bf16.msra.mxu0 %v1183
    %1745 = vmatpush.bf16.msra.mxu0 %v1179
    %1746 = vmatmul.bf16.gmra.mxu0 %v280
    %v1747 = vpop.f32.mrf.mxu0
    %v1748 = vadd.f32 %v1735, %v1747
    %v1749 = vpop.f32.mrf.mxu0
    %1750 = vdwg.mxu0
    %1751 = vmatpush.bf16.msra.mxu0 0
    %1752 = vmatpush.bf16.msra.mxu0 0
    %1753 = vmatpush.bf16.msra.mxu0 0
    %1754 = vmatpush.bf16.msra.mxu0 0
    %1755 = vmatpush.bf16.msra.mxu0 0
    %1756 = vmatpush.bf16.msra.mxu0 0
    %1757 = vmatpush.bf16.msra.mxu0 %v1215
    %1758 = vmatpush.bf16.msra.mxu0 %v1211
    %1759 = vmatmul.bf16.gmra.mxu0 %v1450
    %v1760 = vpop.f32.mrf.mxu0
    %v1761 = vadd.f32 %v1748, %v1760
    %v1762 = vpop.f32.mrf.mxu0
    %1763 = vdwg.mxu0
    %1764 = vmatpush.bf16.msra.mxu0 %v1016
    %1765 = vmatpush.bf16.msra.mxu0 %v1012
    %1766 = vmatpush.bf16.msra.mxu0 %v1008
    %1767 = vmatpush.bf16.msra.mxu0 %v1004
    %1768 = vmatpush.bf16.msra.mxu0 %v1000
    %1769 = vmatpush.bf16.msra.mxu0 %v996
    %1770 = vmatpush.bf16.msra.mxu0 %v992
    %1771 = vmatpush.bf16.msra.mxu0 %v988
    %1772 = vmatmul.bf16.gmra.mxu0 %v274
    %v1773 = vpop.f32.mrf.mxu0
    %v1774 = vadd.f32 %v267, %v1773
    %v1775 = vpop.f32.mrf.mxu0
    %1776 = vdwg.mxu0
    %1777 = vmatpush.bf16.msra.mxu0 %v1048
    %1778 = vmatpush.bf16.msra.mxu0 %v1044
    %1779 = vmatpush.bf16.msra.mxu0 %v1040
    %1780 = vmatpush.bf16.msra.mxu0 %v1036
    %1781 = vmatpush.bf16.msra.mxu0 %v1032
    %1782 = vmatpush.bf16.msra.mxu0 %v1028
    %1783 = vmatpush.bf16.msra.mxu0 %v1024
    %1784 = vmatpush.bf16.msra.mxu0 %v1020
    %1785 = vmatmul.bf16.gmra.mxu0 %v275
    %v1786 = vpop.f32.mrf.mxu0
    %v1787 = vadd.f32 %v1774, %v1786
    %v1788 = vpop.f32.mrf.mxu0
    %1789 = vdwg.mxu0
    %1790 = vmatpush.bf16.msra.mxu0 %v1080
    %1791 = vmatpush.bf16.msra.mxu0 %v1076
    %1792 = vmatpush.bf16.msra.mxu0 %v1072
    %1793 = vmatpush.bf16.msra.mxu0 %v1068
    %1794 = vmatpush.bf16.msra.mxu0 %v1064
    %1795 = vmatpush.bf16.msra.mxu0 %v1060
    %1796 = vmatpush.bf16.msra.mxu0 %v1056
    %1797 = vmatpush.bf16.msra.mxu0 %v1052
    %1798 = vmatmul.bf16.gmra.mxu0 %v276
    %v1799 = vpop.f32.mrf.mxu0
    %v1800 = vadd.f32 %v1787, %v1799
    %v1801 = vpop.f32.mrf.mxu0
    %1802 = vdwg.mxu0
    %1803 = vmatpush.bf16.msra.mxu0 %v1112
    %1804 = vmatpush.bf16.msra.mxu0 %v1108
    %1805 = vmatpush.bf16.msra.mxu0 %v1104
    %1806 = vmatpush.bf16.msra.mxu0 %v1100
    %1807 = vmatpush.bf16.msra.mxu0 %v1096
    %1808 = vmatpush.bf16.msra.mxu0 %v1092
    %1809 = vmatpush.bf16.msra.mxu0 %v1088
    %1810 = vmatpush.bf16.msra.mxu0 %v1084
    %1811 = vmatmul.bf16.gmra.mxu0 %v277
    %v1812 = vpop.f32.mrf.mxu0
    %v1813 = vadd.f32 %v1800, %v1812
    %v1814 = vpop.f32.mrf.mxu0
    %1815 = vdwg.mxu0
    %1816 = vmatpush.bf16.msra.mxu0 %v1144
    %1817 = vmatpush.bf16.msra.mxu0 %v1140
    %1818 = vmatpush.bf16.msra.mxu0 %v1136
    %1819 = vmatpush.bf16.msra.mxu0 %v1132
    %1820 = vmatpush.bf16.msra.mxu0 %v1128
    %1821 = vmatpush.bf16.msra.mxu0 %v1124
    %1822 = vmatpush.bf16.msra.mxu0 %v1120
    %1823 = vmatpush.bf16.msra.mxu0 %v1116
    %1824 = vmatmul.bf16.gmra.mxu0 %v278
    %v1825 = vpop.f32.mrf.mxu0
    %v1826 = vadd.f32 %v1813, %v1825
    %v1827 = vpop.f32.mrf.mxu0
    %1828 = vdwg.mxu0
    %1829 = vmatpush.bf16.msra.mxu0 %v1176
    %1830 = vmatpush.bf16.msra.mxu0 %v1172
    %1831 = vmatpush.bf16.msra.mxu0 %v1168
    %1832 = vmatpush.bf16.msra.mxu0 %v1164
    %1833 = vmatpush.bf16.msra.mxu0 %v1160
    %1834 = vmatpush.bf16.msra.mxu0 %v1156
    %1835 = vmatpush.bf16.msra.mxu0 %v1152
    %1836 = vmatpush.bf16.msra.mxu0 %v1148
    %1837 = vmatmul.bf16.gmra.mxu0 %v279
    %v1838 = vpop.f32.mrf.mxu0
    %v1839 = vadd.f32 %v1826, %v1838
    %v1840 = vpop.f32.mrf.mxu0
    %1841 = vdwg.mxu0
    %1842 = vmatpush.bf16.msra.mxu0 %v1208
    %1843 = vmatpush.bf16.msra.mxu0 %v1204
    %1844 = vmatpush.bf16.msra.mxu0 %v1200
    %1845 = vmatpush.bf16.msra.mxu0 %v1196
    %1846 = vmatpush.bf16.msra.mxu0 %v1192
    %1847 = vmatpush.bf16.msra.mxu0 %v1188
    %1848 = vmatpush.bf16.msra.mxu0 %v1184
    %1849 = vmatpush.bf16.msra.mxu0 %v1180
    %1850 = vmatmul.bf16.gmra.mxu0 %v280
    %v1851 = vpop.f32.mrf.mxu0
    %v1852 = vadd.f32 %v1839, %v1851
    %v1853 = vpop.f32.mrf.mxu0
    %1854 = vdwg.mxu0
    %1855 = vmatpush.bf16.msra.mxu0 0
    %1856 = vmatpush.bf16.msra.mxu0 0
    %1857 = vmatpush.bf16.msra.mxu0 0
    %1858 = vmatpush.bf16.msra.mxu0 0
    %1859 = vmatpush.bf16.msra.mxu0 0
    %1860 = vmatpush.bf16.msra.mxu0 0
    %1861 = vmatpush.bf16.msra.mxu0 %v1216
    %1862 = vmatpush.bf16.msra.mxu0 %v1212
    %1863 = vmatmul.bf16.gmra.mxu0 %v1450
    %v1864 = vpop.f32.mrf.mxu0
    %v1865 = vadd.f32 %v1852, %v1864
    %v1866 = vpop.f32.mrf.mxu0
    %1867 = vdwg.mxu0
    %v1868 = vxor.u32 %v1553, 2147483648
    %v1869 = vmul.f32 %v1868, 1.442695
    %v1870 = vpow.pop %v1869
    %v1871 = vadd.f32 %v1870, 1.0
    %v1872 = vrcp.pop %v1871
    %v1873 = vmul.f32 %v1871, %v1872
    %v1874 = vsub.f32 1.0, %v1873
    %v1875 = vmul.f32 %v1872, %v1874
    %v1876 = vadd.f32 %v1872, %v1875
    %vm1877 = vweird.f32 %v1871
    %vm1878 = vweird.f32 %v1872
    %vm1879 = vmor %vm1877, %vm1878
    %v1880 = vsel %vm1879, %v1872, %v1876
    %v1881 = vand.u32 2147483647, %v1871
    %vm1882 = vcmp.eq.f32.partialorder %v1881, 8.507059e+37
    %v1883 = vand.u32 %v1871, 2147483648
    %v1884 = vor.u32 1.1754944e-38, %v1883
    %v1885 = vsel %vm1882, %v1884, %v1880
    %v1886 = vmul.f32 1.0, %v1885
    %v1887 = vxor.u32 %v1657, 2147483648
    %v1888 = vmul.f32 %v1887, 1.442695
    %v1889 = vpow.pop %v1888
    %v1890 = vadd.f32 %v1889, 1.0
    %v1891 = vrcp.pop %v1890
    %v1892 = vmul.f32 %v1890, %v1891
    %v1893 = vsub.f32 1.0, %v1892
    %v1894 = vmul.f32 %v1891, %v1893
    %v1895 = vadd.f32 %v1891, %v1894
    %vm1896 = vweird.f32 %v1890
    %vm1897 = vweird.f32 %v1891
    %vm1898 = vmor %vm1896, %vm1897
    %v1899 = vsel %vm1898, %v1891, %v1895
    %v1900 = vand.u32 2147483647, %v1890
    %vm1901 = vcmp.eq.f32.partialorder %v1900, 8.507059e+37
    %v1902 = vand.u32 %v1890, 2147483648
    %v1903 = vor.u32 1.1754944e-38, %v1902
    %v1904 = vsel %vm1901, %v1903, %v1899
    %v1905 = vmul.f32 1.0, %v1904
    %v1906 = vtanh.pop %v1761
    %v1907 = vxor.u32 %v1865, 2147483648
    %v1908 = vmul.f32 %v1907, 1.442695
    %v1909 = vpow.pop %v1908
    %v1910 = vadd.f32 %v1909, 1.0
    %v1911 = vrcp.pop %v1910
    %v1912 = vmul.f32 %v1910, %v1911
    %v1913 = vsub.f32 1.0, %v1912
    %v1914 = vmul.f32 %v1911, %v1913
    %v1915 = vadd.f32 %v1911, %v1914
    %vm1916 = vweird.f32 %v1910
    %vm1917 = vweird.f32 %v1911
    %vm1918 = vmor %vm1916, %vm1917
    %v1919 = vsel %vm1918, %v1911, %v1915
    %v1920 = vand.u32 2147483647, %v1910
    %vm1921 = vcmp.eq.f32.partialorder %v1920, 8.507059e+37
    %v1922 = vand.u32 %v1910, 2147483648
    %v1923 = vor.u32 1.1754944e-38, %v1922
    %v1924 = vsel %vm1921, %v1923, %v1919
    %v1925 = vmul.f32 1.0, %v1924
    %v1926 = vld [vmem:[%s1] sm:$0x3]
    %v1927 = vmul.f32 %v1905, %v1926
    %v1928 = vmul.f32 %v1886, %v1906
    %v1929 = vadd.f32 %v1927, %v1928
    %v1930 = vtanh.pop %v1929
    %v1931 = vmul.f32 %v1925, %v1930
    %v1932 = vpack.c.bf16 %v1931, %v1931
    %v1933 = vld [vmem:[%s4] sm:$0xf]
    %v1934 = vld [vmem:[%s4 + $0x4] sm:$0xf]
    %v1935 = vld [vmem:[%s4 + $0x8] sm:$0xf]
    %v1936 = vld [vmem:[%s4 + $0xc] sm:$0xf]
    %v1937 = vld [vmem:[%s4 + $0x10] sm:$0xf]
    %v1938 = vld [vmem:[%s4 + $0x14] sm:$0xf]
    %v1939 = vld [vmem:[%s4 + $0x18] sm:$0xf]
    %v1940 = vld [vmem:[%s4 + $0x1c] sm:$0xf]
    %v1941 = vld [vmem:[%s4 + $0x20] sm:$0xf]
    %v1942 = vld [vmem:[%s4 + $0x24] sm:$0xf]
    %v1943 = vld [vmem:[%s4 + $0x28] sm:$0xf]
    %v1944 = vld [vmem:[%s4 + $0x2c] sm:$0xf]
    %v1945 = vld [vmem:[%s4 + $0x30] sm:$0xf]
    %v1946 = vld [vmem:[%s4 + $0x34] sm:$0xf]
    %v1947 = vld [vmem:[%s4 + $0x38] sm:$0xf]
    %v1948 = vld [vmem:[%s4 + $0x3c] sm:$0xf]
    %v1949 = vld [vmem:[%s5] sm:$0x1]
    %v1951 = vperm.slane %v1949, 0
    %v1969 = vunpack.c.l.b16 %v1933
    %v1970 = vunpack.c.l.b16 %v1934
    %v1971 = vunpack.c.l.b16 %v1935
    %v1972 = vunpack.c.l.b16 %v1936
    %v1973 = vunpack.c.l.b16 %v1937
    %v1974 = vunpack.c.l.b16 %v1938
    %v1975 = vunpack.c.l.b16 %v1939
    %v1976 = vunpack.c.l.b16 %v1940
    %v1977 = vunpack.c.l.b16 %v1941
    %v1978 = vunpack.c.l.b16 %v1942
    %v1979 = vunpack.c.l.b16 %v1943
    %v1980 = vunpack.c.l.b16 %v1944
    %v1981 = vunpack.c.l.b16 %v1945
    %v1982 = vunpack.c.l.b16 %v1946
    %v1983 = vunpack.c.l.b16 %v1947
    %v1984 = vunpack.c.l.b16 %v1948
    %v1985 = vpack.c.b16 %v1970, %v1969
    %v1986 = vpack.c.b16 %v1972, %v1971
    %v1987 = vpack.c.b16 %v1974, %v1973
    %v1988 = vpack.c.b16 %v1976, %v1975
    %v1989 = vpack.c.b16 %v1978, %v1977
    %v1990 = vpack.c.b16 %v1980, %v1979
    %v1991 = vpack.c.b16 %v1982, %v1981
    %v1992 = vpack.c.b16 %v1984, %v1983
    %2001 = vmatpush.bf16.msra.mxu0 %v1992
    %2002 = vmatpush.bf16.msra.mxu0 %v1991
    %2003 = vmatpush.bf16.msra.mxu0 %v1990
    %2004 = vmatpush.bf16.msra.mxu0 %v1989
    %2005 = vmatpush.bf16.msra.mxu0 %v1988
    %2006 = vmatpush.bf16.msra.mxu0 %v1987
    %2007 = vmatpush.bf16.msra.mxu0 %v1986
    %2008 = vmatpush.bf16.msra.mxu0 %v1985
    %2009 = vmatmul.bf16.gmra.mxu0 %v1932
    %v2010 = vpop.f32.mrf.mxu0
    %v2011 = vadd.f32 %v1951, %v2010
    %v2012 = vpop.f32.mrf.mxu0
    %2013 = vdwg.mxu0
    %v2014 = vlaneseq
    %v2015 = vand.u32 %v2014, 127
    %vm2016 = vcmp.lt.s32.totalorder %v2015, 6
    %v2017 = vsel %vm2016, %v2011, -1e+30
    %vm2018 = vcmask 1041408
    %v2019 = vsel %vm2018, %v2017, -inf
    %2020 = vmax.xlane.f32.xlu0 %v2019
    %v2021 = vpop.xlane.xlu0 %2020
    %v2022 = vsub.f32 %v2017, %v2021
    %v2023 = vmul.f32 %v2022, 1.442695
    %v2024 = vpow.pop %v2023
    %v2025 = vsel %vm2018, %v2024, 0.0
    %2026 = vadd.xlane.f32.xlu0 %v2025
    %v2027 = vpop.xlane.xlu0 %2026
    %v2028 = vrcp.pop %v2027
    %v2029 = vmul.f32 %v2024, %v2028
    %v2030 = vsel %vm2016, %v2029, %v2011
    %2031 = vst [vmem:[%s6] sm:$0x3] %v2030
    %2032 = vst [vmem:[#allocation2] sm:$0x3] %v1931
    %2033 = vst [vmem:[#allocation4] sm:$0x3] %v1929
    // Predicated region
    $region26: #{lstm_policy_forward.9} parent=1 // pred_check
      _
    $region27: #{lstm_policy_forward.9} parent=1 // pred_check_branch
      %2035 = sbr.rel (0) target = $region29
    $region28: #{lstm_policy_forward.9} parent=1 // pred_region
      _
    $region29: #{lstm_policy_forward.9} parent=1 // pred_fallthru
      _
    // Predicated region
    $region30: #{lstm_policy_forward.9} parent=1 // pred_check
      _
    $region31: #{lstm_policy_forward.9} parent=1 // pred_check_branch
      %2037 = sbr.rel (0) target = $region33
    $region32: #{lstm_policy_forward.9} parent=1 // pred_region
      %2039 = vsyncadd [#allocation3], 0
      %s2041 = sshll.u32 [#allocation2], 4
      %s2042 = int_to_ptr.vmem [resolvable:$true] %s2041
      %s2043 = sshll.u32 %s7, 4
      %s2044 = int_to_ptr.hbm [resolvable:$true] %s2043
      %2046 = dma.vmem_to_hbm [thread:$0]  %s2042, 32, %s2044, [#allocation3]
    $region33: #{lstm_policy_forward.9} parent=1 // pred_fallthru
      _
    // Predicated region
    $region34: #{lstm_policy_forward.9} parent=1 // pred_check
      _
    $region35: #{lstm_policy_forward.9} parent=1 // pred_check_branch
      %2048 = sbr.rel (0) target = $region37
    $region36: #{lstm_policy_forward.9} parent=1 // pred_region
      %2050 = vsyncadd [#allocation5], 0
      %s2052 = sshll.u32 [#allocation4], 4
      %s2053 = int_to_ptr.vmem [resolvable:$true] %s2052
      %s2054 = sshll.u32 %s8, 4
      %s2055 = int_to_ptr.hbm [resolvable:$true] %s2054
      %2057 = dma.vmem_to_hbm [thread:$0]  %s2053, 32, %s2055, [#allocation5]
    $region37: #{lstm_policy_forward.9} parent=1 // pred_fallthru
      _
    // Predicated region
    $region38: #{lstm_policy_forward.9} parent=1 // pred_check
      _
    $region39: #{lstm_policy_forward.9} parent=1 // pred_check_branch
      %2059 = sbr.rel (0) target = $region41
    $region40: #{lstm_policy_forward.9} parent=1 // pred_region
      _
    $region41: #{lstm_policy_forward.9} parent=1 // pred_fallthru
      _
    // Predicated region
    $region42: #{lstm_policy_forward.9} parent=1 // pred_check
      _
    $region43: #{lstm_policy_forward.9} parent=1 // pred_check_branch
      %2061 = sbr.rel (0) target = $region45
    $region44: #{lstm_policy_forward.9} parent=1 // pred_region
      %2063 = dma.done [#allocation3], 32
    $region45: #{lstm_policy_forward.9} parent=1 // pred_fallthru
      _
    // Predicated region
    $region46: #{lstm_policy_forward.9} parent=1 // pred_check
      _
    $region47: #{lstm_policy_forward.9} parent=1 // pred_check_branch
      %2065 = sbr.rel (0) target = $region49
    $region48: #{lstm_policy_forward.9} parent=1 // pred_region
      %2067 = dma.done [#allocation5], 32
    $region49: #{lstm_policy_forward.9} parent=1 // pred_fallthru
      _
    %2068 = vsyncpa [#allocation3], 1
    %2069 = vsyncpa [#allocation5], 1

</llo_original>
